<compile_context>
chip_gen: v5e
topology: v5e:2x2
jax: 0.10.0
libtpu: 0.0.40
codegen_flags: <defaults>
</compile_context>

<pallas_src>
import jax
import jax.numpy as jnp
from jax.experimental import pallas as pl
from jax.experimental.pallas import tpu as pltpu

NEG_SLOPE = 0.01       # PyTorch F.leaky_relu default negative_slope
SP_BETA = 10.0
SP_THRESHOLD = 20.0

# Logical (PyTorch) layer sizes and their lane-padded counterparts.
D_IN = 6
H1, H2, H3, H4 = 1000, 750, 300, 5
P1, P2, P3, P4 = 1024, 768, 384, 128


def _round_up(x, m):
    return (x + m - 1) // m * m


def _leaky_relu(x):
    return jnp.where(x > 0, x, NEG_SLOPE * x)


def mlp_kernel(x_ref,
               w1_ref, b1_ref,
               w2_ref, b2_ref,
               w3_ref, b3_ref,
               w4_ref, b4_ref,
               o_ref):
    # x tile: (TB, 6) f32. Weights are bf16 (in, out); biases are (1, out) f32.
    x = x_ref[...]

    h = jnp.dot(x.astype(jnp.bfloat16), w1_ref[...],
                preferred_element_type=jnp.float32) + b1_ref[...]
    h = _leaky_relu(h)

    h = jnp.dot(h.astype(jnp.bfloat16), w2_ref[...],
                preferred_element_type=jnp.float32) + b2_ref[...]
    h = _leaky_relu(h)

    h = jnp.dot(h.astype(jnp.bfloat16), w3_ref[...],
                preferred_element_type=jnp.float32) + b3_ref[...]
    h = _leaky_relu(h)

    y = jnp.dot(h.astype(jnp.bfloat16), w4_ref[...],
                preferred_element_type=jnp.float32) + b4_ref[...]

    # softplus(beta=10, threshold=20):
    #   out = (1/beta) * log(1 + exp(beta * x))   if beta * x <= threshold
    #   out = x                                   otherwise
    by = SP_BETA * y
    over = by > SP_THRESHOLD
    by_safe = jnp.where(over, 0.0, by)            # avoid exp overflow
    sp = jnp.where(over, y, jnp.log1p(jnp.exp(by_safe)) * (1.0 / SP_BETA))

    # Apply softplus only to columns 0 and 1 (Reg1, Reg2); pass-through the rest.
    cols = jax.lax.broadcasted_iota(jnp.int32, y.shape, dimension=1)
    o_ref[...] = jnp.where(cols < 2, sp, y).astype(o_ref.dtype)


def neural_net_forward(x, params):
    """x: (batch, 6) f32. params: padded (bf16 W, f32 b) pairs. Returns (batch, 5) f32."""
    (w1, b1), (w2, b2), (w3, b3), (w4, b4) = params
    batch = x.shape[0]

    # Batch tile: multiple of 8 (f32 sublane); capped at 256 to fill MXU rows.
    tb = min(256, _round_up(batch, 8))
    padded_batch = _round_up(batch, tb)
    if padded_batch != batch:
        x = jnp.pad(x, ((0, padded_batch - batch), (0, 0)))
    grid = (padded_batch // tb,)

    x_spec = pl.BlockSpec((tb, D_IN), lambda i: (i, 0))
    out_spec = pl.BlockSpec((tb, P4), lambda i: (i, 0))

    def resident(shape):
        # Same block every grid step -> DMA'd once, held VMEM-resident.
        return pl.BlockSpec(shape, lambda i: (0, 0))

    out_padded = pl.pallas_call(
        mlp_kernel,
        out_shape=jax.ShapeDtypeStruct((padded_batch, P4), jnp.float32),
        grid=grid,
        in_specs=[
            x_spec,
            resident((D_IN, P1)), resident((1, P1)),
            resident((P1, P2)),   resident((1, P2)),
            resident((P2, P3)),   resident((1, P3)),
            resident((P3, P4)),   resident((1, P4)),
        ],
        out_specs=out_spec,
        compiler_params=pltpu.CompilerParams(
            dimension_semantics=("parallel",),
            vmem_limit_bytes=32 << 20,
        ),
    )(x, w1, b1, w2, b2, w3, b3, w4, b4)

    # Slice away batch padding and the lane-padded output columns (5 real regs).
    return out_padded[:batch, :H4]


def init_params(key):
    """Deterministic init mimicking PyTorch nn.Linear default
    U(-1/sqrt(fan_in), 1/sqrt(fan_in)). Weights stored transposed as (in, out),
    zero-padded to lane multiples and cast to bf16; biases stay f32 (1, out)."""
    dims = [(D_IN, H1, D_IN, P1),
            (H1, H2, P1, P2),
            (H2, H3, P2, P3),
            (H3, H4, P3, P4)]
    params = []
    for (fan_in, fan_out, pad_in, pad_out) in dims:
        key, kw, kb = jax.random.split(key, 3)
        bound = 1.0 / jnp.sqrt(float(fan_in))
        w = jax.random.uniform(kw, (fan_in, fan_out), jnp.float32, -bound, bound)
        b = jax.random.uniform(kb, (1, fan_out), jnp.float32, -bound, bound)
        w = jnp.pad(w, ((0, pad_in - fan_in), (0, pad_out - fan_out)))
        b = jnp.pad(b, ((0, 0), (0, pad_out - fan_out)))
        params.append((w.astype(jnp.bfloat16), b))
    return params


if __name__ == "__main__":
    key = jax.random.PRNGKey(0)
    key, kx = jax.random.split(key)

    batch = 8
    x = jax.random.normal(kx, (batch, D_IN), dtype=jnp.float32)
    params = init_params(key)

    out = neural_net_forward(x, params)
    jax.block_until_ready(out)

    assert out.shape == (batch, H4)
    assert out.dtype == jnp.float32
    assert bool(jnp.all(jnp.isfinite(out)))
    # Softplus columns (0,1) must be non-negative.
    assert bool(jnp.all(out[:, :2] >= 0.0))
    print("KERNEL_OK")
</pallas_src>

<mosaic_0001>
module attributes {stable_mosaic.version = 11 : i64} {
  func.func @mlp_kernel(%arg0: i32, %arg1: memref<8x6xf32, #tpu.memory_space<vmem>>, %arg2: memref<6x1024xbf16, #tpu.memory_space<vmem>>, %arg3: memref<1x1024xf32, #tpu.memory_space<vmem>>, %arg4: memref<1024x768xbf16, #tpu.memory_space<vmem>>, %arg5: memref<1x768xf32, #tpu.memory_space<vmem>>, %arg6: memref<768x384xbf16, #tpu.memory_space<vmem>>, %arg7: memref<1x384xf32, #tpu.memory_space<vmem>>, %arg8: memref<384x128xbf16, #tpu.memory_space<vmem>>, %arg9: memref<1x128xf32, #tpu.memory_space<vmem>>, %arg10: memref<8x128xf32, #tpu.memory_space<vmem>>) attributes {dimension_semantics = [#tpu.dimension_semantics<parallel>], iteration_bounds = array<i64: 1>, scalar_prefetch = 0 : i64, scratch_operands = 0 : i64, tpu.core_type = #tpu.core_type<tc>, window_params = [{transform_indices = @transform_0, window_bounds = array<i64: 8, 6>}, {pipeline_mode = #tpu.pipeline_mode<synchronous>, transform_indices = @transform_1, window_bounds = array<i64: 6, 1024>}, {pipeline_mode = #tpu.pipeline_mode<synchronous>, transform_indices = @transform_2, window_bounds = array<i64: 1, 1024>}, {pipeline_mode = #tpu.pipeline_mode<synchronous>, transform_indices = @transform_3, window_bounds = array<i64: 1024, 768>}, {pipeline_mode = #tpu.pipeline_mode<synchronous>, transform_indices = @transform_4, window_bounds = array<i64: 1, 768>}, {pipeline_mode = #tpu.pipeline_mode<synchronous>, transform_indices = @transform_5, window_bounds = array<i64: 768, 384>}, {pipeline_mode = #tpu.pipeline_mode<synchronous>, transform_indices = @transform_6, window_bounds = array<i64: 1, 384>}, {pipeline_mode = #tpu.pipeline_mode<synchronous>, transform_indices = @transform_7, window_bounds = array<i64: 384, 128>}, {pipeline_mode = #tpu.pipeline_mode<synchronous>, transform_indices = @transform_8, window_bounds = array<i64: 1, 128>}, {transform_indices = @transform_9, window_bounds = array<i64: 8, 128>}]} {
    %c0 = arith.constant 0 : index
    %c0_0 = arith.constant 0 : index
    %0 = vector.load %arg1[%c0, %c0_0] : memref<8x6xf32, #tpu.memory_space<vmem>>, vector<8x6xf32>
    %1 = arith.truncf %0 : vector<8x6xf32> to vector<8x6xbf16>
    %c0_1 = arith.constant 0 : index
    %c0_2 = arith.constant 0 : index
    %2 = vector.load %arg2[%c0_1, %c0_2] : memref<6x1024xbf16, #tpu.memory_space<vmem>>, vector<6x1024xbf16>
    %cst = arith.constant dense<0.000000e+00> : vector<8x1024xf32>
    %3 = tpu.matmul %1, %2, %cst {dimension_numbers = #tpu.dot_dimension_numbers<[1], [0], [0], [1], [0, 0, 1, 1], [], []>} : vector<8x6xbf16>, vector<6x1024xbf16>, vector<8x1024xf32> -> vector<8x1024xf32>
    %c0_3 = arith.constant 0 : index
    %c0_4 = arith.constant 0 : index
    %4 = vector.load %arg3[%c0_3, %c0_4] : memref<1x1024xf32, #tpu.memory_space<vmem>>, vector<1x1024xf32>
    %5 = vector.broadcast %4 : vector<1x1024xf32> to vector<8x1024xf32>
    %6 = arith.addf %3, %5 : vector<8x1024xf32>
    %cst_5 = arith.constant 0.000000e+00 : f32
    %7 = vector.broadcast %cst_5 : f32 to vector<8x1024xf32>
    %8 = arith.cmpf ogt, %6, %7 : vector<8x1024xf32>
    %cst_6 = arith.constant 0.00999999977 : f32
    %9 = vector.broadcast %cst_6 : f32 to vector<8x1024xf32>
    %10 = arith.mulf %9, %6 : vector<8x1024xf32>
    %11 = arith.select %8, %6, %10 : vector<8x1024xi1>, vector<8x1024xf32>
    %12 = arith.truncf %11 : vector<8x1024xf32> to vector<8x1024xbf16>
    %c0_7 = arith.constant 0 : index
    %c0_8 = arith.constant 0 : index
    %13 = vector.load %arg4[%c0_7, %c0_8] : memref<1024x768xbf16, #tpu.memory_space<vmem>>, vector<1024x768xbf16>
    %cst_9 = arith.constant dense<0.000000e+00> : vector<8x768xf32>
    %14 = tpu.matmul %12, %13, %cst_9 {dimension_numbers = #tpu.dot_dimension_numbers<[1], [0], [0], [1], [0, 0, 1, 1], [], []>} : vector<8x1024xbf16>, vector<1024x768xbf16>, vector<8x768xf32> -> vector<8x768xf32>
    %c0_10 = arith.constant 0 : index
    %c0_11 = arith.constant 0 : index
    %15 = vector.load %arg5[%c0_10, %c0_11] : memref<1x768xf32, #tpu.memory_space<vmem>>, vector<1x768xf32>
    %16 = vector.broadcast %15 : vector<1x768xf32> to vector<8x768xf32>
    %17 = arith.addf %14, %16 : vector<8x768xf32>
    %cst_12 = arith.constant 0.000000e+00 : f32
    %18 = vector.broadcast %cst_12 : f32 to vector<8x768xf32>
    %19 = arith.cmpf ogt, %17, %18 : vector<8x768xf32>
    %cst_13 = arith.constant 0.00999999977 : f32
    %20 = vector.broadcast %cst_13 : f32 to vector<8x768xf32>
    %21 = arith.mulf %20, %17 : vector<8x768xf32>
    %22 = arith.select %19, %17, %21 : vector<8x768xi1>, vector<8x768xf32>
    %23 = arith.truncf %22 : vector<8x768xf32> to vector<8x768xbf16>
    %c0_14 = arith.constant 0 : index
    %c0_15 = arith.constant 0 : index
    %24 = vector.load %arg6[%c0_14, %c0_15] : memref<768x384xbf16, #tpu.memory_space<vmem>>, vector<768x384xbf16>
    %cst_16 = arith.constant dense<0.000000e+00> : vector<8x384xf32>
    %25 = tpu.matmul %23, %24, %cst_16 {dimension_numbers = #tpu.dot_dimension_numbers<[1], [0], [0], [1], [0, 0, 1, 1], [], []>} : vector<8x768xbf16>, vector<768x384xbf16>, vector<8x384xf32> -> vector<8x384xf32>
    %c0_17 = arith.constant 0 : index
    %c0_18 = arith.constant 0 : index
    %26 = vector.load %arg7[%c0_17, %c0_18] : memref<1x384xf32, #tpu.memory_space<vmem>>, vector<1x384xf32>
    %27 = vector.broadcast %26 : vector<1x384xf32> to vector<8x384xf32>
    %28 = arith.addf %25, %27 : vector<8x384xf32>
    %cst_19 = arith.constant 0.000000e+00 : f32
    %29 = vector.broadcast %cst_19 : f32 to vector<8x384xf32>
    %30 = arith.cmpf ogt, %28, %29 : vector<8x384xf32>
    %cst_20 = arith.constant 0.00999999977 : f32
    %31 = vector.broadcast %cst_20 : f32 to vector<8x384xf32>
    %32 = arith.mulf %31, %28 : vector<8x384xf32>
    %33 = arith.select %30, %28, %32 : vector<8x384xi1>, vector<8x384xf32>
    %34 = arith.truncf %33 : vector<8x384xf32> to vector<8x384xbf16>
    %c0_21 = arith.constant 0 : index
    %c0_22 = arith.constant 0 : index
    %35 = vector.load %arg8[%c0_21, %c0_22] : memref<384x128xbf16, #tpu.memory_space<vmem>>, vector<384x128xbf16>
    %cst_23 = arith.constant dense<0.000000e+00> : vector<8x128xf32>
    %36 = tpu.matmul %34, %35, %cst_23 {dimension_numbers = #tpu.dot_dimension_numbers<[1], [0], [0], [1], [0, 0, 1, 1], [], []>} : vector<8x384xbf16>, vector<384x128xbf16>, vector<8x128xf32> -> vector<8x128xf32>
    %c0_24 = arith.constant 0 : index
    %c0_25 = arith.constant 0 : index
    %37 = vector.load %arg9[%c0_24, %c0_25] : memref<1x128xf32, #tpu.memory_space<vmem>>, vector<1x128xf32>
    %38 = vector.broadcast %37 : vector<1x128xf32> to vector<8x128xf32>
    %39 = arith.addf %36, %38 : vector<8x128xf32>
    %cst_26 = arith.constant 1.000000e+01 : f32
    %40 = vector.broadcast %cst_26 : f32 to vector<8x128xf32>
    %41 = arith.mulf %40, %39 : vector<8x128xf32>
    %cst_27 = arith.constant 2.000000e+01 : f32
    %42 = vector.broadcast %cst_27 : f32 to vector<8x128xf32>
    %43 = arith.cmpf ogt, %41, %42 : vector<8x128xf32>
    %cst_28 = arith.constant 0.000000e+00 : f32
    %44 = vector.broadcast %cst_28 : f32 to vector<8x128xf32>
    %45 = arith.select %43, %44, %41 : vector<8x128xi1>, vector<8x128xf32>
    %46 = math.exp %45 : vector<8x128xf32>
    %47 = math.log1p %46 : vector<8x128xf32>
    %cst_29 = arith.constant 1.000000e-01 : f32
    %48 = vector.broadcast %cst_29 : f32 to vector<8x128xf32>
    %49 = arith.mulf %47, %48 : vector<8x128xf32>
    %50 = arith.select %43, %39, %49 : vector<8x128xi1>, vector<8x128xf32>
    %51 = tpu.iota {dimensions = array<i32: 1>} : vector<8x128xi32>
    %c2_i32 = arith.constant 2 : i32
    %52 = vector.broadcast %c2_i32 : i32 to vector<8x128xi32>
    %53 = arith.cmpi slt, %51, %52 : vector<8x128xi32>
    %54 = arith.select %53, %50, %39 : vector<8x128xi1>, vector<8x128xf32>
    %c0_30 = arith.constant 0 : index
    %c0_31 = arith.constant 0 : index
    %55 = vector.load %arg10[%c0_30, %c0_31] : memref<8x128xf32, #tpu.memory_space<vmem>>, vector<8x128xf32>
    tpu.vector_store %arg10[%c0_30, %c0_31], %54 {strides = array<i32>} : memref<8x128xf32, #tpu.memory_space<vmem>>, vector<8x128xf32>,
    return
  }
  func.func @transform_0(%arg0: i32) -> (i32, i32) {
    %c0_i32 = arith.constant 0 : i32
    %c0_i32_0 = arith.constant 0 : i32
    return %arg0, %c0_i32 : i32, i32
  }
  func.func @transform_1(%arg0: i32) -> (i32, i32) {
    %c0_i32 = arith.constant 0 : i32
    %c0_i32_0 = arith.constant 0 : i32
    %c0_i32_1 = arith.constant 0 : i32
    return %c0_i32, %c0_i32_0 : i32, i32
  }
  func.func @transform_2(%arg0: i32) -> (i32, i32) {
    %c0_i32 = arith.constant 0 : i32
    %c0_i32_0 = arith.constant 0 : i32
    %c0_i32_1 = arith.constant 0 : i32
    return %c0_i32, %c0_i32_0 : i32, i32
  }
  func.func @transform_3(%arg0: i32) -> (i32, i32) {
    %c0_i32 = arith.constant 0 : i32
    %c0_i32_0 = arith.constant 0 : i32
    %c0_i32_1 = arith.constant 0 : i32
    return %c0_i32, %c0_i32_0 : i32, i32
  }
  func.func @transform_4(%arg0: i32) -> (i32, i32) {
    %c0_i32 = arith.constant 0 : i32
    %c0_i32_0 = arith.constant 0 : i32
    %c0_i32_1 = arith.constant 0 : i32
    return %c0_i32, %c0_i32_0 : i32, i32
  }
  func.func @transform_5(%arg0: i32) -> (i32, i32) {
    %c0_i32 = arith.constant 0 : i32
    %c0_i32_0 = arith.constant 0 : i32
    %c0_i32_1 = arith.constant 0 : i32
    return %c0_i32, %c0_i32_0 : i32, i32
  }
  func.func @transform_6(%arg0: i32) -> (i32, i32) {
    %c0_i32 = arith.constant 0 : i32
    %c0_i32_0 = arith.constant 0 : i32
    %c0_i32_1 = arith.constant 0 : i32
    return %c0_i32, %c0_i32_0 : i32, i32
  }
  func.func @transform_7(%arg0: i32) -> (i32, i32) {
    %c0_i32 = arith.constant 0 : i32
    %c0_i32_0 = arith.constant 0 : i32
    %c0_i32_1 = arith.constant 0 : i32
    return %c0_i32, %c0_i32_0 : i32, i32
  }
  func.func @transform_8(%arg0: i32) -> (i32, i32) {
    %c0_i32 = arith.constant 0 : i32
    %c0_i32_0 = arith.constant 0 : i32
    %c0_i32_1 = arith.constant 0 : i32
    return %c0_i32, %c0_i32_0 : i32, i32
  }
  func.func @transform_9(%arg0: i32) -> (i32, i32) {
    %c0_i32 = arith.constant 0 : i32
    %c0_i32_0 = arith.constant 0 : i32
    return %arg0, %c0_i32 : i32, i32
  }
}

</mosaic_0001>

<llo_original>
// kernel: tpu_custom_call.1
$region0: #{tpu_custom_call.1}
  #allocation0 [shape = 'u32[]', space=smem, size = 0x4, offset = 0x4, fixed_abs, tag = 'smem constant byte address 0x4 - core index']
  #allocation1 [shape = 'u32[72,128]{1,0:T(1,128)}', space=vmem, size = 0x9000, scoped, tag = 'internal scratch']
  %s0 = inlined_call_operand.hbm [shape: f32[8,6], index: 0, kind: input, shape index: {}]
  %s1 = inlined_call_operand.hbm [shape: bf16[6,1024], index: 1, kind: input, shape index: {}]
  %s2 = inlined_call_operand.hbm [shape: f32[1,1024], index: 2, kind: input, shape index: {}]
  %s3 = inlined_call_operand.hbm [shape: bf16[1024,768], index: 3, kind: input, shape index: {}]
  %s4 = inlined_call_operand.hbm [shape: f32[1,768], index: 4, kind: input, shape index: {}]
  %s5 = inlined_call_operand.hbm [shape: bf16[768,384], index: 5, kind: input, shape index: {}]
  %s6 = inlined_call_operand.hbm [shape: f32[1,384], index: 6, kind: input, shape index: {}]
  %s7 = inlined_call_operand.hbm [shape: bf16[384,128], index: 7, kind: input, shape index: {}]
  %s8 = inlined_call_operand.hbm [shape: f32[1,128], index: 8, kind: input, shape index: {}]
  %s9 = inlined_call_operand.hbm [shape: f32[8,128], index: 9, kind: output, shape index: {}]
  %s10 = sld [smem:[#allocation0]]
  $region82: #{tpu_custom_call.1} parent=0
    _
  %s12 = ssub.s32 1, %s10
  %s13 = scalar_select 0, %s12, %s10
  $region1: #{tpu_custom_call.1} parent=0
    #allocation2 [shape = 'u8[4096]{0}', space=vmem, size = 0x1000, scoped, tag = 'input window, operand 0, single buffered']
    #allocation3 [shape = 's32[1]{0}', space=sflag, size = 0x4, scoped, tag = 'scoped memory for tpu_custom_call.1']
    #allocation4 [shape = 's32[1]{0}', space=sflag, size = 0x4, scoped, tag = 'scoped memory for tpu_custom_call.1']
    #allocation5 [shape = 'u8[16384]{0}', space=vmem, size = 0x4000, scoped, tag = 'input window, operand 1, single buffered']
    #allocation6 [shape = 's32[1]{0}', space=sflag, size = 0x4, scoped, tag = 'scoped memory for tpu_custom_call.1']
    #allocation7 [shape = 'u8[4096]{0}', space=vmem, size = 0x1000, scoped, tag = 'input window, operand 2, single buffered']
    #allocation8 [shape = 'u8[1572864]{0}', space=vmem, size = 0x180000, scoped, tag = 'input window, operand 3, single buffered']
    #allocation9 [shape = 's32[1]{0}', space=sflag, size = 0x4, scoped, tag = 'scoped memory for tpu_custom_call.1']
    #allocation10 [shape = 'u8[3072]{0}', space=vmem, size = 0xc00, scoped, tag = 'input window, operand 4, single buffered']
    #allocation11 [shape = 'u8[589824]{0}', space=vmem, size = 0x90000, scoped, tag = 'input window, operand 5, single buffered']
    #allocation12 [shape = 's32[1]{0}', space=sflag, size = 0x4, scoped, tag = 'scoped memory for tpu_custom_call.1']
    #allocation13 [shape = 'u8[1536]{0}', space=vmem, size = 0x800, scoped, tag = 'input window, operand 6, single buffered']
    #allocation14 [shape = 'u8[98304]{0}', space=vmem, size = 0x18000, scoped, tag = 'input window, operand 7, single buffered']
    #allocation15 [shape = 's32[1]{0}', space=sflag, size = 0x4, scoped, tag = 'scoped memory for tpu_custom_call.1']
    #allocation16 [shape = 'u8[512]{0}', space=vmem, size = 0x400, scoped, tag = 'input window, operand 8, single buffered']
    #allocation17 [shape = 'u8[4096]{0}', space=vmem, size = 0x1000, scoped, tag = 'output window, operand 0, single buffered']
    %14 = vsyncpa [#allocation3], 0
    %15 = vsyncpa [#allocation6], 0
    %16 = vsyncpa [#allocation9], 0
    %17 = vsyncpa [#allocation12], 0
    %18 = vsyncpa [#allocation15], 0
    %19 = vsyncpa [#allocation4], 0
    // Predicated region
    $region2: #{tpu_custom_call.1} parent=1 // pred_check
      _
    $region3: #{tpu_custom_call.1} parent=1 // pred_check_branch
      %21 = sbr.rel (0) target = $region5
    $region4: #{tpu_custom_call.1} parent=1 // pred_region
      %23 = vsyncadd [#allocation3], 0
      %s25 = sshll.u32 %s0, 4
      %s26 = int_to_ptr.hbm [resolvable:$true] %s25
      %s27 = sshll.u32 [#allocation2], 4
      %s28 = int_to_ptr.vmem [resolvable:$true] %s27
      %30 = dma.hbm_to_vmem [thread:$0]  %s26, 128, %s28, [#allocation3]
    $region5: #{tpu_custom_call.1} parent=1 // pred_fallthru
      _
    // Predicated region
    $region6: #{tpu_custom_call.1} parent=1 // pred_check
      _
    $region7: #{tpu_custom_call.1} parent=1 // pred_check_branch
      %32 = sbr.rel (0) target = $region9
    $region8: #{tpu_custom_call.1} parent=1 // pred_region
      %34 = vsyncadd [#allocation6], 0
      %s36 = sshll.u32 %s1, 4
      %s37 = int_to_ptr.hbm [resolvable:$true] %s36
      %s38 = sshll.u32 [#allocation5], 4
      %s39 = int_to_ptr.vmem [resolvable:$true] %s38
      %41 = dma.hbm_to_vmem [thread:$0]  %s37, 512, %s39, [#allocation6]
    $region9: #{tpu_custom_call.1} parent=1 // pred_fallthru
      _
    // Predicated region
    $region10: #{tpu_custom_call.1} parent=1 // pred_check
      _
    $region11: #{tpu_custom_call.1} parent=1 // pred_check_branch
      %43 = sbr.rel (0) target = $region13
    $region12: #{tpu_custom_call.1} parent=1 // pred_region
      %45 = vsyncadd [#allocation6], 0
      %s47 = sshll.u32 %s2, 4
      %s48 = int_to_ptr.hbm [resolvable:$true] %s47
      %s49 = sshll.u32 [#allocation7], 4
      %s50 = int_to_ptr.vmem [resolvable:$true] %s49
      %52 = dma.hbm_to_vmem [thread:$0]  %s48, 128, %s50, [#allocation6]
    $region13: #{tpu_custom_call.1} parent=1 // pred_fallthru
      _
    // Predicated region
    $region14: #{tpu_custom_call.1} parent=1 // pred_check
      _
    $region15: #{tpu_custom_call.1} parent=1 // pred_check_branch
      %54 = sbr.rel (0) target = $region17
    $region16: #{tpu_custom_call.1} parent=1 // pred_region
      %56 = vsyncadd [#allocation9], 0
      %s57 = sshll.u32 %s3, 4
      %s58 = int_to_ptr.hbm [resolvable:$true] %s57
      %s59 = sshll.u32 [#allocation8], 4
      %s60 = int_to_ptr.vmem [resolvable:$true] %s59
      %65 = dma.hbm_to_vmem [thread:$0]  %s58, 49152, %s60, [#allocation9], 384, 384, 24
    $region17: #{tpu_custom_call.1} parent=1 // pred_fallthru
      _
    // Predicated region
    $region18: #{tpu_custom_call.1} parent=1 // pred_check
      _
    $region19: #{tpu_custom_call.1} parent=1 // pred_check_branch
      %67 = sbr.rel (0) target = $region21
    $region20: #{tpu_custom_call.1} parent=1 // pred_region
      %69 = vsyncadd [#allocation9], 0
      %s71 = sshll.u32 %s4, 4
      %s72 = int_to_ptr.hbm [resolvable:$true] %s71
      %s73 = sshll.u32 [#allocation10], 4
      %s74 = int_to_ptr.vmem [resolvable:$true] %s73
      %76 = dma.hbm_to_vmem [thread:$0]  %s72, 96, %s74, [#allocation9]
    $region21: #{tpu_custom_call.1} parent=1 // pred_fallthru
      _
    // Predicated region
    $region22: #{tpu_custom_call.1} parent=1 // pred_check
      _
    $region23: #{tpu_custom_call.1} parent=1 // pred_check_branch
      %78 = sbr.rel (0) target = $region25
    $region24: #{tpu_custom_call.1} parent=1 // pred_region
      %80 = vsyncadd [#allocation12], 0
      %s81 = sshll.u32 %s5, 4
      %s82 = int_to_ptr.hbm [resolvable:$true] %s81
      %s83 = sshll.u32 [#allocation11], 4
      %s84 = int_to_ptr.vmem [resolvable:$true] %s83
      %89 = dma.hbm_to_vmem [thread:$0]  %s82, 18432, %s84, [#allocation12], 192, 192, 12
    $region25: #{tpu_custom_call.1} parent=1 // pred_fallthru
      _
    // Predicated region
    $region26: #{tpu_custom_call.1} parent=1 // pred_check
      _
    $region27: #{tpu_custom_call.1} parent=1 // pred_check_branch
      %91 = sbr.rel (0) target = $region29
    $region28: #{tpu_custom_call.1} parent=1 // pred_region
      %93 = vsyncadd [#allocation12], 0
      %s95 = sshll.u32 %s6, 4
      %s96 = int_to_ptr.hbm [resolvable:$true] %s95
      %s97 = sshll.u32 [#allocation13], 4
      %s98 = int_to_ptr.vmem [resolvable:$true] %s97
      %100 = dma.hbm_to_vmem [thread:$0]  %s96, 48, %s98, [#allocation12]
    $region29: #{tpu_custom_call.1} parent=1 // pred_fallthru
      _
    // Predicated region
    $region30: #{tpu_custom_call.1} parent=1 // pred_check
      _
    $region31: #{tpu_custom_call.1} parent=1 // pred_check_branch
      %102 = sbr.rel (0) target = $region33
    $region32: #{tpu_custom_call.1} parent=1 // pred_region
      %104 = vsyncadd [#allocation15], 0
      %s105 = sshll.u32 %s7, 4
      %s106 = int_to_ptr.hbm [resolvable:$true] %s105
      %s107 = sshll.u32 [#allocation14], 4
      %s108 = int_to_ptr.vmem [resolvable:$true] %s107
      %113 = dma.hbm_to_vmem [thread:$0]  %s106, 3072, %s108, [#allocation15], 64, 64, 4
    $region33: #{tpu_custom_call.1} parent=1 // pred_fallthru
      _
    // Predicated region
    $region34: #{tpu_custom_call.1} parent=1 // pred_check
      _
    $region35: #{tpu_custom_call.1} parent=1 // pred_check_branch
      %115 = sbr.rel (0) target = $region37
    $region36: #{tpu_custom_call.1} parent=1 // pred_region
      %117 = vsyncadd [#allocation15], 0
      %s119 = sshll.u32 %s8, 4
      %s120 = int_to_ptr.hbm [resolvable:$true] %s119
      %s121 = sshll.u32 [#allocation16], 4
      %s122 = int_to_ptr.vmem [resolvable:$true] %s121
      %124 = dma.hbm_to_vmem [thread:$0]  %s120, 16, %s122, [#allocation15]
    $region37: #{tpu_custom_call.1} parent=1 // pred_fallthru
      _
    // Predicated region
    $region38: #{tpu_custom_call.1} parent=1 // pred_check
      _
    $region39: #{tpu_custom_call.1} parent=1 // pred_check_branch
      %126 = sbr.rel (0) target = $region41
    $region40: #{tpu_custom_call.1} parent=1 // pred_region
      %128 = dma.done [#allocation3], 128
    $region41: #{tpu_custom_call.1} parent=1 // pred_fallthru
      _
    // Predicated region
    $region42: #{tpu_custom_call.1} parent=1 // pred_check
      _
    $region43: #{tpu_custom_call.1} parent=1 // pred_check_branch
      %130 = sbr.rel (0) target = $region45
    $region44: #{tpu_custom_call.1} parent=1 // pred_region
      %132 = dma.done [#allocation6], 512
    $region45: #{tpu_custom_call.1} parent=1 // pred_fallthru
      _
    // Predicated region
    $region46: #{tpu_custom_call.1} parent=1 // pred_check
      _
    $region47: #{tpu_custom_call.1} parent=1 // pred_check_branch
      %134 = sbr.rel (0) target = $region49
    $region48: #{tpu_custom_call.1} parent=1 // pred_region
      %136 = dma.done [#allocation6], 128
    $region49: #{tpu_custom_call.1} parent=1 // pred_fallthru
      _
    // Predicated region
    $region50: #{tpu_custom_call.1} parent=1 // pred_check
      _
    $region51: #{tpu_custom_call.1} parent=1 // pred_check_branch
      %138 = sbr.rel (0) target = $region53
    $region52: #{tpu_custom_call.1} parent=1 // pred_region
      %140 = dma.done [#allocation9], 49152
    $region53: #{tpu_custom_call.1} parent=1 // pred_fallthru
      _
    // Predicated region
    $region54: #{tpu_custom_call.1} parent=1 // pred_check
      _
    $region55: #{tpu_custom_call.1} parent=1 // pred_check_branch
      %142 = sbr.rel (0) target = $region57
    $region56: #{tpu_custom_call.1} parent=1 // pred_region
      %144 = dma.done [#allocation9], 96
    $region57: #{tpu_custom_call.1} parent=1 // pred_fallthru
      _
    // Predicated region
    $region58: #{tpu_custom_call.1} parent=1 // pred_check
      _
    $region59: #{tpu_custom_call.1} parent=1 // pred_check_branch
      %146 = sbr.rel (0) target = $region61
    $region60: #{tpu_custom_call.1} parent=1 // pred_region
      %148 = dma.done [#allocation12], 18432
    $region61: #{tpu_custom_call.1} parent=1 // pred_fallthru
      _
    // Predicated region
    $region62: #{tpu_custom_call.1} parent=1 // pred_check
      _
    $region63: #{tpu_custom_call.1} parent=1 // pred_check_branch
      %150 = sbr.rel (0) target = $region65
    $region64: #{tpu_custom_call.1} parent=1 // pred_region
      %152 = dma.done [#allocation12], 48
    $region65: #{tpu_custom_call.1} parent=1 // pred_fallthru
      _
    // Predicated region
    $region66: #{tpu_custom_call.1} parent=1 // pred_check
      _
    $region67: #{tpu_custom_call.1} parent=1 // pred_check_branch
      %154 = sbr.rel (0) target = $region69
    $region68: #{tpu_custom_call.1} parent=1 // pred_region
      %156 = dma.done [#allocation15], 3072
    $region69: #{tpu_custom_call.1} parent=1 // pred_fallthru
      _
    // Predicated region
    $region70: #{tpu_custom_call.1} parent=1 // pred_check
      _
    $region71: #{tpu_custom_call.1} parent=1 // pred_check_branch
      %158 = sbr.rel (0) target = $region73
    $region72: #{tpu_custom_call.1} parent=1 // pred_region
      %160 = dma.done [#allocation15], 16
    $region73: #{tpu_custom_call.1} parent=1 // pred_fallthru
      _
    %v162 = vld [vmem:[#allocation2] sm:$0xff]
    %v163 = vpack.c.bf16 %v162, %v162
    %v164 = vld [vmem:[#allocation5] sm:$0x77]
    %v165 = vld [vmem:[#allocation5 + $0x8] sm:$0x77]
    %v166 = vld [vmem:[#allocation5 + $0x10] sm:$0x77]
    %v167 = vld [vmem:[#allocation5 + $0x18] sm:$0x77]
    %v168 = vld [vmem:[#allocation7] sm:$0xff]
    %v170 = vperm.slane %v168, 0
    %v171 = vperm.slane %v168, 1
    %v172 = vperm.slane %v168, 2
    %v173 = vperm.slane %v168, 3
    %v174 = vperm.slane %v168, 4
    %v175 = vperm.slane %v168, 5
    %v176 = vperm.slane %v168, 6
    %v177 = vperm.slane %v168, 7
    %v190 = vunpack.c.l.b16 %v164
    %v191 = vunpack.c.h.b16 %v164
    %v192 = vunpack.c.l.b16 %v165
    %v193 = vunpack.c.h.b16 %v165
    %v194 = vunpack.c.l.b16 %v166
    %v195 = vunpack.c.h.b16 %v166
    %v196 = vunpack.c.l.b16 %v167
    %v197 = vunpack.c.h.b16 %v167
    %v198 = vpack.c.b16 %v190, %v190
    %v199 = vpack.c.b16 %v191, %v191
    %v200 = vpack.c.b16 %v192, %v192
    %v201 = vpack.c.b16 %v193, %v193
    %v202 = vpack.c.b16 %v194, %v194
    %v203 = vpack.c.b16 %v195, %v195
    %v204 = vpack.c.b16 %v196, %v196
    %v205 = vpack.c.b16 %v197, %v197
    %vm206 = vcmask 48128
    %v208 = vsel %vm206, %v163, 0
    %vm210 = vcmask 1042432
    %v212 = vsel %vm210, %v198, 0
    %v215 = vsel %vm210, %v199, 0
    %v218 = vsel %vm210, %v200, 0
    %v221 = vsel %vm210, %v201, 0
    %v224 = vsel %vm210, %v202, 0
    %v227 = vsel %vm210, %v203, 0
    %v230 = vsel %vm210, %v204, 0
    %v233 = vsel %vm210, %v205, 0
    %235 = vmatpush.bf16.msra.mxu0 0
    %236 = vmatpush.bf16.msra.mxu0 0
    %237 = vmatpush.bf16.msra.mxu0 0
    %238 = vmatpush.bf16.msra.mxu0 0
    %239 = vmatpush.bf16.msra.mxu0 0
    %240 = vmatpush.bf16.msra.mxu0 0
    %241 = vmatpush.bf16.msra.mxu0 0
    %242 = vmatpush.bf16.msra.mxu0 %v212
    %243 = vmatmul.bf16.gmra.mxu0 %v208
    %v244 = vpop.f32.mrf.mxu0
    %v245 = vadd.f32 %v170, %v244
    %v246 = vpop.f32.mrf.mxu0
    %247 = vdwg.mxu0
    %248 = vmatpush.bf16.msra.mxu0 0
    %249 = vmatpush.bf16.msra.mxu0 0
    %250 = vmatpush.bf16.msra.mxu0 0
    %251 = vmatpush.bf16.msra.mxu0 0
    %252 = vmatpush.bf16.msra.mxu0 0
    %253 = vmatpush.bf16.msra.mxu0 0
    %254 = vmatpush.bf16.msra.mxu0 0
    %255 = vmatpush.bf16.msra.mxu0 %v215
    %256 = vmatmul.bf16.gmra.mxu0 %v208
    %v257 = vpop.f32.mrf.mxu0
    %v258 = vadd.f32 %v171, %v257
    %v259 = vpop.f32.mrf.mxu0
    %260 = vdwg.mxu0
    %261 = vmatpush.bf16.msra.mxu0 0
    %262 = vmatpush.bf16.msra.mxu0 0
    %263 = vmatpush.bf16.msra.mxu0 0
    %264 = vmatpush.bf16.msra.mxu0 0
    %265 = vmatpush.bf16.msra.mxu0 0
    %266 = vmatpush.bf16.msra.mxu0 0
    %267 = vmatpush.bf16.msra.mxu0 0
    %268 = vmatpush.bf16.msra.mxu0 %v218
    %269 = vmatmul.bf16.gmra.mxu0 %v208
    %v270 = vpop.f32.mrf.mxu0
    %v271 = vadd.f32 %v172, %v270
    %v272 = vpop.f32.mrf.mxu0
    %273 = vdwg.mxu0
    %274 = vmatpush.bf16.msra.mxu0 0
    %275 = vmatpush.bf16.msra.mxu0 0
    %276 = vmatpush.bf16.msra.mxu0 0
    %277 = vmatpush.bf16.msra.mxu0 0
    %278 = vmatpush.bf16.msra.mxu0 0
    %279 = vmatpush.bf16.msra.mxu0 0
    %280 = vmatpush.bf16.msra.mxu0 0
    %281 = vmatpush.bf16.msra.mxu0 %v221
    %282 = vmatmul.bf16.gmra.mxu0 %v208
    %v283 = vpop.f32.mrf.mxu0
    %v284 = vadd.f32 %v173, %v283
    %v285 = vpop.f32.mrf.mxu0
    %286 = vdwg.mxu0
    %287 = vmatpush.bf16.msra.mxu0 0
    %288 = vmatpush.bf16.msra.mxu0 0
    %289 = vmatpush.bf16.msra.mxu0 0
    %290 = vmatpush.bf16.msra.mxu0 0
    %291 = vmatpush.bf16.msra.mxu0 0
    %292 = vmatpush.bf16.msra.mxu0 0
    %293 = vmatpush.bf16.msra.mxu0 0
    %294 = vmatpush.bf16.msra.mxu0 %v224
    %295 = vmatmul.bf16.gmra.mxu0 %v208
    %v296 = vpop.f32.mrf.mxu0
    %v297 = vadd.f32 %v174, %v296
    %v298 = vpop.f32.mrf.mxu0
    %299 = vdwg.mxu0
    %300 = vmatpush.bf16.msra.mxu0 0
    %301 = vmatpush.bf16.msra.mxu0 0
    %302 = vmatpush.bf16.msra.mxu0 0
    %303 = vmatpush.bf16.msra.mxu0 0
    %304 = vmatpush.bf16.msra.mxu0 0
    %305 = vmatpush.bf16.msra.mxu0 0
    %306 = vmatpush.bf16.msra.mxu0 0
    %307 = vmatpush.bf16.msra.mxu0 %v227
    %308 = vmatmul.bf16.gmra.mxu0 %v208
    %v309 = vpop.f32.mrf.mxu0
    %v310 = vadd.f32 %v175, %v309
    %v311 = vpop.f32.mrf.mxu0
    %312 = vdwg.mxu0
    %313 = vmatpush.bf16.msra.mxu0 0
    %314 = vmatpush.bf16.msra.mxu0 0
    %315 = vmatpush.bf16.msra.mxu0 0
    %316 = vmatpush.bf16.msra.mxu0 0
    %317 = vmatpush.bf16.msra.mxu0 0
    %318 = vmatpush.bf16.msra.mxu0 0
    %319 = vmatpush.bf16.msra.mxu0 0
    %320 = vmatpush.bf16.msra.mxu0 %v230
    %321 = vmatmul.bf16.gmra.mxu0 %v208
    %v322 = vpop.f32.mrf.mxu0
    %v323 = vadd.f32 %v176, %v322
    %v324 = vpop.f32.mrf.mxu0
    %325 = vdwg.mxu0
    %326 = vmatpush.bf16.msra.mxu0 0
    %327 = vmatpush.bf16.msra.mxu0 0
    %328 = vmatpush.bf16.msra.mxu0 0
    %329 = vmatpush.bf16.msra.mxu0 0
    %330 = vmatpush.bf16.msra.mxu0 0
    %331 = vmatpush.bf16.msra.mxu0 0
    %332 = vmatpush.bf16.msra.mxu0 0
    %333 = vmatpush.bf16.msra.mxu0 %v233
    %334 = vmatmul.bf16.gmra.mxu0 %v208
    %v335 = vpop.f32.mrf.mxu0
    %v336 = vadd.f32 %v177, %v335
    %v337 = vpop.f32.mrf.mxu0
    %338 = vdwg.mxu0
    %vm339 = vcmp.gt.f32.partialorder %v245, 0.0
    %vm340 = vcmp.gt.f32.partialorder %v258, 0.0
    %vm341 = vcmp.gt.f32.partialorder %v271, 0.0
    %vm342 = vcmp.gt.f32.partialorder %v284, 0.0
    %vm343 = vcmp.gt.f32.partialorder %v297, 0.0
    %vm344 = vcmp.gt.f32.partialorder %v310, 0.0
    %vm345 = vcmp.gt.f32.partialorder %v323, 0.0
    %vm346 = vcmp.gt.f32.partialorder %v336, 0.0
    %v347 = vmul.f32 %v245, 0.01
    %v348 = vmul.f32 %v258, 0.01
    %v349 = vmul.f32 %v271, 0.01
    %v350 = vmul.f32 %v284, 0.01
    %v351 = vmul.f32 %v297, 0.01
    %v352 = vmul.f32 %v310, 0.01
    %v353 = vmul.f32 %v323, 0.01
    %v354 = vmul.f32 %v336, 0.01
    %v355 = vsel %vm339, %v245, %v347
    %v356 = vsel %vm340, %v258, %v348
    %v357 = vsel %vm341, %v271, %v349
    %v358 = vsel %vm342, %v284, %v350
    %v359 = vsel %vm343, %v297, %v351
    %v360 = vsel %vm344, %v310, %v352
    %v361 = vsel %vm345, %v323, %v353
    %v362 = vsel %vm346, %v336, %v354
    %v363 = vpack.c.bf16 %v355, %v355
    %v364 = vpack.c.bf16 %v356, %v356
    %v365 = vpack.c.bf16 %v357, %v357
    %v366 = vpack.c.bf16 %v358, %v358
    %v367 = vpack.c.bf16 %v359, %v359
    %v368 = vpack.c.bf16 %v360, %v360
    %v369 = vpack.c.bf16 %v361, %v361
    %v370 = vpack.c.bf16 %v362, %v362
    %v371 = vld [vmem:[#allocation8] sm:$0xff]
    %v372 = vld [vmem:[#allocation8 + $0x8] sm:$0xff]
    %v373 = vld [vmem:[#allocation8 + $0x10] sm:$0xff]
    %v374 = vld [vmem:[#allocation8 + $0x18] sm:$0xff]
    %v375 = vld [vmem:[#allocation8 + $0x20] sm:$0xff]
    %v376 = vld [vmem:[#allocation8 + $0x28] sm:$0xff]
    %v377 = vld [vmem:[#allocation8 + $0x30] sm:$0xff]
    %v378 = vld [vmem:[#allocation8 + $0x38] sm:$0xff]
    %v379 = vld [vmem:[#allocation8 + $0x40] sm:$0xff]
    %v380 = vld [vmem:[#allocation8 + $0x48] sm:$0xff]
    %v381 = vld [vmem:[#allocation8 + $0x50] sm:$0xff]
    %v382 = vld [vmem:[#allocation8 + $0x58] sm:$0xff]
    %v383 = vld [vmem:[#allocation8 + $0x60] sm:$0xff]
    %v384 = vld [vmem:[#allocation8 + $0x68] sm:$0xff]
    %v385 = vld [vmem:[#allocation8 + $0x70] sm:$0xff]
    %v386 = vld [vmem:[#allocation8 + $0x78] sm:$0xff]
    %v387 = vld [vmem:[#allocation8 + $0x80] sm:$0xff]
    %v388 = vld [vmem:[#allocation8 + $0x88] sm:$0xff]
    %v389 = vld [vmem:[#allocation8 + $0x90] sm:$0xff]
    %v390 = vld [vmem:[#allocation8 + $0x98] sm:$0xff]
    %v391 = vld [vmem:[#allocation8 + $0xa0] sm:$0xff]
    %v392 = vld [vmem:[#allocation8 + $0xa8] sm:$0xff]
    %v393 = vld [vmem:[#allocation8 + $0xb0] sm:$0xff]
    %v394 = vld [vmem:[#allocation8 + $0xb8] sm:$0xff]
    %v395 = vld [vmem:[#allocation8 + $0xc0] sm:$0xff]
    %v396 = vld [vmem:[#allocation8 + $0xc8] sm:$0xff]
    %v397 = vld [vmem:[#allocation8 + $0xd0] sm:$0xff]
    %v398 = vld [vmem:[#allocation8 + $0xd8] sm:$0xff]
    %v399 = vld [vmem:[#allocation8 + $0xe0] sm:$0xff]
    %v400 = vld [vmem:[#allocation8 + $0xe8] sm:$0xff]
    %v401 = vld [vmem:[#allocation8 + $0xf0] sm:$0xff]
    %v402 = vld [vmem:[#allocation8 + $0xf8] sm:$0xff]
    %v403 = vld [vmem:[#allocation8 + $0x100] sm:$0xff]
    %v404 = vld [vmem:[#allocation8 + $0x108] sm:$0xff]
    %v405 = vld [vmem:[#allocation8 + $0x110] sm:$0xff]
    %v406 = vld [vmem:[#allocation8 + $0x118] sm:$0xff]
    %v407 = vld [vmem:[#allocation8 + $0x120] sm:$0xff]
    %v408 = vld [vmem:[#allocation8 + $0x128] sm:$0xff]
    %v409 = vld [vmem:[#allocation8 + $0x130] sm:$0xff]
    %v410 = vld [vmem:[#allocation8 + $0x138] sm:$0xff]
    %v411 = vld [vmem:[#allocation8 + $0x140] sm:$0xff]
    %v412 = vld [vmem:[#allocation8 + $0x148] sm:$0xff]
    %v413 = vld [vmem:[#allocation8 + $0x150] sm:$0xff]
    %v414 = vld [vmem:[#allocation8 + $0x158] sm:$0xff]
    %v415 = vld [vmem:[#allocation8 + $0x160] sm:$0xff]
    %v416 = vld [vmem:[#allocation8 + $0x168] sm:$0xff]
    %v417 = vld [vmem:[#allocation8 + $0x170] sm:$0xff]
    %v418 = vld [vmem:[#allocation8 + $0x178] sm:$0xff]
    %v419 = vld [vmem:[#allocation8 + $0x180] sm:$0xff]
    %v420 = vld [vmem:[#allocation8 + $0x188] sm:$0xff]
    %v421 = vld [vmem:[#allocation8 + $0x190] sm:$0xff]
    %v422 = vld [vmem:[#allocation8 + $0x198] sm:$0xff]
    %v423 = vld [vmem:[#allocation8 + $0x1a0] sm:$0xff]
    %v424 = vld [vmem:[#allocation8 + $0x1a8] sm:$0xff]
    %v425 = vld [vmem:[#allocation8 + $0x1b0] sm:$0xff]
    %v426 = vld [vmem:[#allocation8 + $0x1b8] sm:$0xff]
    %v427 = vld [vmem:[#allocation8 + $0x1c0] sm:$0xff]
    %v428 = vld [vmem:[#allocation8 + $0x1c8] sm:$0xff]
    %v429 = vld [vmem:[#allocation8 + $0x1d0] sm:$0xff]
    %v430 = vld [vmem:[#allocation8 + $0x1d8] sm:$0xff]
    %v431 = vld [vmem:[#allocation8 + $0x1e0] sm:$0xff]
    %v432 = vld [vmem:[#allocation8 + $0x1e8] sm:$0xff]
    %v433 = vld [vmem:[#allocation8 + $0x1f0] sm:$0xff]
    %v434 = vld [vmem:[#allocation8 + $0x1f8] sm:$0xff]
    %v435 = vld [vmem:[#allocation8 + $0x200] sm:$0xff]
    %v436 = vld [vmem:[#allocation8 + $0x208] sm:$0xff]
    %v437 = vld [vmem:[#allocation8 + $0x210] sm:$0xff]
    %v438 = vld [vmem:[#allocation8 + $0x218] sm:$0xff]
    %v439 = vld [vmem:[#allocation8 + $0x220] sm:$0xff]
    %v440 = vld [vmem:[#allocation8 + $0x228] sm:$0xff]
    %v441 = vld [vmem:[#allocation8 + $0x230] sm:$0xff]
    %v442 = vld [vmem:[#allocation8 + $0x238] sm:$0xff]
    %v443 = vld [vmem:[#allocation8 + $0x240] sm:$0xff]
    %v444 = vld [vmem:[#allocation8 + $0x248] sm:$0xff]
    %v445 = vld [vmem:[#allocation8 + $0x250] sm:$0xff]
    %v446 = vld [vmem:[#allocation8 + $0x258] sm:$0xff]
    %v447 = vld [vmem:[#allocation8 + $0x260] sm:$0xff]
    %v448 = vld [vmem:[#allocation8 + $0x268] sm:$0xff]
    %v449 = vld [vmem:[#allocation8 + $0x270] sm:$0xff]
    %v450 = vld [vmem:[#allocation8 + $0x278] sm:$0xff]
    %v451 = vld [vmem:[#allocation8 + $0x280] sm:$0xff]
    %v452 = vld [vmem:[#allocation8 + $0x288] sm:$0xff]
    %v453 = vld [vmem:[#allocation8 + $0x290] sm:$0xff]
    %v454 = vld [vmem:[#allocation8 + $0x298] sm:$0xff]
    %v455 = vld [vmem:[#allocation8 + $0x2a0] sm:$0xff]
    %v456 = vld [vmem:[#allocation8 + $0x2a8] sm:$0xff]
    %v457 = vld [vmem:[#allocation8 + $0x2b0] sm:$0xff]
    %v458 = vld [vmem:[#allocation8 + $0x2b8] sm:$0xff]
    %v459 = vld [vmem:[#allocation8 + $0x2c0] sm:$0xff]
    %v460 = vld [vmem:[#allocation8 + $0x2c8] sm:$0xff]
    %v461 = vld [vmem:[#allocation8 + $0x2d0] sm:$0xff]
    %v462 = vld [vmem:[#allocation8 + $0x2d8] sm:$0xff]
    %v463 = vld [vmem:[#allocation8 + $0x2e0] sm:$0xff]
    %v464 = vld [vmem:[#allocation8 + $0x2e8] sm:$0xff]
    %v465 = vld [vmem:[#allocation8 + $0x2f0] sm:$0xff]
    %v466 = vld [vmem:[#allocation8 + $0x2f8] sm:$0xff]
    %v467 = vld [vmem:[#allocation8 + $0x300] sm:$0xff]
    %v468 = vld [vmem:[#allocation8 + $0x308] sm:$0xff]
    %v469 = vld [vmem:[#allocation8 + $0x310] sm:$0xff]
    %v470 = vld [vmem:[#allocation8 + $0x318] sm:$0xff]
    %v471 = vld [vmem:[#allocation8 + $0x320] sm:$0xff]
    %v472 = vld [vmem:[#allocation8 + $0x328] sm:$0xff]
    %v473 = vld [vmem:[#allocation8 + $0x330] sm:$0xff]
    %v474 = vld [vmem:[#allocation8 + $0x338] sm:$0xff]
    %v475 = vld [vmem:[#allocation8 + $0x340] sm:$0xff]
    %v476 = vld [vmem:[#allocation8 + $0x348] sm:$0xff]
    %v477 = vld [vmem:[#allocation8 + $0x350] sm:$0xff]
    %v478 = vld [vmem:[#allocation8 + $0x358] sm:$0xff]
    %v479 = vld [vmem:[#allocation8 + $0x360] sm:$0xff]
    %v480 = vld [vmem:[#allocation8 + $0x368] sm:$0xff]
    %v481 = vld [vmem:[#allocation8 + $0x370] sm:$0xff]
    %v482 = vld [vmem:[#allocation8 + $0x378] sm:$0xff]
    %v483 = vld [vmem:[#allocation8 + $0x380] sm:$0xff]
    %v484 = vld [vmem:[#allocation8 + $0x388] sm:$0xff]
    %v485 = vld [vmem:[#allocation8 + $0x390] sm:$0xff]
    %v486 = vld [vmem:[#allocation8 + $0x398] sm:$0xff]
    %v487 = vld [vmem:[#allocation8 + $0x3a0] sm:$0xff]
    %v488 = vld [vmem:[#allocation8 + $0x3a8] sm:$0xff]
    %v489 = vld [vmem:[#allocation8 + $0x3b0] sm:$0xff]
    %v490 = vld [vmem:[#allocation8 + $0x3b8] sm:$0xff]
    %v491 = vld [vmem:[#allocation8 + $0x3c0] sm:$0xff]
    %v492 = vld [vmem:[#allocation8 + $0x3c8] sm:$0xff]
    %v493 = vld [vmem:[#allocation8 + $0x3d0] sm:$0xff]
    %v494 = vld [vmem:[#allocation8 + $0x3d8] sm:$0xff]
    %v495 = vld [vmem:[#allocation8 + $0x3e0] sm:$0xff]
    %v496 = vld [vmem:[#allocation8 + $0x3e8] sm:$0xff]
    %v497 = vld [vmem:[#allocation8 + $0x3f0] sm:$0xff]
    %v498 = vld [vmem:[#allocation8 + $0x3f8] sm:$0xff]
    %v499 = vld [vmem:[#allocation8 + $0x400] sm:$0xff]
    %v500 = vld [vmem:[#allocation8 + $0x408] sm:$0xff]
    %v501 = vld [vmem:[#allocation8 + $0x410] sm:$0xff]
    %v502 = vld [vmem:[#allocation8 + $0x418] sm:$0xff]
    %v503 = vld [vmem:[#allocation8 + $0x420] sm:$0xff]
    %v504 = vld [vmem:[#allocation8 + $0x428] sm:$0xff]
    %v505 = vld [vmem:[#allocation8 + $0x430] sm:$0xff]
    %v506 = vld [vmem:[#allocation8 + $0x438] sm:$0xff]
    %v507 = vld [vmem:[#allocation8 + $0x440] sm:$0xff]
    %v508 = vld [vmem:[#allocation8 + $0x448] sm:$0xff]
    %v509 = vld [vmem:[#allocation8 + $0x450] sm:$0xff]
    %v510 = vld [vmem:[#allocation8 + $0x458] sm:$0xff]
    %v511 = vld [vmem:[#allocation8 + $0x460] sm:$0xff]
    %v512 = vld [vmem:[#allocation8 + $0x468] sm:$0xff]
    %v513 = vld [vmem:[#allocation8 + $0x470] sm:$0xff]
    %v514 = vld [vmem:[#allocation8 + $0x478] sm:$0xff]
    %v515 = vld [vmem:[#allocation8 + $0x480] sm:$0xff]
    %v516 = vld [vmem:[#allocation8 + $0x488] sm:$0xff]
    %v517 = vld [vmem:[#allocation8 + $0x490] sm:$0xff]
    %v518 = vld [vmem:[#allocation8 + $0x498] sm:$0xff]
    %v519 = vld [vmem:[#allocation8 + $0x4a0] sm:$0xff]
    %v520 = vld [vmem:[#allocation8 + $0x4a8] sm:$0xff]
    %v521 = vld [vmem:[#allocation8 + $0x4b0] sm:$0xff]
    %v522 = vld [vmem:[#allocation8 + $0x4b8] sm:$0xff]
    %v523 = vld [vmem:[#allocation8 + $0x4c0] sm:$0xff]
    %v524 = vld [vmem:[#allocation8 + $0x4c8] sm:$0xff]
    %v525 = vld [vmem:[#allocation8 + $0x4d0] sm:$0xff]
    %v526 = vld [vmem:[#allocation8 + $0x4d8] sm:$0xff]
    %v527 = vld [vmem:[#allocation8 + $0x4e0] sm:$0xff]
    %v528 = vld [vmem:[#allocation8 + $0x4e8] sm:$0xff]
    %v529 = vld [vmem:[#allocation8 + $0x4f0] sm:$0xff]
    %v530 = vld [vmem:[#allocation8 + $0x4f8] sm:$0xff]
    %v531 = vld [vmem:[#allocation8 + $0x500] sm:$0xff]
    %v532 = vld [vmem:[#allocation8 + $0x508] sm:$0xff]
    %v533 = vld [vmem:[#allocation8 + $0x510] sm:$0xff]
    %v534 = vld [vmem:[#allocation8 + $0x518] sm:$0xff]
    %v535 = vld [vmem:[#allocation8 + $0x520] sm:$0xff]
    %v536 = vld [vmem:[#allocation8 + $0x528] sm:$0xff]
    %v537 = vld [vmem:[#allocation8 + $0x530] sm:$0xff]
    %v538 = vld [vmem:[#allocation8 + $0x538] sm:$0xff]
    %v539 = vld [vmem:[#allocation8 + $0x540] sm:$0xff]
    %v540 = vld [vmem:[#allocation8 + $0x548] sm:$0xff]
    %v541 = vld [vmem:[#allocation8 + $0x550] sm:$0xff]
    %v542 = vld [vmem:[#allocation8 + $0x558] sm:$0xff]
    %v543 = vld [vmem:[#allocation8 + $0x560] sm:$0xff]
    %v544 = vld [vmem:[#allocation8 + $0x568] sm:$0xff]
    %v545 = vld [vmem:[#allocation8 + $0x570] sm:$0xff]
    %v546 = vld [vmem:[#allocation8 + $0x578] sm:$0xff]
    %v547 = vld [vmem:[#allocation8 + $0x580] sm:$0xff]
    %v548 = vld [vmem:[#allocation8 + $0x588] sm:$0xff]
    %v549 = vld [vmem:[#allocation8 + $0x590] sm:$0xff]
    %v550 = vld [vmem:[#allocation8 + $0x598] sm:$0xff]
    %v551 = vld [vmem:[#allocation8 + $0x5a0] sm:$0xff]
    %v552 = vld [vmem:[#allocation8 + $0x5a8] sm:$0xff]
    %v553 = vld [vmem:[#allocation8 + $0x5b0] sm:$0xff]
    %v554 = vld [vmem:[#allocation8 + $0x5b8] sm:$0xff]
    %v555 = vld [vmem:[#allocation8 + $0x5c0] sm:$0xff]
    %v556 = vld [vmem:[#allocation8 + $0x5c8] sm:$0xff]
    %v557 = vld [vmem:[#allocation8 + $0x5d0] sm:$0xff]
    %v558 = vld [vmem:[#allocation8 + $0x5d8] sm:$0xff]
    %v559 = vld [vmem:[#allocation8 + $0x5e0] sm:$0xff]
    %v560 = vld [vmem:[#allocation8 + $0x5e8] sm:$0xff]
    %v561 = vld [vmem:[#allocation8 + $0x5f0] sm:$0xff]
    %v562 = vld [vmem:[#allocation8 + $0x5f8] sm:$0xff]
    %v563 = vld [vmem:[#allocation8 + $0x600] sm:$0xff]
    %v564 = vld [vmem:[#allocation8 + $0x608] sm:$0xff]
    %v565 = vld [vmem:[#allocation8 + $0x610] sm:$0xff]
    %v566 = vld [vmem:[#allocation8 + $0x618] sm:$0xff]
    %v567 = vld [vmem:[#allocation8 + $0x620] sm:$0xff]
    %v568 = vld [vmem:[#allocation8 + $0x628] sm:$0xff]
    %v569 = vld [vmem:[#allocation8 + $0x630] sm:$0xff]
    %v570 = vld [vmem:[#allocation8 + $0x638] sm:$0xff]
    %v571 = vld [vmem:[#allocation8 + $0x640] sm:$0xff]
    %v572 = vld [vmem:[#allocation8 + $0x648] sm:$0xff]
    %v573 = vld [vmem:[#allocation8 + $0x650] sm:$0xff]
    %v574 = vld [vmem:[#allocation8 + $0x658] sm:$0xff]
    %v575 = vld [vmem:[#allocation8 + $0x660] sm:$0xff]
    %v576 = vld [vmem:[#allocation8 + $0x668] sm:$0xff]
    %v577 = vld [vmem:[#allocation8 + $0x670] sm:$0xff]
    %v578 = vld [vmem:[#allocation8 + $0x678] sm:$0xff]
    %v579 = vld [vmem:[#allocation8 + $0x680] sm:$0xff]
    %v580 = vld [vmem:[#allocation8 + $0x688] sm:$0xff]
    %v581 = vld [vmem:[#allocation8 + $0x690] sm:$0xff]
    %v582 = vld [vmem:[#allocation8 + $0x698] sm:$0xff]
    %v583 = vld [vmem:[#allocation8 + $0x6a0] sm:$0xff]
    %v584 = vld [vmem:[#allocation8 + $0x6a8] sm:$0xff]
    %v585 = vld [vmem:[#allocation8 + $0x6b0] sm:$0xff]
    %v586 = vld [vmem:[#allocation8 + $0x6b8] sm:$0xff]
    %v587 = vld [vmem:[#allocation8 + $0x6c0] sm:$0xff]
    %v588 = vld [vmem:[#allocation8 + $0x6c8] sm:$0xff]
    %v589 = vld [vmem:[#allocation8 + $0x6d0] sm:$0xff]
    %v590 = vld [vmem:[#allocation8 + $0x6d8] sm:$0xff]
    %v591 = vld [vmem:[#allocation8 + $0x6e0] sm:$0xff]
    %v592 = vld [vmem:[#allocation8 + $0x6e8] sm:$0xff]
    %v593 = vld [vmem:[#allocation8 + $0x6f0] sm:$0xff]
    %v594 = vld [vmem:[#allocation8 + $0x6f8] sm:$0xff]
    %v595 = vld [vmem:[#allocation8 + $0x700] sm:$0xff]
    %v596 = vld [vmem:[#allocation8 + $0x708] sm:$0xff]
    %v597 = vld [vmem:[#allocation8 + $0x710] sm:$0xff]
    %v598 = vld [vmem:[#allocation8 + $0x718] sm:$0xff]
    %v599 = vld [vmem:[#allocation8 + $0x720] sm:$0xff]
    %v600 = vld [vmem:[#allocation8 + $0x728] sm:$0xff]
    %v601 = vld [vmem:[#allocation8 + $0x730] sm:$0xff]
    %v602 = vld [vmem:[#allocation8 + $0x738] sm:$0xff]
    %v603 = vld [vmem:[#allocation8 + $0x740] sm:$0xff]
    %v604 = vld [vmem:[#allocation8 + $0x748] sm:$0xff]
    %v605 = vld [vmem:[#allocation8 + $0x750] sm:$0xff]
    %v606 = vld [vmem:[#allocation8 + $0x758] sm:$0xff]
    %v607 = vld [vmem:[#allocation8 + $0x760] sm:$0xff]
    %v608 = vld [vmem:[#allocation8 + $0x768] sm:$0xff]
    %v609 = vld [vmem:[#allocation8 + $0x770] sm:$0xff]
    %v610 = vld [vmem:[#allocation8 + $0x778] sm:$0xff]
    %v611 = vld [vmem:[#allocation8 + $0x780] sm:$0xff]
    %v612 = vld [vmem:[#allocation8 + $0x788] sm:$0xff]
    %v613 = vld [vmem:[#allocation8 + $0x790] sm:$0xff]
    %v614 = vld [vmem:[#allocation8 + $0x798] sm:$0xff]
    %v615 = vld [vmem:[#allocation8 + $0x7a0] sm:$0xff]
    %v616 = vld [vmem:[#allocation8 + $0x7a8] sm:$0xff]
    %v617 = vld [vmem:[#allocation8 + $0x7b0] sm:$0xff]
    %v618 = vld [vmem:[#allocation8 + $0x7b8] sm:$0xff]
    %v619 = vld [vmem:[#allocation8 + $0x7c0] sm:$0xff]
    %v620 = vld [vmem:[#allocation8 + $0x7c8] sm:$0xff]
    %v621 = vld [vmem:[#allocation8 + $0x7d0] sm:$0xff]
    %v622 = vld [vmem:[#allocation8 + $0x7d8] sm:$0xff]
    %v623 = vld [vmem:[#allocation8 + $0x7e0] sm:$0xff]
    %v624 = vld [vmem:[#allocation8 + $0x7e8] sm:$0xff]
    %v625 = vld [vmem:[#allocation8 + $0x7f0] sm:$0xff]
    %v626 = vld [vmem:[#allocation8 + $0x7f8] sm:$0xff]
    %v627 = vld [vmem:[#allocation8 + $0x800] sm:$0xff]
    %v628 = vld [vmem:[#allocation8 + $0x808] sm:$0xff]
    %v629 = vld [vmem:[#allocation8 + $0x810] sm:$0xff]
    %v630 = vld [vmem:[#allocation8 + $0x818] sm:$0xff]
    %v631 = vld [vmem:[#allocation8 + $0x820] sm:$0xff]
    %v632 = vld [vmem:[#allocation8 + $0x828] sm:$0xff]
    %v633 = vld [vmem:[#allocation8 + $0x830] sm:$0xff]
    %v634 = vld [vmem:[#allocation8 + $0x838] sm:$0xff]
    %v635 = vld [vmem:[#allocation8 + $0x840] sm:$0xff]
    %v636 = vld [vmem:[#allocation8 + $0x848] sm:$0xff]
    %v637 = vld [vmem:[#allocation8 + $0x850] sm:$0xff]
    %v638 = vld [vmem:[#allocation8 + $0x858] sm:$0xff]
    %v639 = vld [vmem:[#allocation8 + $0x860] sm:$0xff]
    %v640 = vld [vmem:[#allocation8 + $0x868] sm:$0xff]
    %v641 = vld [vmem:[#allocation8 + $0x870] sm:$0xff]
    %v642 = vld [vmem:[#allocation8 + $0x878] sm:$0xff]
    %v643 = vld [vmem:[#allocation8 + $0x880] sm:$0xff]
    %v644 = vld [vmem:[#allocation8 + $0x888] sm:$0xff]
    %v645 = vld [vmem:[#allocation8 + $0x890] sm:$0xff]
    %v646 = vld [vmem:[#allocation8 + $0x898] sm:$0xff]
    %v647 = vld [vmem:[#allocation8 + $0x8a0] sm:$0xff]
    %v648 = vld [vmem:[#allocation8 + $0x8a8] sm:$0xff]
    %v649 = vld [vmem:[#allocation8 + $0x8b0] sm:$0xff]
    %v650 = vld [vmem:[#allocation8 + $0x8b8] sm:$0xff]
    %v651 = vld [vmem:[#allocation8 + $0x8c0] sm:$0xff]
    %v652 = vld [vmem:[#allocation8 + $0x8c8] sm:$0xff]
    %v653 = vld [vmem:[#allocation8 + $0x8d0] sm:$0xff]
    %v654 = vld [vmem:[#allocation8 + $0x8d8] sm:$0xff]
    %v655 = vld [vmem:[#allocation8 + $0x8e0] sm:$0xff]
    %v656 = vld [vmem:[#allocation8 + $0x8e8] sm:$0xff]
    %v657 = vld [vmem:[#allocation8 + $0x8f0] sm:$0xff]
    %v658 = vld [vmem:[#allocation8 + $0x8f8] sm:$0xff]
    %v659 = vld [vmem:[#allocation8 + $0x900] sm:$0xff]
    %v660 = vld [vmem:[#allocation8 + $0x908] sm:$0xff]
    %v661 = vld [vmem:[#allocation8 + $0x910] sm:$0xff]
    %v662 = vld [vmem:[#allocation8 + $0x918] sm:$0xff]
    %v663 = vld [vmem:[#allocation8 + $0x920] sm:$0xff]
    %v664 = vld [vmem:[#allocation8 + $0x928] sm:$0xff]
    %v665 = vld [vmem:[#allocation8 + $0x930] sm:$0xff]
    %v666 = vld [vmem:[#allocation8 + $0x938] sm:$0xff]
    %v667 = vld [vmem:[#allocation8 + $0x940] sm:$0xff]
    %v668 = vld [vmem:[#allocation8 + $0x948] sm:$0xff]
    %v669 = vld [vmem:[#allocation8 + $0x950] sm:$0xff]
    %v670 = vld [vmem:[#allocation8 + $0x958] sm:$0xff]
    %v671 = vld [vmem:[#allocation8 + $0x960] sm:$0xff]
    %v672 = vld [vmem:[#allocation8 + $0x968] sm:$0xff]
    %v673 = vld [vmem:[#allocation8 + $0x970] sm:$0xff]
    %v674 = vld [vmem:[#allocation8 + $0x978] sm:$0xff]
    %v675 = vld [vmem:[#allocation8 + $0x980] sm:$0xff]
    %v676 = vld [vmem:[#allocation8 + $0x988] sm:$0xff]
    %v677 = vld [vmem:[#allocation8 + $0x990] sm:$0xff]
    %v678 = vld [vmem:[#allocation8 + $0x998] sm:$0xff]
    %v679 = vld [vmem:[#allocation8 + $0x9a0] sm:$0xff]
    %v680 = vld [vmem:[#allocation8 + $0x9a8] sm:$0xff]
    %v681 = vld [vmem:[#allocation8 + $0x9b0] sm:$0xff]
    %v682 = vld [vmem:[#allocation8 + $0x9b8] sm:$0xff]
    %v683 = vld [vmem:[#allocation8 + $0x9c0] sm:$0xff]
    %v684 = vld [vmem:[#allocation8 + $0x9c8] sm:$0xff]
    %v685 = vld [vmem:[#allocation8 + $0x9d0] sm:$0xff]
    %v686 = vld [vmem:[#allocation8 + $0x9d8] sm:$0xff]
    %v687 = vld [vmem:[#allocation8 + $0x9e0] sm:$0xff]
    %v688 = vld [vmem:[#allocation8 + $0x9e8] sm:$0xff]
    %v689 = vld [vmem:[#allocation8 + $0x9f0] sm:$0xff]
    %v690 = vld [vmem:[#allocation8 + $0x9f8] sm:$0xff]
    %v691 = vld [vmem:[#allocation8 + $0xa00] sm:$0xff]
    %v692 = vld [vmem:[#allocation8 + $0xa08] sm:$0xff]
    %v693 = vld [vmem:[#allocation8 + $0xa10] sm:$0xff]
    %v694 = vld [vmem:[#allocation8 + $0xa18] sm:$0xff]
    %v695 = vld [vmem:[#allocation8 + $0xa20] sm:$0xff]
    %v696 = vld [vmem:[#allocation8 + $0xa28] sm:$0xff]
    %v697 = vld [vmem:[#allocation8 + $0xa30] sm:$0xff]
    %v698 = vld [vmem:[#allocation8 + $0xa38] sm:$0xff]
    %v699 = vld [vmem:[#allocation8 + $0xa40] sm:$0xff]
    %v700 = vld [vmem:[#allocation8 + $0xa48] sm:$0xff]
    %v701 = vld [vmem:[#allocation8 + $0xa50] sm:$0xff]
    %v702 = vld [vmem:[#allocation8 + $0xa58] sm:$0xff]
    %v703 = vld [vmem:[#allocation8 + $0xa60] sm:$0xff]
    %v704 = vld [vmem:[#allocation8 + $0xa68] sm:$0xff]
    %v705 = vld [vmem:[#allocation8 + $0xa70] sm:$0xff]
    %v706 = vld [vmem:[#allocation8 + $0xa78] sm:$0xff]
    %v707 = vld [vmem:[#allocation8 + $0xa80] sm:$0xff]
    %v708 = vld [vmem:[#allocation8 + $0xa88] sm:$0xff]
    %v709 = vld [vmem:[#allocation8 + $0xa90] sm:$0xff]
    %v710 = vld [vmem:[#allocation8 + $0xa98] sm:$0xff]
    %v711 = vld [vmem:[#allocation8 + $0xaa0] sm:$0xff]
    %v712 = vld [vmem:[#allocation8 + $0xaa8] sm:$0xff]
    %v713 = vld [vmem:[#allocation8 + $0xab0] sm:$0xff]
    %v714 = vld [vmem:[#allocation8 + $0xab8] sm:$0xff]
    %v715 = vld [vmem:[#allocation8 + $0xac0] sm:$0xff]
    %v716 = vld [vmem:[#allocation8 + $0xac8] sm:$0xff]
    %v717 = vld [vmem:[#allocation8 + $0xad0] sm:$0xff]
    %v718 = vld [vmem:[#allocation8 + $0xad8] sm:$0xff]
    %v719 = vld [vmem:[#allocation8 + $0xae0] sm:$0xff]
    %v720 = vld [vmem:[#allocation8 + $0xae8] sm:$0xff]
    %v721 = vld [vmem:[#allocation8 + $0xaf0] sm:$0xff]
    %v722 = vld [vmem:[#allocation8 + $0xaf8] sm:$0xff]
    %v723 = vld [vmem:[#allocation8 + $0xb00] sm:$0xff]
    %v724 = vld [vmem:[#allocation8 + $0xb08] sm:$0xff]
    %v725 = vld [vmem:[#allocation8 + $0xb10] sm:$0xff]
    %v726 = vld [vmem:[#allocation8 + $0xb18] sm:$0xff]
    %v727 = vld [vmem:[#allocation8 + $0xb20] sm:$0xff]
    %v728 = vld [vmem:[#allocation8 + $0xb28] sm:$0xff]
    %v729 = vld [vmem:[#allocation8 + $0xb30] sm:$0xff]
    %v730 = vld [vmem:[#allocation8 + $0xb38] sm:$0xff]
    %v731 = vld [vmem:[#allocation8 + $0xb40] sm:$0xff]
    %v732 = vld [vmem:[#allocation8 + $0xb48] sm:$0xff]
    %v733 = vld [vmem:[#allocation8 + $0xb50] sm:$0xff]
    %v734 = vld [vmem:[#allocation8 + $0xb58] sm:$0xff]
    %v735 = vld [vmem:[#allocation8 + $0xb60] sm:$0xff]
    %v736 = vld [vmem:[#allocation8 + $0xb68] sm:$0xff]
    %v737 = vld [vmem:[#allocation8 + $0xb70] sm:$0xff]
    %v738 = vld [vmem:[#allocation8 + $0xb78] sm:$0xff]
    %v739 = vld [vmem:[#allocation8 + $0xb80] sm:$0xff]
    %v740 = vld [vmem:[#allocation8 + $0xb88] sm:$0xff]
    %v741 = vld [vmem:[#allocation8 + $0xb90] sm:$0xff]
    %v742 = vld [vmem:[#allocation8 + $0xb98] sm:$0xff]
    %v743 = vld [vmem:[#allocation8 + $0xba0] sm:$0xff]
    %v744 = vld [vmem:[#allocation8 + $0xba8] sm:$0xff]
    %v745 = vld [vmem:[#allocation8 + $0xbb0] sm:$0xff]
    %v746 = vld [vmem:[#allocation8 + $0xbb8] sm:$0xff]
    %v747 = vld [vmem:[#allocation8 + $0xbc0] sm:$0xff]
    %v748 = vld [vmem:[#allocation8 + $0xbc8] sm:$0xff]
    %v749 = vld [vmem:[#allocation8 + $0xbd0] sm:$0xff]
    %v750 = vld [vmem:[#allocation8 + $0xbd8] sm:$0xff]
    %v751 = vld [vmem:[#allocation8 + $0xbe0] sm:$0xff]
    %v752 = vld [vmem:[#allocation8 + $0xbe8] sm:$0xff]
    %v753 = vld [vmem:[#allocation8 + $0xbf0] sm:$0xff]
    %v754 = vld [vmem:[#allocation8 + $0xbf8] sm:$0xff]
    %v755 = vld [vmem:[#allocation10] sm:$0x3f]
    %v757 = vperm.slane %v755, 0
    %v758 = vperm.slane %v755, 1
    %v759 = vperm.slane %v755, 2
    %v760 = vperm.slane %v755, 3
    %v761 = vperm.slane %v755, 4
    %v762 = vperm.slane %v755, 5
    %v1153 = vunpack.c.l.b16 %v371
    %v1154 = vunpack.c.h.b16 %v371
    %v1155 = vunpack.c.l.b16 %v372
    %v1156 = vunpack.c.h.b16 %v372
    %v1157 = vunpack.c.l.b16 %v373
    %v1158 = vunpack.c.h.b16 %v373
    %v1159 = vunpack.c.l.b16 %v374
    %v1160 = vunpack.c.h.b16 %v374
    %v1161 = vunpack.c.l.b16 %v375
    %v1162 = vunpack.c.h.b16 %v375
    %v1163 = vunpack.c.l.b16 %v376
    %v1164 = vunpack.c.h.b16 %v376
    %v1165 = vunpack.c.l.b16 %v377
    %v1166 = vunpack.c.h.b16 %v377
    %v1167 = vunpack.c.l.b16 %v378
    %v1168 = vunpack.c.h.b16 %v378
    %v1169 = vunpack.c.l.b16 %v379
    %v1170 = vunpack.c.h.b16 %v379
    %v1171 = vunpack.c.l.b16 %v380
    %v1172 = vunpack.c.h.b16 %v380
    %v1173 = vunpack.c.l.b16 %v381
    %v1174 = vunpack.c.h.b16 %v381
    %v1175 = vunpack.c.l.b16 %v382
    %v1176 = vunpack.c.h.b16 %v382
    %v1177 = vunpack.c.l.b16 %v383
    %v1178 = vunpack.c.h.b16 %v383
    %v1179 = vunpack.c.l.b16 %v384
    %v1180 = vunpack.c.h.b16 %v384
    %v1181 = vunpack.c.l.b16 %v385
    %v1182 = vunpack.c.h.b16 %v385
    %v1183 = vunpack.c.l.b16 %v386
    %v1184 = vunpack.c.h.b16 %v386
    %v1185 = vunpack.c.l.b16 %v387
    %v1186 = vunpack.c.h.b16 %v387
    %v1187 = vunpack.c.l.b16 %v388
    %v1188 = vunpack.c.h.b16 %v388
    %v1189 = vunpack.c.l.b16 %v389
    %v1190 = vunpack.c.h.b16 %v389
    %v1191 = vunpack.c.l.b16 %v390
    %v1192 = vunpack.c.h.b16 %v390
    %v1193 = vunpack.c.l.b16 %v391
    %v1194 = vunpack.c.h.b16 %v391
    %v1195 = vunpack.c.l.b16 %v392
    %v1196 = vunpack.c.h.b16 %v392
    %v1197 = vunpack.c.l.b16 %v393
    %v1198 = vunpack.c.h.b16 %v393
    %v1199 = vunpack.c.l.b16 %v394
    %v1200 = vunpack.c.h.b16 %v394
    %v1201 = vunpack.c.l.b16 %v395
    %v1202 = vunpack.c.h.b16 %v395
    %v1203 = vunpack.c.l.b16 %v396
    %v1204 = vunpack.c.h.b16 %v396
    %v1205 = vunpack.c.l.b16 %v397
    %v1206 = vunpack.c.h.b16 %v397
    %v1207 = vunpack.c.l.b16 %v398
    %v1208 = vunpack.c.h.b16 %v398
    %v1209 = vunpack.c.l.b16 %v399
    %v1210 = vunpack.c.h.b16 %v399
    %v1211 = vunpack.c.l.b16 %v400
    %v1212 = vunpack.c.h.b16 %v400
    %v1213 = vunpack.c.l.b16 %v401
    %v1214 = vunpack.c.h.b16 %v401
    %v1215 = vunpack.c.l.b16 %v402
    %v1216 = vunpack.c.h.b16 %v402
    %v1217 = vunpack.c.l.b16 %v403
    %v1218 = vunpack.c.h.b16 %v403
    %v1219 = vunpack.c.l.b16 %v404
    %v1220 = vunpack.c.h.b16 %v404
    %v1221 = vunpack.c.l.b16 %v405
    %v1222 = vunpack.c.h.b16 %v405
    %v1223 = vunpack.c.l.b16 %v406
    %v1224 = vunpack.c.h.b16 %v406
    %v1225 = vunpack.c.l.b16 %v407
    %v1226 = vunpack.c.h.b16 %v407
    %v1227 = vunpack.c.l.b16 %v408
    %v1228 = vunpack.c.h.b16 %v408
    %v1229 = vunpack.c.l.b16 %v409
    %v1230 = vunpack.c.h.b16 %v409
    %v1231 = vunpack.c.l.b16 %v410
    %v1232 = vunpack.c.h.b16 %v410
    %v1233 = vunpack.c.l.b16 %v411
    %v1234 = vunpack.c.h.b16 %v411
    %v1235 = vunpack.c.l.b16 %v412
    %v1236 = vunpack.c.h.b16 %v412
    %v1237 = vunpack.c.l.b16 %v413
    %v1238 = vunpack.c.h.b16 %v413
    %v1239 = vunpack.c.l.b16 %v414
    %v1240 = vunpack.c.h.b16 %v414
    %v1241 = vunpack.c.l.b16 %v415
    %v1242 = vunpack.c.h.b16 %v415
    %v1243 = vunpack.c.l.b16 %v416
    %v1244 = vunpack.c.h.b16 %v416
    %v1245 = vunpack.c.l.b16 %v417
    %v1246 = vunpack.c.h.b16 %v417
    %v1247 = vunpack.c.l.b16 %v418
    %v1248 = vunpack.c.h.b16 %v418
    %v1249 = vunpack.c.l.b16 %v419
    %v1250 = vunpack.c.h.b16 %v419
    %v1251 = vunpack.c.l.b16 %v420
    %v1252 = vunpack.c.h.b16 %v420
    %v1253 = vunpack.c.l.b16 %v421
    %v1254 = vunpack.c.h.b16 %v421
    %v1255 = vunpack.c.l.b16 %v422
    %v1256 = vunpack.c.h.b16 %v422
    %v1257 = vunpack.c.l.b16 %v423
    %v1258 = vunpack.c.h.b16 %v423
    %v1259 = vunpack.c.l.b16 %v424
    %v1260 = vunpack.c.h.b16 %v424
    %v1261 = vunpack.c.l.b16 %v425
    %v1262 = vunpack.c.h.b16 %v425
    %v1263 = vunpack.c.l.b16 %v426
    %v1264 = vunpack.c.h.b16 %v426
    %v1265 = vunpack.c.l.b16 %v427
    %v1266 = vunpack.c.h.b16 %v427
    %v1267 = vunpack.c.l.b16 %v428
    %v1268 = vunpack.c.h.b16 %v428
    %v1269 = vunpack.c.l.b16 %v429
    %v1270 = vunpack.c.h.b16 %v429
    %v1271 = vunpack.c.l.b16 %v430
    %v1272 = vunpack.c.h.b16 %v430
    %v1273 = vunpack.c.l.b16 %v431
    %v1274 = vunpack.c.h.b16 %v431
    %v1275 = vunpack.c.l.b16 %v432
    %v1276 = vunpack.c.h.b16 %v432
    %v1277 = vunpack.c.l.b16 %v433
    %v1278 = vunpack.c.h.b16 %v433
    %v1279 = vunpack.c.l.b16 %v434
    %v1280 = vunpack.c.h.b16 %v434
    %v1281 = vunpack.c.l.b16 %v435
    %v1282 = vunpack.c.h.b16 %v435
    %v1283 = vunpack.c.l.b16 %v436
    %v1284 = vunpack.c.h.b16 %v436
    %v1285 = vunpack.c.l.b16 %v437
    %v1286 = vunpack.c.h.b16 %v437
    %v1287 = vunpack.c.l.b16 %v438
    %v1288 = vunpack.c.h.b16 %v438
    %v1289 = vunpack.c.l.b16 %v439
    %v1290 = vunpack.c.h.b16 %v439
    %v1291 = vunpack.c.l.b16 %v440
    %v1292 = vunpack.c.h.b16 %v440
    %v1293 = vunpack.c.l.b16 %v441
    %v1294 = vunpack.c.h.b16 %v441
    %v1295 = vunpack.c.l.b16 %v442
    %v1296 = vunpack.c.h.b16 %v442
    %v1297 = vunpack.c.l.b16 %v443
    %v1298 = vunpack.c.h.b16 %v443
    %v1299 = vunpack.c.l.b16 %v444
    %v1300 = vunpack.c.h.b16 %v444
    %v1301 = vunpack.c.l.b16 %v445
    %v1302 = vunpack.c.h.b16 %v445
    %v1303 = vunpack.c.l.b16 %v446
    %v1304 = vunpack.c.h.b16 %v446
    %v1305 = vunpack.c.l.b16 %v447
    %v1306 = vunpack.c.h.b16 %v447
    %v1307 = vunpack.c.l.b16 %v448
    %v1308 = vunpack.c.h.b16 %v448
    %v1309 = vunpack.c.l.b16 %v449
    %v1310 = vunpack.c.h.b16 %v449
    %v1311 = vunpack.c.l.b16 %v450
    %v1312 = vunpack.c.h.b16 %v450
    %v1313 = vunpack.c.l.b16 %v451
    %v1314 = vunpack.c.h.b16 %v451
    %v1315 = vunpack.c.l.b16 %v452
    %v1316 = vunpack.c.h.b16 %v452
    %v1317 = vunpack.c.l.b16 %v453
    %v1318 = vunpack.c.h.b16 %v453
    %v1319 = vunpack.c.l.b16 %v454
    %v1320 = vunpack.c.h.b16 %v454
    %v1321 = vunpack.c.l.b16 %v455
    %v1322 = vunpack.c.h.b16 %v455
    %v1323 = vunpack.c.l.b16 %v456
    %v1324 = vunpack.c.h.b16 %v456
    %v1325 = vunpack.c.l.b16 %v457
    %v1326 = vunpack.c.h.b16 %v457
    %v1327 = vunpack.c.l.b16 %v458
    %v1328 = vunpack.c.h.b16 %v458
    %v1329 = vunpack.c.l.b16 %v459
    %v1330 = vunpack.c.h.b16 %v459
    %v1331 = vunpack.c.l.b16 %v460
    %v1332 = vunpack.c.h.b16 %v460
    %v1333 = vunpack.c.l.b16 %v461
    %v1334 = vunpack.c.h.b16 %v461
    %v1335 = vunpack.c.l.b16 %v462
    %v1336 = vunpack.c.h.b16 %v462
    %v1337 = vunpack.c.l.b16 %v463
    %v1338 = vunpack.c.h.b16 %v463
    %v1339 = vunpack.c.l.b16 %v464
    %v1340 = vunpack.c.h.b16 %v464
    %v1341 = vunpack.c.l.b16 %v465
    %v1342 = vunpack.c.h.b16 %v465
    %v1343 = vunpack.c.l.b16 %v466
    %v1344 = vunpack.c.h.b16 %v466
    %v1345 = vunpack.c.l.b16 %v467
    %v1346 = vunpack.c.h.b16 %v467
    %v1347 = vunpack.c.l.b16 %v468
    %v1348 = vunpack.c.h.b16 %v468
    %v1349 = vunpack.c.l.b16 %v469
    %v1350 = vunpack.c.h.b16 %v469
    %v1351 = vunpack.c.l.b16 %v470
    %v1352 = vunpack.c.h.b16 %v470
    %v1353 = vunpack.c.l.b16 %v471
    %v1354 = vunpack.c.h.b16 %v471
    %v1355 = vunpack.c.l.b16 %v472
    %v1356 = vunpack.c.h.b16 %v472
    %v1357 = vunpack.c.l.b16 %v473
    %v1358 = vunpack.c.h.b16 %v473
    %v1359 = vunpack.c.l.b16 %v474
    %v1360 = vunpack.c.h.b16 %v474
    %v1361 = vunpack.c.l.b16 %v475
    %v1362 = vunpack.c.h.b16 %v475
    %v1363 = vunpack.c.l.b16 %v476
    %v1364 = vunpack.c.h.b16 %v476
    %v1365 = vunpack.c.l.b16 %v477
    %v1366 = vunpack.c.h.b16 %v477
    %v1367 = vunpack.c.l.b16 %v478
    %v1368 = vunpack.c.h.b16 %v478
    %v1369 = vunpack.c.l.b16 %v479
    %v1370 = vunpack.c.h.b16 %v479
    %v1371 = vunpack.c.l.b16 %v480
    %v1372 = vunpack.c.h.b16 %v480
    %v1373 = vunpack.c.l.b16 %v481
    %v1374 = vunpack.c.h.b16 %v481
    %v1375 = vunpack.c.l.b16 %v482
    %v1376 = vunpack.c.h.b16 %v482
    %v1377 = vunpack.c.l.b16 %v483
    %v1378 = vunpack.c.h.b16 %v483
    %v1379 = vunpack.c.l.b16 %v484
    %v1380 = vunpack.c.h.b16 %v484
    %v1381 = vunpack.c.l.b16 %v485
    %v1382 = vunpack.c.h.b16 %v485
    %v1383 = vunpack.c.l.b16 %v486
    %v1384 = vunpack.c.h.b16 %v486
    %v1385 = vunpack.c.l.b16 %v487
    %v1386 = vunpack.c.h.b16 %v487
    %v1387 = vunpack.c.l.b16 %v488
    %v1388 = vunpack.c.h.b16 %v488
    %v1389 = vunpack.c.l.b16 %v489
    %v1390 = vunpack.c.h.b16 %v489
    %v1391 = vunpack.c.l.b16 %v490
    %v1392 = vunpack.c.h.b16 %v490
    %v1393 = vunpack.c.l.b16 %v491
    %v1394 = vunpack.c.h.b16 %v491
    %v1395 = vunpack.c.l.b16 %v492
    %v1396 = vunpack.c.h.b16 %v492
    %v1397 = vunpack.c.l.b16 %v493
    %v1398 = vunpack.c.h.b16 %v493
    %v1399 = vunpack.c.l.b16 %v494
    %v1400 = vunpack.c.h.b16 %v494
    %v1401 = vunpack.c.l.b16 %v495
    %v1402 = vunpack.c.h.b16 %v495
    %v1403 = vunpack.c.l.b16 %v496
    %v1404 = vunpack.c.h.b16 %v496
    %v1405 = vunpack.c.l.b16 %v497
    %v1406 = vunpack.c.h.b16 %v497
    %v1407 = vunpack.c.l.b16 %v498
    %v1408 = vunpack.c.h.b16 %v498
    %v1409 = vunpack.c.l.b16 %v499
    %v1410 = vunpack.c.h.b16 %v499
    %v1411 = vunpack.c.l.b16 %v500
    %v1412 = vunpack.c.h.b16 %v500
    %v1413 = vunpack.c.l.b16 %v501
    %v1414 = vunpack.c.h.b16 %v501
    %v1415 = vunpack.c.l.b16 %v502
    %v1416 = vunpack.c.h.b16 %v502
    %v1417 = vunpack.c.l.b16 %v503
    %v1418 = vunpack.c.h.b16 %v503
    %v1419 = vunpack.c.l.b16 %v504
    %v1420 = vunpack.c.h.b16 %v504
    %v1421 = vunpack.c.l.b16 %v505
    %v1422 = vunpack.c.h.b16 %v505
    %v1423 = vunpack.c.l.b16 %v506
    %v1424 = vunpack.c.h.b16 %v506
    %v1425 = vunpack.c.l.b16 %v507
    %v1426 = vunpack.c.h.b16 %v507
    %v1427 = vunpack.c.l.b16 %v508
    %v1428 = vunpack.c.h.b16 %v508
    %v1429 = vunpack.c.l.b16 %v509
    %v1430 = vunpack.c.h.b16 %v509
    %v1431 = vunpack.c.l.b16 %v510
    %v1432 = vunpack.c.h.b16 %v510
    %v1433 = vunpack.c.l.b16 %v511
    %v1434 = vunpack.c.h.b16 %v511
    %v1435 = vunpack.c.l.b16 %v512
    %v1436 = vunpack.c.h.b16 %v512
    %v1437 = vunpack.c.l.b16 %v513
    %v1438 = vunpack.c.h.b16 %v513
    %v1439 = vunpack.c.l.b16 %v514
    %v1440 = vunpack.c.h.b16 %v514
    %v1441 = vunpack.c.l.b16 %v515
    %v1442 = vunpack.c.h.b16 %v515
    %v1443 = vunpack.c.l.b16 %v516
    %v1444 = vunpack.c.h.b16 %v516
    %v1445 = vunpack.c.l.b16 %v517
    %v1446 = vunpack.c.h.b16 %v517
    %v1447 = vunpack.c.l.b16 %v518
    %v1448 = vunpack.c.h.b16 %v518
    %v1449 = vunpack.c.l.b16 %v519
    %v1450 = vunpack.c.h.b16 %v519
    %v1451 = vunpack.c.l.b16 %v520
    %v1452 = vunpack.c.h.b16 %v520
    %v1453 = vunpack.c.l.b16 %v521
    %v1454 = vunpack.c.h.b16 %v521
    %v1455 = vunpack.c.l.b16 %v522
    %v1456 = vunpack.c.h.b16 %v522
    %v1457 = vunpack.c.l.b16 %v523
    %v1458 = vunpack.c.h.b16 %v523
    %v1459 = vunpack.c.l.b16 %v524
    %v1460 = vunpack.c.h.b16 %v524
    %v1461 = vunpack.c.l.b16 %v525
    %v1462 = vunpack.c.h.b16 %v525
    %v1463 = vunpack.c.l.b16 %v526
    %v1464 = vunpack.c.h.b16 %v526
    %v1465 = vunpack.c.l.b16 %v527
    %v1466 = vunpack.c.h.b16 %v527
    %v1467 = vunpack.c.l.b16 %v528
    %v1468 = vunpack.c.h.b16 %v528
    %v1469 = vunpack.c.l.b16 %v529
    %v1470 = vunpack.c.h.b16 %v529
    %v1471 = vunpack.c.l.b16 %v530
    %v1472 = vunpack.c.h.b16 %v530
    %v1473 = vunpack.c.l.b16 %v531
    %v1474 = vunpack.c.h.b16 %v531
    %v1475 = vunpack.c.l.b16 %v532
    %v1476 = vunpack.c.h.b16 %v532
    %v1477 = vunpack.c.l.b16 %v533
    %v1478 = vunpack.c.h.b16 %v533
    %v1479 = vunpack.c.l.b16 %v534
    %v1480 = vunpack.c.h.b16 %v534
    %v1481 = vunpack.c.l.b16 %v535
    %v1482 = vunpack.c.h.b16 %v535
    %v1483 = vunpack.c.l.b16 %v536
    %v1484 = vunpack.c.h.b16 %v536
    %v1485 = vunpack.c.l.b16 %v537
    %v1486 = vunpack.c.h.b16 %v537
    %v1487 = vunpack.c.l.b16 %v538
    %v1488 = vunpack.c.h.b16 %v538
    %v1489 = vunpack.c.l.b16 %v539
    %v1490 = vunpack.c.h.b16 %v539
    %v1491 = vunpack.c.l.b16 %v540
    %v1492 = vunpack.c.h.b16 %v540
    %v1493 = vunpack.c.l.b16 %v541
    %v1494 = vunpack.c.h.b16 %v541
    %v1495 = vunpack.c.l.b16 %v542
    %v1496 = vunpack.c.h.b16 %v542
    %v1497 = vunpack.c.l.b16 %v543
    %v1498 = vunpack.c.h.b16 %v543
    %v1499 = vunpack.c.l.b16 %v544
    %v1500 = vunpack.c.h.b16 %v544
    %v1501 = vunpack.c.l.b16 %v545
    %v1502 = vunpack.c.h.b16 %v545
    %v1503 = vunpack.c.l.b16 %v546
    %v1504 = vunpack.c.h.b16 %v546
    %v1505 = vunpack.c.l.b16 %v547
    %v1506 = vunpack.c.h.b16 %v547
    %v1507 = vunpack.c.l.b16 %v548
    %v1508 = vunpack.c.h.b16 %v548
    %v1509 = vunpack.c.l.b16 %v549
    %v1510 = vunpack.c.h.b16 %v549
    %v1511 = vunpack.c.l.b16 %v550
    %v1512 = vunpack.c.h.b16 %v550
    %v1513 = vunpack.c.l.b16 %v551
    %v1514 = vunpack.c.h.b16 %v551
    %v1515 = vunpack.c.l.b16 %v552
    %v1516 = vunpack.c.h.b16 %v552
    %v1517 = vunpack.c.l.b16 %v553
    %v1518 = vunpack.c.h.b16 %v553
    %v1519 = vunpack.c.l.b16 %v554
    %v1520 = vunpack.c.h.b16 %v554
    %v1521 = vunpack.c.l.b16 %v555
    %v1522 = vunpack.c.h.b16 %v555
    %v1523 = vunpack.c.l.b16 %v556
    %v1524 = vunpack.c.h.b16 %v556
    %v1525 = vunpack.c.l.b16 %v557
    %v1526 = vunpack.c.h.b16 %v557
    %v1527 = vunpack.c.l.b16 %v558
    %v1528 = vunpack.c.h.b16 %v558
    %v1529 = vunpack.c.l.b16 %v559
    %v1530 = vunpack.c.h.b16 %v559
    %v1531 = vunpack.c.l.b16 %v560
    %v1532 = vunpack.c.h.b16 %v560
    %v1533 = vunpack.c.l.b16 %v561
    %v1534 = vunpack.c.h.b16 %v561
    %v1535 = vunpack.c.l.b16 %v562
    %v1536 = vunpack.c.h.b16 %v562
    %v1537 = vunpack.c.l.b16 %v563
    %v1538 = vunpack.c.h.b16 %v563
    %v1539 = vunpack.c.l.b16 %v564
    %v1540 = vunpack.c.h.b16 %v564
    %v1541 = vunpack.c.l.b16 %v565
    %v1542 = vunpack.c.h.b16 %v565
    %v1543 = vunpack.c.l.b16 %v566
    %v1544 = vunpack.c.h.b16 %v566
    %v1545 = vunpack.c.l.b16 %v567
    %v1546 = vunpack.c.h.b16 %v567
    %v1547 = vunpack.c.l.b16 %v568
    %v1548 = vunpack.c.h.b16 %v568
    %v1549 = vunpack.c.l.b16 %v569
    %v1550 = vunpack.c.h.b16 %v569
    %v1551 = vunpack.c.l.b16 %v570
    %v1552 = vunpack.c.h.b16 %v570
    %v1553 = vunpack.c.l.b16 %v571
    %v1554 = vunpack.c.h.b16 %v571
    %v1555 = vunpack.c.l.b16 %v572
    %v1556 = vunpack.c.h.b16 %v572
    %v1557 = vunpack.c.l.b16 %v573
    %v1558 = vunpack.c.h.b16 %v573
    %v1559 = vunpack.c.l.b16 %v574
    %v1560 = vunpack.c.h.b16 %v574
    %v1561 = vunpack.c.l.b16 %v575
    %v1562 = vunpack.c.h.b16 %v575
    %v1563 = vunpack.c.l.b16 %v576
    %v1564 = vunpack.c.h.b16 %v576
    %v1565 = vunpack.c.l.b16 %v577
    %v1566 = vunpack.c.h.b16 %v577
    %v1567 = vunpack.c.l.b16 %v578
    %v1568 = vunpack.c.h.b16 %v578
    %v1569 = vunpack.c.l.b16 %v579
    %v1570 = vunpack.c.h.b16 %v579
    %v1571 = vunpack.c.l.b16 %v580
    %v1572 = vunpack.c.h.b16 %v580
    %v1573 = vunpack.c.l.b16 %v581
    %v1574 = vunpack.c.h.b16 %v581
    %v1575 = vunpack.c.l.b16 %v582
    %v1576 = vunpack.c.h.b16 %v582
    %v1577 = vunpack.c.l.b16 %v583
    %v1578 = vunpack.c.h.b16 %v583
    %v1579 = vunpack.c.l.b16 %v584
    %v1580 = vunpack.c.h.b16 %v584
    %v1581 = vunpack.c.l.b16 %v585
    %v1582 = vunpack.c.h.b16 %v585
    %v1583 = vunpack.c.l.b16 %v586
    %v1584 = vunpack.c.h.b16 %v586
    %v1585 = vunpack.c.l.b16 %v587
    %v1586 = vunpack.c.h.b16 %v587
    %v1587 = vunpack.c.l.b16 %v588
    %v1588 = vunpack.c.h.b16 %v588
    %v1589 = vunpack.c.l.b16 %v589
    %v1590 = vunpack.c.h.b16 %v589
    %v1591 = vunpack.c.l.b16 %v590
    %v1592 = vunpack.c.h.b16 %v590
    %v1593 = vunpack.c.l.b16 %v591
    %v1594 = vunpack.c.h.b16 %v591
    %v1595 = vunpack.c.l.b16 %v592
    %v1596 = vunpack.c.h.b16 %v592
    %v1597 = vunpack.c.l.b16 %v593
    %v1598 = vunpack.c.h.b16 %v593
    %v1599 = vunpack.c.l.b16 %v594
    %v1600 = vunpack.c.h.b16 %v594
    %v1601 = vunpack.c.l.b16 %v595
    %v1602 = vunpack.c.h.b16 %v595
    %v1603 = vunpack.c.l.b16 %v596
    %v1604 = vunpack.c.h.b16 %v596
    %v1605 = vunpack.c.l.b16 %v597
    %v1606 = vunpack.c.h.b16 %v597
    %v1607 = vunpack.c.l.b16 %v598
    %v1608 = vunpack.c.h.b16 %v598
    %v1609 = vunpack.c.l.b16 %v599
    %v1610 = vunpack.c.h.b16 %v599
    %v1611 = vunpack.c.l.b16 %v600
    %v1612 = vunpack.c.h.b16 %v600
    %v1613 = vunpack.c.l.b16 %v601
    %v1614 = vunpack.c.h.b16 %v601
    %v1615 = vunpack.c.l.b16 %v602
    %v1616 = vunpack.c.h.b16 %v602
    %v1617 = vunpack.c.l.b16 %v603
    %v1618 = vunpack.c.h.b16 %v603
    %v1619 = vunpack.c.l.b16 %v604
    %v1620 = vunpack.c.h.b16 %v604
    %v1621 = vunpack.c.l.b16 %v605
    %v1622 = vunpack.c.h.b16 %v605
    %v1623 = vunpack.c.l.b16 %v606
    %v1624 = vunpack.c.h.b16 %v606
    %v1625 = vunpack.c.l.b16 %v607
    %v1626 = vunpack.c.h.b16 %v607
    %v1627 = vunpack.c.l.b16 %v608
    %v1628 = vunpack.c.h.b16 %v608
    %v1629 = vunpack.c.l.b16 %v609
    %v1630 = vunpack.c.h.b16 %v609
    %v1631 = vunpack.c.l.b16 %v610
    %v1632 = vunpack.c.h.b16 %v610
    %v1633 = vunpack.c.l.b16 %v611
    %v1634 = vunpack.c.h.b16 %v611
    %v1635 = vunpack.c.l.b16 %v612
    %v1636 = vunpack.c.h.b16 %v612
    %v1637 = vunpack.c.l.b16 %v613
    %v1638 = vunpack.c.h.b16 %v613
    %v1639 = vunpack.c.l.b16 %v614
    %v1640 = vunpack.c.h.b16 %v614
    %v1641 = vunpack.c.l.b16 %v615
    %v1642 = vunpack.c.h.b16 %v615
    %v1643 = vunpack.c.l.b16 %v616
    %v1644 = vunpack.c.h.b16 %v616
    %v1645 = vunpack.c.l.b16 %v617
    %v1646 = vunpack.c.h.b16 %v617
    %v1647 = vunpack.c.l.b16 %v618
    %v1648 = vunpack.c.h.b16 %v618
    %v1649 = vunpack.c.l.b16 %v619
    %v1650 = vunpack.c.h.b16 %v619
    %v1651 = vunpack.c.l.b16 %v620
    %v1652 = vunpack.c.h.b16 %v620
    %v1653 = vunpack.c.l.b16 %v621
    %v1654 = vunpack.c.h.b16 %v621
    %v1655 = vunpack.c.l.b16 %v622
    %v1656 = vunpack.c.h.b16 %v622
    %v1657 = vunpack.c.l.b16 %v623
    %v1658 = vunpack.c.h.b16 %v623
    %v1659 = vunpack.c.l.b16 %v624
    %v1660 = vunpack.c.h.b16 %v624
    %v1661 = vunpack.c.l.b16 %v625
    %v1662 = vunpack.c.h.b16 %v625
    %v1663 = vunpack.c.l.b16 %v626
    %v1664 = vunpack.c.h.b16 %v626
    %v1665 = vunpack.c.l.b16 %v627
    %v1666 = vunpack.c.h.b16 %v627
    %v1667 = vunpack.c.l.b16 %v628
    %v1668 = vunpack.c.h.b16 %v628
    %v1669 = vunpack.c.l.b16 %v629
    %v1670 = vunpack.c.h.b16 %v629
    %v1671 = vunpack.c.l.b16 %v630
    %v1672 = vunpack.c.h.b16 %v630
    %v1673 = vunpack.c.l.b16 %v631
    %v1674 = vunpack.c.h.b16 %v631
    %v1675 = vunpack.c.l.b16 %v632
    %v1676 = vunpack.c.h.b16 %v632
    %v1677 = vunpack.c.l.b16 %v633
    %v1678 = vunpack.c.h.b16 %v633
    %v1679 = vunpack.c.l.b16 %v634
    %v1680 = vunpack.c.h.b16 %v634
    %v1681 = vunpack.c.l.b16 %v635
    %v1682 = vunpack.c.h.b16 %v635
    %v1683 = vunpack.c.l.b16 %v636
    %v1684 = vunpack.c.h.b16 %v636
    %v1685 = vunpack.c.l.b16 %v637
    %v1686 = vunpack.c.h.b16 %v637
    %v1687 = vunpack.c.l.b16 %v638
    %v1688 = vunpack.c.h.b16 %v638
    %v1689 = vunpack.c.l.b16 %v639
    %v1690 = vunpack.c.h.b16 %v639
    %v1691 = vunpack.c.l.b16 %v640
    %v1692 = vunpack.c.h.b16 %v640
    %v1693 = vunpack.c.l.b16 %v641
    %v1694 = vunpack.c.h.b16 %v641
    %v1695 = vunpack.c.l.b16 %v642
    %v1696 = vunpack.c.h.b16 %v642
    %v1697 = vunpack.c.l.b16 %v643
    %v1698 = vunpack.c.h.b16 %v643
    %v1699 = vunpack.c.l.b16 %v644
    %v1700 = vunpack.c.h.b16 %v644
    %v1701 = vunpack.c.l.b16 %v645
    %v1702 = vunpack.c.h.b16 %v645
    %v1703 = vunpack.c.l.b16 %v646
    %v1704 = vunpack.c.h.b16 %v646
    %v1705 = vunpack.c.l.b16 %v647
    %v1706 = vunpack.c.h.b16 %v647
    %v1707 = vunpack.c.l.b16 %v648
    %v1708 = vunpack.c.h.b16 %v648
    %v1709 = vunpack.c.l.b16 %v649
    %v1710 = vunpack.c.h.b16 %v649
    %v1711 = vunpack.c.l.b16 %v650
    %v1712 = vunpack.c.h.b16 %v650
    %v1713 = vunpack.c.l.b16 %v651
    %v1714 = vunpack.c.h.b16 %v651
    %v1715 = vunpack.c.l.b16 %v652
    %v1716 = vunpack.c.h.b16 %v652
    %v1717 = vunpack.c.l.b16 %v653
    %v1718 = vunpack.c.h.b16 %v653
    %v1719 = vunpack.c.l.b16 %v654
    %v1720 = vunpack.c.h.b16 %v654
    %v1721 = vunpack.c.l.b16 %v655
    %v1722 = vunpack.c.h.b16 %v655
    %v1723 = vunpack.c.l.b16 %v656
    %v1724 = vunpack.c.h.b16 %v656
    %v1725 = vunpack.c.l.b16 %v657
    %v1726 = vunpack.c.h.b16 %v657
    %v1727 = vunpack.c.l.b16 %v658
    %v1728 = vunpack.c.h.b16 %v658
    %v1729 = vunpack.c.l.b16 %v659
    %v1730 = vunpack.c.h.b16 %v659
    %v1731 = vunpack.c.l.b16 %v660
    %v1732 = vunpack.c.h.b16 %v660
    %v1733 = vunpack.c.l.b16 %v661
    %v1734 = vunpack.c.h.b16 %v661
    %v1735 = vunpack.c.l.b16 %v662
    %v1736 = vunpack.c.h.b16 %v662
    %v1737 = vunpack.c.l.b16 %v663
    %v1738 = vunpack.c.h.b16 %v663
    %v1739 = vunpack.c.l.b16 %v664
    %v1740 = vunpack.c.h.b16 %v664
    %v1741 = vunpack.c.l.b16 %v665
    %v1742 = vunpack.c.h.b16 %v665
    %v1743 = vunpack.c.l.b16 %v666
    %v1744 = vunpack.c.h.b16 %v666
    %v1745 = vunpack.c.l.b16 %v667
    %v1746 = vunpack.c.h.b16 %v667
    %v1747 = vunpack.c.l.b16 %v668
    %v1748 = vunpack.c.h.b16 %v668
    %v1749 = vunpack.c.l.b16 %v669
    %v1750 = vunpack.c.h.b16 %v669
    %v1751 = vunpack.c.l.b16 %v670
    %v1752 = vunpack.c.h.b16 %v670
    %v1753 = vunpack.c.l.b16 %v671
    %v1754 = vunpack.c.h.b16 %v671
    %v1755 = vunpack.c.l.b16 %v672
    %v1756 = vunpack.c.h.b16 %v672
    %v1757 = vunpack.c.l.b16 %v673
    %v1758 = vunpack.c.h.b16 %v673
    %v1759 = vunpack.c.l.b16 %v674
    %v1760 = vunpack.c.h.b16 %v674
    %v1761 = vunpack.c.l.b16 %v675
    %v1762 = vunpack.c.h.b16 %v675
    %v1763 = vunpack.c.l.b16 %v676
    %v1764 = vunpack.c.h.b16 %v676
    %v1765 = vunpack.c.l.b16 %v677
    %v1766 = vunpack.c.h.b16 %v677
    %v1767 = vunpack.c.l.b16 %v678
    %v1768 = vunpack.c.h.b16 %v678
    %v1769 = vunpack.c.l.b16 %v679
    %v1770 = vunpack.c.h.b16 %v679
    %v1771 = vunpack.c.l.b16 %v680
    %v1772 = vunpack.c.h.b16 %v680
    %v1773 = vunpack.c.l.b16 %v681
    %v1774 = vunpack.c.h.b16 %v681
    %v1775 = vunpack.c.l.b16 %v682
    %v1776 = vunpack.c.h.b16 %v682
    %v1777 = vunpack.c.l.b16 %v683
    %v1778 = vunpack.c.h.b16 %v683
    %v1779 = vunpack.c.l.b16 %v684
    %v1780 = vunpack.c.h.b16 %v684
    %v1781 = vunpack.c.l.b16 %v685
    %v1782 = vunpack.c.h.b16 %v685
    %v1783 = vunpack.c.l.b16 %v686
    %v1784 = vunpack.c.h.b16 %v686
    %v1785 = vunpack.c.l.b16 %v687
    %v1786 = vunpack.c.h.b16 %v687
    %v1787 = vunpack.c.l.b16 %v688
    %v1788 = vunpack.c.h.b16 %v688
    %v1789 = vunpack.c.l.b16 %v689
    %v1790 = vunpack.c.h.b16 %v689
    %v1791 = vunpack.c.l.b16 %v690
    %v1792 = vunpack.c.h.b16 %v690
    %v1793 = vunpack.c.l.b16 %v691
    %v1794 = vunpack.c.h.b16 %v691
    %v1795 = vunpack.c.l.b16 %v692
    %v1796 = vunpack.c.h.b16 %v692
    %v1797 = vunpack.c.l.b16 %v693
    %v1798 = vunpack.c.h.b16 %v693
    %v1799 = vunpack.c.l.b16 %v694
    %v1800 = vunpack.c.h.b16 %v694
    %v1801 = vunpack.c.l.b16 %v695
    %v1802 = vunpack.c.h.b16 %v695
    %v1803 = vunpack.c.l.b16 %v696
    %v1804 = vunpack.c.h.b16 %v696
    %v1805 = vunpack.c.l.b16 %v697
    %v1806 = vunpack.c.h.b16 %v697
    %v1807 = vunpack.c.l.b16 %v698
    %v1808 = vunpack.c.h.b16 %v698
    %v1809 = vunpack.c.l.b16 %v699
    %v1810 = vunpack.c.h.b16 %v699
    %v1811 = vunpack.c.l.b16 %v700
    %v1812 = vunpack.c.h.b16 %v700
    %v1813 = vunpack.c.l.b16 %v701
    %v1814 = vunpack.c.h.b16 %v701
    %v1815 = vunpack.c.l.b16 %v702
    %v1816 = vunpack.c.h.b16 %v702
    %v1817 = vunpack.c.l.b16 %v703
    %v1818 = vunpack.c.h.b16 %v703
    %v1819 = vunpack.c.l.b16 %v704
    %v1820 = vunpack.c.h.b16 %v704
    %v1821 = vunpack.c.l.b16 %v705
    %v1822 = vunpack.c.h.b16 %v705
    %v1823 = vunpack.c.l.b16 %v706
    %v1824 = vunpack.c.h.b16 %v706
    %v1825 = vunpack.c.l.b16 %v707
    %v1826 = vunpack.c.h.b16 %v707
    %v1827 = vunpack.c.l.b16 %v708
    %v1828 = vunpack.c.h.b16 %v708
    %v1829 = vunpack.c.l.b16 %v709
    %v1830 = vunpack.c.h.b16 %v709
    %v1831 = vunpack.c.l.b16 %v710
    %v1832 = vunpack.c.h.b16 %v710
    %v1833 = vunpack.c.l.b16 %v711
    %v1834 = vunpack.c.h.b16 %v711
    %v1835 = vunpack.c.l.b16 %v712
    %v1836 = vunpack.c.h.b16 %v712
    %v1837 = vunpack.c.l.b16 %v713
    %v1838 = vunpack.c.h.b16 %v713
    %v1839 = vunpack.c.l.b16 %v714
    %v1840 = vunpack.c.h.b16 %v714
    %v1841 = vunpack.c.l.b16 %v715
    %v1842 = vunpack.c.h.b16 %v715
    %v1843 = vunpack.c.l.b16 %v716
    %v1844 = vunpack.c.h.b16 %v716
    %v1845 = vunpack.c.l.b16 %v717
    %v1846 = vunpack.c.h.b16 %v717
    %v1847 = vunpack.c.l.b16 %v718
    %v1848 = vunpack.c.h.b16 %v718
    %v1849 = vunpack.c.l.b16 %v719
    %v1850 = vunpack.c.h.b16 %v719
    %v1851 = vunpack.c.l.b16 %v720
    %v1852 = vunpack.c.h.b16 %v720
    %v1853 = vunpack.c.l.b16 %v721
    %v1854 = vunpack.c.h.b16 %v721
    %v1855 = vunpack.c.l.b16 %v722
    %v1856 = vunpack.c.h.b16 %v722
    %v1857 = vunpack.c.l.b16 %v723
    %v1858 = vunpack.c.h.b16 %v723
    %v1859 = vunpack.c.l.b16 %v724
    %v1860 = vunpack.c.h.b16 %v724
    %v1861 = vunpack.c.l.b16 %v725
    %v1862 = vunpack.c.h.b16 %v725
    %v1863 = vunpack.c.l.b16 %v726
    %v1864 = vunpack.c.h.b16 %v726
    %v1865 = vunpack.c.l.b16 %v727
    %v1866 = vunpack.c.h.b16 %v727
    %v1867 = vunpack.c.l.b16 %v728
    %v1868 = vunpack.c.h.b16 %v728
    %v1869 = vunpack.c.l.b16 %v729
    %v1870 = vunpack.c.h.b16 %v729
    %v1871 = vunpack.c.l.b16 %v730
    %v1872 = vunpack.c.h.b16 %v730
    %v1873 = vunpack.c.l.b16 %v731
    %v1874 = vunpack.c.h.b16 %v731
    %v1875 = vunpack.c.l.b16 %v732
    %v1876 = vunpack.c.h.b16 %v732
    %v1877 = vunpack.c.l.b16 %v733
    %v1878 = vunpack.c.h.b16 %v733
    %v1879 = vunpack.c.l.b16 %v734
    %v1880 = vunpack.c.h.b16 %v734
    %v1881 = vunpack.c.l.b16 %v735
    %v1882 = vunpack.c.h.b16 %v735
    %v1883 = vunpack.c.l.b16 %v736
    %v1884 = vunpack.c.h.b16 %v736
    %v1885 = vunpack.c.l.b16 %v737
    %v1886 = vunpack.c.h.b16 %v737
    %v1887 = vunpack.c.l.b16 %v738
    %v1888 = vunpack.c.h.b16 %v738
    %v1889 = vunpack.c.l.b16 %v739
    %v1890 = vunpack.c.h.b16 %v739
    %v1891 = vunpack.c.l.b16 %v740
    %v1892 = vunpack.c.h.b16 %v740
    %v1893 = vunpack.c.l.b16 %v741
    %v1894 = vunpack.c.h.b16 %v741
    %v1895 = vunpack.c.l.b16 %v742
    %v1896 = vunpack.c.h.b16 %v742
    %v1897 = vunpack.c.l.b16 %v743
    %v1898 = vunpack.c.h.b16 %v743
    %v1899 = vunpack.c.l.b16 %v744
    %v1900 = vunpack.c.h.b16 %v744
    %v1901 = vunpack.c.l.b16 %v745
    %v1902 = vunpack.c.h.b16 %v745
    %v1903 = vunpack.c.l.b16 %v746
    %v1904 = vunpack.c.h.b16 %v746
    %v1905 = vunpack.c.l.b16 %v747
    %v1906 = vunpack.c.h.b16 %v747
    %v1907 = vunpack.c.l.b16 %v748
    %v1908 = vunpack.c.h.b16 %v748
    %v1909 = vunpack.c.l.b16 %v749
    %v1910 = vunpack.c.h.b16 %v749
    %v1911 = vunpack.c.l.b16 %v750
    %v1912 = vunpack.c.h.b16 %v750
    %v1913 = vunpack.c.l.b16 %v751
    %v1914 = vunpack.c.h.b16 %v751
    %v1915 = vunpack.c.l.b16 %v752
    %v1916 = vunpack.c.h.b16 %v752
    %v1917 = vunpack.c.l.b16 %v753
    %v1918 = vunpack.c.h.b16 %v753
    %v1919 = vunpack.c.l.b16 %v754
    %v1920 = vunpack.c.h.b16 %v754
    %v1921 = vpack.c.b16 %v1159, %v1153
    %v1922 = vpack.c.b16 %v1160, %v1154
    %v1923 = vpack.c.b16 %v1161, %v1155
    %v1924 = vpack.c.b16 %v1162, %v1156
    %v1925 = vpack.c.b16 %v1163, %v1157
    %v1926 = vpack.c.b16 %v1164, %v1158
    %v1927 = vpack.c.b16 %v1171, %v1165
    %v1928 = vpack.c.b16 %v1172, %v1166
    %v1929 = vpack.c.b16 %v1173, %v1167
    %v1930 = vpack.c.b16 %v1174, %v1168
    %v1931 = vpack.c.b16 %v1175, %v1169
    %v1932 = vpack.c.b16 %v1176, %v1170
    %v1933 = vpack.c.b16 %v1183, %v1177
    %v1934 = vpack.c.b16 %v1184, %v1178
    %v1935 = vpack.c.b16 %v1185, %v1179
    %v1936 = vpack.c.b16 %v1186, %v1180
    %v1937 = vpack.c.b16 %v1187, %v1181
    %v1938 = vpack.c.b16 %v1188, %v1182
    %v1939 = vpack.c.b16 %v1195, %v1189
    %v1940 = vpack.c.b16 %v1196, %v1190
    %v1941 = vpack.c.b16 %v1197, %v1191
    %v1942 = vpack.c.b16 %v1198, %v1192
    %v1943 = vpack.c.b16 %v1199, %v1193
    %v1944 = vpack.c.b16 %v1200, %v1194
    %v1945 = vpack.c.b16 %v1207, %v1201
    %v1946 = vpack.c.b16 %v1208, %v1202
    %v1947 = vpack.c.b16 %v1209, %v1203
    %v1948 = vpack.c.b16 %v1210, %v1204
    %v1949 = vpack.c.b16 %v1211, %v1205
    %v1950 = vpack.c.b16 %v1212, %v1206
    %v1951 = vpack.c.b16 %v1219, %v1213
    %v1952 = vpack.c.b16 %v1220, %v1214
    %v1953 = vpack.c.b16 %v1221, %v1215
    %v1954 = vpack.c.b16 %v1222, %v1216
    %v1955 = vpack.c.b16 %v1223, %v1217
    %v1956 = vpack.c.b16 %v1224, %v1218
    %v1957 = vpack.c.b16 %v1231, %v1225
    %v1958 = vpack.c.b16 %v1232, %v1226
    %v1959 = vpack.c.b16 %v1233, %v1227
    %v1960 = vpack.c.b16 %v1234, %v1228
    %v1961 = vpack.c.b16 %v1235, %v1229
    %v1962 = vpack.c.b16 %v1236, %v1230
    %v1963 = vpack.c.b16 %v1243, %v1237
    %v1964 = vpack.c.b16 %v1244, %v1238
    %v1965 = vpack.c.b16 %v1245, %v1239
    %v1966 = vpack.c.b16 %v1246, %v1240
    %v1967 = vpack.c.b16 %v1247, %v1241
    %v1968 = vpack.c.b16 %v1248, %v1242
    %v1969 = vpack.c.b16 %v1255, %v1249
    %v1970 = vpack.c.b16 %v1256, %v1250
    %v1971 = vpack.c.b16 %v1257, %v1251
    %v1972 = vpack.c.b16 %v1258, %v1252
    %v1973 = vpack.c.b16 %v1259, %v1253
    %v1974 = vpack.c.b16 %v1260, %v1254
    %v1975 = vpack.c.b16 %v1267, %v1261
    %v1976 = vpack.c.b16 %v1268, %v1262
    %v1977 = vpack.c.b16 %v1269, %v1263
    %v1978 = vpack.c.b16 %v1270, %v1264
    %v1979 = vpack.c.b16 %v1271, %v1265
    %v1980 = vpack.c.b16 %v1272, %v1266
    %v1981 = vpack.c.b16 %v1279, %v1273
    %v1982 = vpack.c.b16 %v1280, %v1274
    %v1983 = vpack.c.b16 %v1281, %v1275
    %v1984 = vpack.c.b16 %v1282, %v1276
    %v1985 = vpack.c.b16 %v1283, %v1277
    %v1986 = vpack.c.b16 %v1284, %v1278
    %v1987 = vpack.c.b16 %v1291, %v1285
    %v1988 = vpack.c.b16 %v1292, %v1286
    %v1989 = vpack.c.b16 %v1293, %v1287
    %v1990 = vpack.c.b16 %v1294, %v1288
    %v1991 = vpack.c.b16 %v1295, %v1289
    %v1992 = vpack.c.b16 %v1296, %v1290
    %v1993 = vpack.c.b16 %v1303, %v1297
    %v1994 = vpack.c.b16 %v1304, %v1298
    %v1995 = vpack.c.b16 %v1305, %v1299
    %v1996 = vpack.c.b16 %v1306, %v1300
    %v1997 = vpack.c.b16 %v1307, %v1301
    %v1998 = vpack.c.b16 %v1308, %v1302
    %v1999 = vpack.c.b16 %v1315, %v1309
    %v2000 = vpack.c.b16 %v1316, %v1310
    %v2001 = vpack.c.b16 %v1317, %v1311
    %v2002 = vpack.c.b16 %v1318, %v1312
    %v2003 = vpack.c.b16 %v1319, %v1313
    %v2004 = vpack.c.b16 %v1320, %v1314
    %v2005 = vpack.c.b16 %v1327, %v1321
    %v2006 = vpack.c.b16 %v1328, %v1322
    %v2007 = vpack.c.b16 %v1329, %v1323
    %v2008 = vpack.c.b16 %v1330, %v1324
    %v2009 = vpack.c.b16 %v1331, %v1325
    %v2010 = vpack.c.b16 %v1332, %v1326
    %v2011 = vpack.c.b16 %v1339, %v1333
    %v2012 = vpack.c.b16 %v1340, %v1334
    %v2013 = vpack.c.b16 %v1341, %v1335
    %v2014 = vpack.c.b16 %v1342, %v1336
    %v2015 = vpack.c.b16 %v1343, %v1337
    %v2016 = vpack.c.b16 %v1344, %v1338
    %v2017 = vpack.c.b16 %v1351, %v1345
    %v2018 = vpack.c.b16 %v1352, %v1346
    %v2019 = vpack.c.b16 %v1353, %v1347
    %v2020 = vpack.c.b16 %v1354, %v1348
    %v2021 = vpack.c.b16 %v1355, %v1349
    %v2022 = vpack.c.b16 %v1356, %v1350
    %v2023 = vpack.c.b16 %v1363, %v1357
    %v2024 = vpack.c.b16 %v1364, %v1358
    %v2025 = vpack.c.b16 %v1365, %v1359
    %v2026 = vpack.c.b16 %v1366, %v1360
    %v2027 = vpack.c.b16 %v1367, %v1361
    %v2028 = vpack.c.b16 %v1368, %v1362
    %v2029 = vpack.c.b16 %v1375, %v1369
    %v2030 = vpack.c.b16 %v1376, %v1370
    %v2031 = vpack.c.b16 %v1377, %v1371
    %v2032 = vpack.c.b16 %v1378, %v1372
    %v2033 = vpack.c.b16 %v1379, %v1373
    %v2034 = vpack.c.b16 %v1380, %v1374
    %v2035 = vpack.c.b16 %v1387, %v1381
    %v2036 = vpack.c.b16 %v1388, %v1382
    %v2037 = vpack.c.b16 %v1389, %v1383
    %v2038 = vpack.c.b16 %v1390, %v1384
    %v2039 = vpack.c.b16 %v1391, %v1385
    %v2040 = vpack.c.b16 %v1392, %v1386
    %v2041 = vpack.c.b16 %v1399, %v1393
    %v2042 = vpack.c.b16 %v1400, %v1394
    %v2043 = vpack.c.b16 %v1401, %v1395
    %v2044 = vpack.c.b16 %v1402, %v1396
    %v2045 = vpack.c.b16 %v1403, %v1397
    %v2046 = vpack.c.b16 %v1404, %v1398
    %v2047 = vpack.c.b16 %v1411, %v1405
    %v2048 = vpack.c.b16 %v1412, %v1406
    %v2049 = vpack.c.b16 %v1413, %v1407
    %v2050 = vpack.c.b16 %v1414, %v1408
    %v2051 = vpack.c.b16 %v1415, %v1409
    %v2052 = vpack.c.b16 %v1416, %v1410
    %v2053 = vpack.c.b16 %v1423, %v1417
    %v2054 = vpack.c.b16 %v1424, %v1418
    %v2055 = vpack.c.b16 %v1425, %v1419
    %v2056 = vpack.c.b16 %v1426, %v1420
    %v2057 = vpack.c.b16 %v1427, %v1421
    %v2058 = vpack.c.b16 %v1428, %v1422
    %v2059 = vpack.c.b16 %v1435, %v1429
    %v2060 = vpack.c.b16 %v1436, %v1430
    %v2061 = vpack.c.b16 %v1437, %v1431
    %v2062 = vpack.c.b16 %v1438, %v1432
    %v2063 = vpack.c.b16 %v1439, %v1433
    %v2064 = vpack.c.b16 %v1440, %v1434
    %v2065 = vpack.c.b16 %v1447, %v1441
    %v2066 = vpack.c.b16 %v1448, %v1442
    %v2067 = vpack.c.b16 %v1449, %v1443
    %v2068 = vpack.c.b16 %v1450, %v1444
    %v2069 = vpack.c.b16 %v1451, %v1445
    %v2070 = vpack.c.b16 %v1452, %v1446
    %v2071 = vpack.c.b16 %v1459, %v1453
    %v2072 = vpack.c.b16 %v1460, %v1454
    %v2073 = vpack.c.b16 %v1461, %v1455
    %v2074 = vpack.c.b16 %v1462, %v1456
    %v2075 = vpack.c.b16 %v1463, %v1457
    %v2076 = vpack.c.b16 %v1464, %v1458
    %v2077 = vpack.c.b16 %v1471, %v1465
    %v2078 = vpack.c.b16 %v1472, %v1466
    %v2079 = vpack.c.b16 %v1473, %v1467
    %v2080 = vpack.c.b16 %v1474, %v1468
    %v2081 = vpack.c.b16 %v1475, %v1469
    %v2082 = vpack.c.b16 %v1476, %v1470
    %v2083 = vpack.c.b16 %v1483, %v1477
    %v2084 = vpack.c.b16 %v1484, %v1478
    %v2085 = vpack.c.b16 %v1485, %v1479
    %v2086 = vpack.c.b16 %v1486, %v1480
    %v2087 = vpack.c.b16 %v1487, %v1481
    %v2088 = vpack.c.b16 %v1488, %v1482
    %v2089 = vpack.c.b16 %v1495, %v1489
    %v2090 = vpack.c.b16 %v1496, %v1490
    %v2091 = vpack.c.b16 %v1497, %v1491
    %v2092 = vpack.c.b16 %v1498, %v1492
    %v2093 = vpack.c.b16 %v1499, %v1493
    %v2094 = vpack.c.b16 %v1500, %v1494
    %v2095 = vpack.c.b16 %v1507, %v1501
    %v2096 = vpack.c.b16 %v1508, %v1502
    %v2097 = vpack.c.b16 %v1509, %v1503
    %v2098 = vpack.c.b16 %v1510, %v1504
    %v2099 = vpack.c.b16 %v1511, %v1505
    %v2100 = vpack.c.b16 %v1512, %v1506
    %v2101 = vpack.c.b16 %v1519, %v1513
    %v2102 = vpack.c.b16 %v1520, %v1514
    %v2103 = vpack.c.b16 %v1521, %v1515
    %v2104 = vpack.c.b16 %v1522, %v1516
    %v2105 = vpack.c.b16 %v1523, %v1517
    %v2106 = vpack.c.b16 %v1524, %v1518
    %v2107 = vpack.c.b16 %v1531, %v1525
    %v2108 = vpack.c.b16 %v1532, %v1526
    %v2109 = vpack.c.b16 %v1533, %v1527
    %v2110 = vpack.c.b16 %v1534, %v1528
    %v2111 = vpack.c.b16 %v1535, %v1529
    %v2112 = vpack.c.b16 %v1536, %v1530
    %v2113 = vpack.c.b16 %v1543, %v1537
    %v2114 = vpack.c.b16 %v1544, %v1538
    %v2115 = vpack.c.b16 %v1545, %v1539
    %v2116 = vpack.c.b16 %v1546, %v1540
    %v2117 = vpack.c.b16 %v1547, %v1541
    %v2118 = vpack.c.b16 %v1548, %v1542
    %v2119 = vpack.c.b16 %v1555, %v1549
    %v2120 = vpack.c.b16 %v1556, %v1550
    %v2121 = vpack.c.b16 %v1557, %v1551
    %v2122 = vpack.c.b16 %v1558, %v1552
    %v2123 = vpack.c.b16 %v1559, %v1553
    %v2124 = vpack.c.b16 %v1560, %v1554
    %v2125 = vpack.c.b16 %v1567, %v1561
    %v2126 = vpack.c.b16 %v1568, %v1562
    %v2127 = vpack.c.b16 %v1569, %v1563
    %v2128 = vpack.c.b16 %v1570, %v1564
    %v2129 = vpack.c.b16 %v1571, %v1565
    %v2130 = vpack.c.b16 %v1572, %v1566
    %v2131 = vpack.c.b16 %v1579, %v1573
    %v2132 = vpack.c.b16 %v1580, %v1574
    %v2133 = vpack.c.b16 %v1581, %v1575
    %v2134 = vpack.c.b16 %v1582, %v1576
    %v2135 = vpack.c.b16 %v1583, %v1577
    %v2136 = vpack.c.b16 %v1584, %v1578
    %v2137 = vpack.c.b16 %v1591, %v1585
    %v2138 = vpack.c.b16 %v1592, %v1586
    %v2139 = vpack.c.b16 %v1593, %v1587
    %v2140 = vpack.c.b16 %v1594, %v1588
    %v2141 = vpack.c.b16 %v1595, %v1589
    %v2142 = vpack.c.b16 %v1596, %v1590
    %v2143 = vpack.c.b16 %v1603, %v1597
    %v2144 = vpack.c.b16 %v1604, %v1598
    %v2145 = vpack.c.b16 %v1605, %v1599
    %v2146 = vpack.c.b16 %v1606, %v1600
    %v2147 = vpack.c.b16 %v1607, %v1601
    %v2148 = vpack.c.b16 %v1608, %v1602
    %v2149 = vpack.c.b16 %v1615, %v1609
    %v2150 = vpack.c.b16 %v1616, %v1610
    %v2151 = vpack.c.b16 %v1617, %v1611
    %v2152 = vpack.c.b16 %v1618, %v1612
    %v2153 = vpack.c.b16 %v1619, %v1613
    %v2154 = vpack.c.b16 %v1620, %v1614
    %v2155 = vpack.c.b16 %v1627, %v1621
    %v2156 = vpack.c.b16 %v1628, %v1622
    %v2157 = vpack.c.b16 %v1629, %v1623
    %v2158 = vpack.c.b16 %v1630, %v1624
    %v2159 = vpack.c.b16 %v1631, %v1625
    %v2160 = vpack.c.b16 %v1632, %v1626
    %v2161 = vpack.c.b16 %v1639, %v1633
    %v2162 = vpack.c.b16 %v1640, %v1634
    %v2163 = vpack.c.b16 %v1641, %v1635
    %v2164 = vpack.c.b16 %v1642, %v1636
    %v2165 = vpack.c.b16 %v1643, %v1637
    %v2166 = vpack.c.b16 %v1644, %v1638
    %v2167 = vpack.c.b16 %v1651, %v1645
    %v2168 = vpack.c.b16 %v1652, %v1646
    %v2169 = vpack.c.b16 %v1653, %v1647
    %v2170 = vpack.c.b16 %v1654, %v1648
    %v2171 = vpack.c.b16 %v1655, %v1649
    %v2172 = vpack.c.b16 %v1656, %v1650
    %v2173 = vpack.c.b16 %v1663, %v1657
    %v2174 = vpack.c.b16 %v1664, %v1658
    %v2175 = vpack.c.b16 %v1665, %v1659
    %v2176 = vpack.c.b16 %v1666, %v1660
    %v2177 = vpack.c.b16 %v1667, %v1661
    %v2178 = vpack.c.b16 %v1668, %v1662
    %v2179 = vpack.c.b16 %v1675, %v1669
    %v2180 = vpack.c.b16 %v1676, %v1670
    %v2181 = vpack.c.b16 %v1677, %v1671
    %v2182 = vpack.c.b16 %v1678, %v1672
    %v2183 = vpack.c.b16 %v1679, %v1673
    %v2184 = vpack.c.b16 %v1680, %v1674
    %v2185 = vpack.c.b16 %v1687, %v1681
    %v2186 = vpack.c.b16 %v1688, %v1682
    %v2187 = vpack.c.b16 %v1689, %v1683
    %v2188 = vpack.c.b16 %v1690, %v1684
    %v2189 = vpack.c.b16 %v1691, %v1685
    %v2190 = vpack.c.b16 %v1692, %v1686
    %v2191 = vpack.c.b16 %v1699, %v1693
    %v2192 = vpack.c.b16 %v1700, %v1694
    %v2193 = vpack.c.b16 %v1701, %v1695
    %v2194 = vpack.c.b16 %v1702, %v1696
    %v2195 = vpack.c.b16 %v1703, %v1697
    %v2196 = vpack.c.b16 %v1704, %v1698
    %v2197 = vpack.c.b16 %v1711, %v1705
    %v2198 = vpack.c.b16 %v1712, %v1706
    %v2199 = vpack.c.b16 %v1713, %v1707
    %v2200 = vpack.c.b16 %v1714, %v1708
    %v2201 = vpack.c.b16 %v1715, %v1709
    %v2202 = vpack.c.b16 %v1716, %v1710
    %v2203 = vpack.c.b16 %v1723, %v1717
    %v2204 = vpack.c.b16 %v1724, %v1718
    %v2205 = vpack.c.b16 %v1725, %v1719
    %v2206 = vpack.c.b16 %v1726, %v1720
    %v2207 = vpack.c.b16 %v1727, %v1721
    %v2208 = vpack.c.b16 %v1728, %v1722
    %v2209 = vpack.c.b16 %v1735, %v1729
    %v2210 = vpack.c.b16 %v1736, %v1730
    %v2211 = vpack.c.b16 %v1737, %v1731
    %v2212 = vpack.c.b16 %v1738, %v1732
    %v2213 = vpack.c.b16 %v1739, %v1733
    %v2214 = vpack.c.b16 %v1740, %v1734
    %v2215 = vpack.c.b16 %v1747, %v1741
    %v2216 = vpack.c.b16 %v1748, %v1742
    %v2217 = vpack.c.b16 %v1749, %v1743
    %v2218 = vpack.c.b16 %v1750, %v1744
    %v2219 = vpack.c.b16 %v1751, %v1745
    %v2220 = vpack.c.b16 %v1752, %v1746
    %v2221 = vpack.c.b16 %v1759, %v1753
    %v2222 = vpack.c.b16 %v1760, %v1754
    %v2223 = vpack.c.b16 %v1761, %v1755
    %v2224 = vpack.c.b16 %v1762, %v1756
    %v2225 = vpack.c.b16 %v1763, %v1757
    %v2226 = vpack.c.b16 %v1764, %v1758
    %v2227 = vpack.c.b16 %v1771, %v1765
    %v2228 = vpack.c.b16 %v1772, %v1766
    %v2229 = vpack.c.b16 %v1773, %v1767
    %v2230 = vpack.c.b16 %v1774, %v1768
    %v2231 = vpack.c.b16 %v1775, %v1769
    %v2232 = vpack.c.b16 %v1776, %v1770
    %v2233 = vpack.c.b16 %v1783, %v1777
    %v2234 = vpack.c.b16 %v1784, %v1778
    %v2235 = vpack.c.b16 %v1785, %v1779
    %v2236 = vpack.c.b16 %v1786, %v1780
    %v2237 = vpack.c.b16 %v1787, %v1781
    %v2238 = vpack.c.b16 %v1788, %v1782
    %v2239 = vpack.c.b16 %v1795, %v1789
    %v2240 = vpack.c.b16 %v1796, %v1790
    %v2241 = vpack.c.b16 %v1797, %v1791
    %v2242 = vpack.c.b16 %v1798, %v1792
    %v2243 = vpack.c.b16 %v1799, %v1793
    %v2244 = vpack.c.b16 %v1800, %v1794
    %v2245 = vpack.c.b16 %v1807, %v1801
    %v2246 = vpack.c.b16 %v1808, %v1802
    %v2247 = vpack.c.b16 %v1809, %v1803
    %v2248 = vpack.c.b16 %v1810, %v1804
    %v2249 = vpack.c.b16 %v1811, %v1805
    %v2250 = vpack.c.b16 %v1812, %v1806
    %v2251 = vpack.c.b16 %v1819, %v1813
    %v2252 = vpack.c.b16 %v1820, %v1814
    %v2253 = vpack.c.b16 %v1821, %v1815
    %v2254 = vpack.c.b16 %v1822, %v1816
    %v2255 = vpack.c.b16 %v1823, %v1817
    %v2256 = vpack.c.b16 %v1824, %v1818
    %v2257 = vpack.c.b16 %v1831, %v1825
    %v2258 = vpack.c.b16 %v1832, %v1826
    %v2259 = vpack.c.b16 %v1833, %v1827
    %v2260 = vpack.c.b16 %v1834, %v1828
    %v2261 = vpack.c.b16 %v1835, %v1829
    %v2262 = vpack.c.b16 %v1836, %v1830
    %v2263 = vpack.c.b16 %v1843, %v1837
    %v2264 = vpack.c.b16 %v1844, %v1838
    %v2265 = vpack.c.b16 %v1845, %v1839
    %v2266 = vpack.c.b16 %v1846, %v1840
    %v2267 = vpack.c.b16 %v1847, %v1841
    %v2268 = vpack.c.b16 %v1848, %v1842
    %v2269 = vpack.c.b16 %v1855, %v1849
    %v2270 = vpack.c.b16 %v1856, %v1850
    %v2271 = vpack.c.b16 %v1857, %v1851
    %v2272 = vpack.c.b16 %v1858, %v1852
    %v2273 = vpack.c.b16 %v1859, %v1853
    %v2274 = vpack.c.b16 %v1860, %v1854
    %v2275 = vpack.c.b16 %v1867, %v1861
    %v2276 = vpack.c.b16 %v1868, %v1862
    %v2277 = vpack.c.b16 %v1869, %v1863
    %v2278 = vpack.c.b16 %v1870, %v1864
    %v2279 = vpack.c.b16 %v1871, %v1865
    %v2280 = vpack.c.b16 %v1872, %v1866
    %v2281 = vpack.c.b16 %v1879, %v1873
    %v2282 = vpack.c.b16 %v1880, %v1874
    %v2283 = vpack.c.b16 %v1881, %v1875
    %v2284 = vpack.c.b16 %v1882, %v1876
    %v2285 = vpack.c.b16 %v1883, %v1877
    %v2286 = vpack.c.b16 %v1884, %v1878
    %v2287 = vpack.c.b16 %v1891, %v1885
    %v2288 = vpack.c.b16 %v1892, %v1886
    %v2289 = vpack.c.b16 %v1893, %v1887
    %v2290 = vpack.c.b16 %v1894, %v1888
    %v2291 = vpack.c.b16 %v1895, %v1889
    %v2292 = vpack.c.b16 %v1896, %v1890
    %v2293 = vpack.c.b16 %v1903, %v1897
    %v2294 = vpack.c.b16 %v1904, %v1898
    %v2295 = vpack.c.b16 %v1905, %v1899
    %v2296 = vpack.c.b16 %v1906, %v1900
    %v2297 = vpack.c.b16 %v1907, %v1901
    %v2298 = vpack.c.b16 %v1908, %v1902
    %v2299 = vpack.c.b16 %v1915, %v1909
    %v2300 = vpack.c.b16 %v1916, %v1910
    %v2301 = vpack.c.b16 %v1917, %v1911
    %v2302 = vpack.c.b16 %v1918, %v1912
    %v2303 = vpack.c.b16 %v1919, %v1913
    %v2304 = vpack.c.b16 %v1920, %v1914
    %2689 = vmatpush.bf16.msra.mxu0 %v1963
    %2690 = vmatpush.bf16.msra.mxu0 %v1957
    %2691 = vmatpush.bf16.msra.mxu0 %v1951
    %2692 = vmatpush.bf16.msra.mxu0 %v1945
    %2693 = vmatpush.bf16.msra.mxu0 %v1939
    %2694 = vmatpush.bf16.msra.mxu0 %v1933
    %2695 = vmatpush.bf16.msra.mxu0 %v1927
    %2696 = vmatpush.bf16.msra.mxu0 %v1921
    %2697 = vmatmul.bf16.gmra.mxu0 %v363
    %v2698 = vpop.f32.mrf.mxu0
    %v2699 = vadd.f32 %v757, %v2698
    %v2700 = vpop.f32.mrf.mxu0
    %2701 = vdwg.mxu0
    %2702 = vmatpush.bf16.msra.mxu0 %v2011
    %2703 = vmatpush.bf16.msra.mxu0 %v2005
    %2704 = vmatpush.bf16.msra.mxu0 %v1999
    %2705 = vmatpush.bf16.msra.mxu0 %v1993
    %2706 = vmatpush.bf16.msra.mxu0 %v1987
    %2707 = vmatpush.bf16.msra.mxu0 %v1981
    %2708 = vmatpush.bf16.msra.mxu0 %v1975
    %2709 = vmatpush.bf16.msra.mxu0 %v1969
    %2710 = vmatmul.bf16.gmra.mxu0 %v364
    %v2711 = vpop.f32.mrf.mxu0
    %v2712 = vadd.f32 %v2699, %v2711
    %v2713 = vpop.f32.mrf.mxu0
    %2714 = vdwg.mxu0
    %2715 = vmatpush.bf16.msra.mxu0 %v2059
    %2716 = vmatpush.bf16.msra.mxu0 %v2053
    %2717 = vmatpush.bf16.msra.mxu0 %v2047
    %2718 = vmatpush.bf16.msra.mxu0 %v2041
    %2719 = vmatpush.bf16.msra.mxu0 %v2035
    %2720 = vmatpush.bf16.msra.mxu0 %v2029
    %2721 = vmatpush.bf16.msra.mxu0 %v2023
    %2722 = vmatpush.bf16.msra.mxu0 %v2017
    %2723 = vmatmul.bf16.gmra.mxu0 %v365
    %v2724 = vpop.f32.mrf.mxu0
    %v2725 = vadd.f32 %v2712, %v2724
    %v2726 = vpop.f32.mrf.mxu0
    %2727 = vdwg.mxu0
    %2728 = vmatpush.bf16.msra.mxu0 %v2107
    %2729 = vmatpush.bf16.msra.mxu0 %v2101
    %2730 = vmatpush.bf16.msra.mxu0 %v2095
    %2731 = vmatpush.bf16.msra.mxu0 %v2089
    %2732 = vmatpush.bf16.msra.mxu0 %v2083
    %2733 = vmatpush.bf16.msra.mxu0 %v2077
    %2734 = vmatpush.bf16.msra.mxu0 %v2071
    %2735 = vmatpush.bf16.msra.mxu0 %v2065
    %2736 = vmatmul.bf16.gmra.mxu0 %v366
    %v2737 = vpop.f32.mrf.mxu0
    %v2738 = vadd.f32 %v2725, %v2737
    %v2739 = vpop.f32.mrf.mxu0
    %2740 = vdwg.mxu0
    %2741 = vmatpush.bf16.msra.mxu0 %v2155
    %2742 = vmatpush.bf16.msra.mxu0 %v2149
    %2743 = vmatpush.bf16.msra.mxu0 %v2143
    %2744 = vmatpush.bf16.msra.mxu0 %v2137
    %2745 = vmatpush.bf16.msra.mxu0 %v2131
    %2746 = vmatpush.bf16.msra.mxu0 %v2125
    %2747 = vmatpush.bf16.msra.mxu0 %v2119
    %2748 = vmatpush.bf16.msra.mxu0 %v2113
    %2749 = vmatmul.bf16.gmra.mxu0 %v367
    %v2750 = vpop.f32.mrf.mxu0
    %v2751 = vadd.f32 %v2738, %v2750
    %v2752 = vpop.f32.mrf.mxu0
    %2753 = vdwg.mxu0
    %2754 = vmatpush.bf16.msra.mxu0 %v2203
    %2755 = vmatpush.bf16.msra.mxu0 %v2197
    %2756 = vmatpush.bf16.msra.mxu0 %v2191
    %2757 = vmatpush.bf16.msra.mxu0 %v2185
    %2758 = vmatpush.bf16.msra.mxu0 %v2179
    %2759 = vmatpush.bf16.msra.mxu0 %v2173
    %2760 = vmatpush.bf16.msra.mxu0 %v2167
    %2761 = vmatpush.bf16.msra.mxu0 %v2161
    %2762 = vmatmul.bf16.gmra.mxu0 %v368
    %v2763 = vpop.f32.mrf.mxu0
    %v2764 = vadd.f32 %v2751, %v2763
    %v2765 = vpop.f32.mrf.mxu0
    %2766 = vdwg.mxu0
    %2767 = vmatpush.bf16.msra.mxu0 %v2251
    %2768 = vmatpush.bf16.msra.mxu0 %v2245
    %2769 = vmatpush.bf16.msra.mxu0 %v2239
    %2770 = vmatpush.bf16.msra.mxu0 %v2233
    %2771 = vmatpush.bf16.msra.mxu0 %v2227
    %2772 = vmatpush.bf16.msra.mxu0 %v2221
    %2773 = vmatpush.bf16.msra.mxu0 %v2215
    %2774 = vmatpush.bf16.msra.mxu0 %v2209
    %2775 = vmatmul.bf16.gmra.mxu0 %v369
    %v2776 = vpop.f32.mrf.mxu0
    %v2777 = vadd.f32 %v2764, %v2776
    %v2778 = vpop.f32.mrf.mxu0
    %2779 = vdwg.mxu0
    %2780 = vmatpush.bf16.msra.mxu0 %v2299
    %2781 = vmatpush.bf16.msra.mxu0 %v2293
    %2782 = vmatpush.bf16.msra.mxu0 %v2287
    %2783 = vmatpush.bf16.msra.mxu0 %v2281
    %2784 = vmatpush.bf16.msra.mxu0 %v2275
    %2785 = vmatpush.bf16.msra.mxu0 %v2269
    %2786 = vmatpush.bf16.msra.mxu0 %v2263
    %2787 = vmatpush.bf16.msra.mxu0 %v2257
    %2788 = vmatmul.bf16.gmra.mxu0 %v370
    %v2789 = vpop.f32.mrf.mxu0
    %v2790 = vadd.f32 %v2777, %v2789
    %v2791 = vpop.f32.mrf.mxu0
    %2792 = vdwg.mxu0
    %2793 = vmatpush.bf16.msra.mxu0 %v1964
    %2794 = vmatpush.bf16.msra.mxu0 %v1958
    %2795 = vmatpush.bf16.msra.mxu0 %v1952
    %2796 = vmatpush.bf16.msra.mxu0 %v1946
    %2797 = vmatpush.bf16.msra.mxu0 %v1940
    %2798 = vmatpush.bf16.msra.mxu0 %v1934
    %2799 = vmatpush.bf16.msra.mxu0 %v1928
    %2800 = vmatpush.bf16.msra.mxu0 %v1922
    %2801 = vmatmul.bf16.gmra.mxu0 %v363
    %v2802 = vpop.f32.mrf.mxu0
    %v2803 = vadd.f32 %v758, %v2802
    %v2804 = vpop.f32.mrf.mxu0
    %2805 = vdwg.mxu0
    %2806 = vmatpush.bf16.msra.mxu0 %v2012
    %2807 = vmatpush.bf16.msra.mxu0 %v2006
    %2808 = vmatpush.bf16.msra.mxu0 %v2000
    %2809 = vmatpush.bf16.msra.mxu0 %v1994
    %2810 = vmatpush.bf16.msra.mxu0 %v1988
    %2811 = vmatpush.bf16.msra.mxu0 %v1982
    %2812 = vmatpush.bf16.msra.mxu0 %v1976
    %2813 = vmatpush.bf16.msra.mxu0 %v1970
    %2814 = vmatmul.bf16.gmra.mxu0 %v364
    %v2815 = vpop.f32.mrf.mxu0
    %v2816 = vadd.f32 %v2803, %v2815
    %v2817 = vpop.f32.mrf.mxu0
    %2818 = vdwg.mxu0
    %2819 = vmatpush.bf16.msra.mxu0 %v2060
    %2820 = vmatpush.bf16.msra.mxu0 %v2054
    %2821 = vmatpush.bf16.msra.mxu0 %v2048
    %2822 = vmatpush.bf16.msra.mxu0 %v2042
    %2823 = vmatpush.bf16.msra.mxu0 %v2036
    %2824 = vmatpush.bf16.msra.mxu0 %v2030
    %2825 = vmatpush.bf16.msra.mxu0 %v2024
    %2826 = vmatpush.bf16.msra.mxu0 %v2018
    %2827 = vmatmul.bf16.gmra.mxu0 %v365
    %v2828 = vpop.f32.mrf.mxu0
    %v2829 = vadd.f32 %v2816, %v2828
    %v2830 = vpop.f32.mrf.mxu0
    %2831 = vdwg.mxu0
    %2832 = vmatpush.bf16.msra.mxu0 %v2108
    %2833 = vmatpush.bf16.msra.mxu0 %v2102
    %2834 = vmatpush.bf16.msra.mxu0 %v2096
    %2835 = vmatpush.bf16.msra.mxu0 %v2090
    %2836 = vmatpush.bf16.msra.mxu0 %v2084
    %2837 = vmatpush.bf16.msra.mxu0 %v2078
    %2838 = vmatpush.bf16.msra.mxu0 %v2072
    %2839 = vmatpush.bf16.msra.mxu0 %v2066
    %2840 = vmatmul.bf16.gmra.mxu0 %v366
    %v2841 = vpop.f32.mrf.mxu0
    %v2842 = vadd.f32 %v2829, %v2841
    %v2843 = vpop.f32.mrf.mxu0
    %2844 = vdwg.mxu0
    %2845 = vmatpush.bf16.msra.mxu0 %v2156
    %2846 = vmatpush.bf16.msra.mxu0 %v2150
    %2847 = vmatpush.bf16.msra.mxu0 %v2144
    %2848 = vmatpush.bf16.msra.mxu0 %v2138
    %2849 = vmatpush.bf16.msra.mxu0 %v2132
    %2850 = vmatpush.bf16.msra.mxu0 %v2126
    %2851 = vmatpush.bf16.msra.mxu0 %v2120
    %2852 = vmatpush.bf16.msra.mxu0 %v2114
    %2853 = vmatmul.bf16.gmra.mxu0 %v367
    %v2854 = vpop.f32.mrf.mxu0
    %v2855 = vadd.f32 %v2842, %v2854
    %v2856 = vpop.f32.mrf.mxu0
    %2857 = vdwg.mxu0
    %2858 = vmatpush.bf16.msra.mxu0 %v2204
    %2859 = vmatpush.bf16.msra.mxu0 %v2198
    %2860 = vmatpush.bf16.msra.mxu0 %v2192
    %2861 = vmatpush.bf16.msra.mxu0 %v2186
    %2862 = vmatpush.bf16.msra.mxu0 %v2180
    %2863 = vmatpush.bf16.msra.mxu0 %v2174
    %2864 = vmatpush.bf16.msra.mxu0 %v2168
    %2865 = vmatpush.bf16.msra.mxu0 %v2162
    %2866 = vmatmul.bf16.gmra.mxu0 %v368
    %v2867 = vpop.f32.mrf.mxu0
    %v2868 = vadd.f32 %v2855, %v2867
    %v2869 = vpop.f32.mrf.mxu0
    %2870 = vdwg.mxu0
    %2871 = vmatpush.bf16.msra.mxu0 %v2252
    %2872 = vmatpush.bf16.msra.mxu0 %v2246
    %2873 = vmatpush.bf16.msra.mxu0 %v2240
    %2874 = vmatpush.bf16.msra.mxu0 %v2234
    %2875 = vmatpush.bf16.msra.mxu0 %v2228
    %2876 = vmatpush.bf16.msra.mxu0 %v2222
    %2877 = vmatpush.bf16.msra.mxu0 %v2216
    %2878 = vmatpush.bf16.msra.mxu0 %v2210
    %2879 = vmatmul.bf16.gmra.mxu0 %v369
    %v2880 = vpop.f32.mrf.mxu0
    %v2881 = vadd.f32 %v2868, %v2880
    %v2882 = vpop.f32.mrf.mxu0
    %2883 = vdwg.mxu0
    %2884 = vmatpush.bf16.msra.mxu0 %v2300
    %2885 = vmatpush.bf16.msra.mxu0 %v2294
    %2886 = vmatpush.bf16.msra.mxu0 %v2288
    %2887 = vmatpush.bf16.msra.mxu0 %v2282
    %2888 = vmatpush.bf16.msra.mxu0 %v2276
    %2889 = vmatpush.bf16.msra.mxu0 %v2270
    %2890 = vmatpush.bf16.msra.mxu0 %v2264
    %2891 = vmatpush.bf16.msra.mxu0 %v2258
    %2892 = vmatmul.bf16.gmra.mxu0 %v370
    %v2893 = vpop.f32.mrf.mxu0
    %v2894 = vadd.f32 %v2881, %v2893
    %v2895 = vpop.f32.mrf.mxu0
    %2896 = vdwg.mxu0
    %2897 = vmatpush.bf16.msra.mxu0 %v1965
    %2898 = vmatpush.bf16.msra.mxu0 %v1959
    %2899 = vmatpush.bf16.msra.mxu0 %v1953
    %2900 = vmatpush.bf16.msra.mxu0 %v1947
    %2901 = vmatpush.bf16.msra.mxu0 %v1941
    %2902 = vmatpush.bf16.msra.mxu0 %v1935
    %2903 = vmatpush.bf16.msra.mxu0 %v1929
    %2904 = vmatpush.bf16.msra.mxu0 %v1923
    %2905 = vmatmul.bf16.gmra.mxu0 %v363
    %v2906 = vpop.f32.mrf.mxu0
    %v2907 = vadd.f32 %v759, %v2906
    %v2908 = vpop.f32.mrf.mxu0
    %2909 = vdwg.mxu0
    %2910 = vmatpush.bf16.msra.mxu0 %v2013
    %2911 = vmatpush.bf16.msra.mxu0 %v2007
    %2912 = vmatpush.bf16.msra.mxu0 %v2001
    %2913 = vmatpush.bf16.msra.mxu0 %v1995
    %2914 = vmatpush.bf16.msra.mxu0 %v1989
    %2915 = vmatpush.bf16.msra.mxu0 %v1983
    %2916 = vmatpush.bf16.msra.mxu0 %v1977
    %2917 = vmatpush.bf16.msra.mxu0 %v1971
    %2918 = vmatmul.bf16.gmra.mxu0 %v364
    %v2919 = vpop.f32.mrf.mxu0
    %v2920 = vadd.f32 %v2907, %v2919
    %v2921 = vpop.f32.mrf.mxu0
    %2922 = vdwg.mxu0
    %2923 = vmatpush.bf16.msra.mxu0 %v2061
    %2924 = vmatpush.bf16.msra.mxu0 %v2055
    %2925 = vmatpush.bf16.msra.mxu0 %v2049
    %2926 = vmatpush.bf16.msra.mxu0 %v2043
    %2927 = vmatpush.bf16.msra.mxu0 %v2037
    %2928 = vmatpush.bf16.msra.mxu0 %v2031
    %2929 = vmatpush.bf16.msra.mxu0 %v2025
    %2930 = vmatpush.bf16.msra.mxu0 %v2019
    %2931 = vmatmul.bf16.gmra.mxu0 %v365
    %v2932 = vpop.f32.mrf.mxu0
    %v2933 = vadd.f32 %v2920, %v2932
    %v2934 = vpop.f32.mrf.mxu0
    %2935 = vdwg.mxu0
    %2936 = vmatpush.bf16.msra.mxu0 %v2109
    %2937 = vmatpush.bf16.msra.mxu0 %v2103
    %2938 = vmatpush.bf16.msra.mxu0 %v2097
    %2939 = vmatpush.bf16.msra.mxu0 %v2091
    %2940 = vmatpush.bf16.msra.mxu0 %v2085
    %2941 = vmatpush.bf16.msra.mxu0 %v2079
    %2942 = vmatpush.bf16.msra.mxu0 %v2073
    %2943 = vmatpush.bf16.msra.mxu0 %v2067
    %2944 = vmatmul.bf16.gmra.mxu0 %v366
    %v2945 = vpop.f32.mrf.mxu0
    %v2946 = vadd.f32 %v2933, %v2945
    %v2947 = vpop.f32.mrf.mxu0
    %2948 = vdwg.mxu0
    %2949 = vmatpush.bf16.msra.mxu0 %v2157
    %2950 = vmatpush.bf16.msra.mxu0 %v2151
    %2951 = vmatpush.bf16.msra.mxu0 %v2145
    %2952 = vmatpush.bf16.msra.mxu0 %v2139
    %2953 = vmatpush.bf16.msra.mxu0 %v2133
    %2954 = vmatpush.bf16.msra.mxu0 %v2127
    %2955 = vmatpush.bf16.msra.mxu0 %v2121
    %2956 = vmatpush.bf16.msra.mxu0 %v2115
    %2957 = vmatmul.bf16.gmra.mxu0 %v367
    %v2958 = vpop.f32.mrf.mxu0
    %v2959 = vadd.f32 %v2946, %v2958
    %v2960 = vpop.f32.mrf.mxu0
    %2961 = vdwg.mxu0
    %2962 = vmatpush.bf16.msra.mxu0 %v2205
    %2963 = vmatpush.bf16.msra.mxu0 %v2199
    %2964 = vmatpush.bf16.msra.mxu0 %v2193
    %2965 = vmatpush.bf16.msra.mxu0 %v2187
    %2966 = vmatpush.bf16.msra.mxu0 %v2181
    %2967 = vmatpush.bf16.msra.mxu0 %v2175
    %2968 = vmatpush.bf16.msra.mxu0 %v2169
    %2969 = vmatpush.bf16.msra.mxu0 %v2163
    %2970 = vmatmul.bf16.gmra.mxu0 %v368
    %v2971 = vpop.f32.mrf.mxu0
    %v2972 = vadd.f32 %v2959, %v2971
    %v2973 = vpop.f32.mrf.mxu0
    %2974 = vdwg.mxu0
    %2975 = vmatpush.bf16.msra.mxu0 %v2253
    %2976 = vmatpush.bf16.msra.mxu0 %v2247
    %2977 = vmatpush.bf16.msra.mxu0 %v2241
    %2978 = vmatpush.bf16.msra.mxu0 %v2235
    %2979 = vmatpush.bf16.msra.mxu0 %v2229
    %2980 = vmatpush.bf16.msra.mxu0 %v2223
    %2981 = vmatpush.bf16.msra.mxu0 %v2217
    %2982 = vmatpush.bf16.msra.mxu0 %v2211
    %2983 = vmatmul.bf16.gmra.mxu0 %v369
    %v2984 = vpop.f32.mrf.mxu0
    %v2985 = vadd.f32 %v2972, %v2984
    %v2986 = vpop.f32.mrf.mxu0
    %2987 = vdwg.mxu0
    %2988 = vmatpush.bf16.msra.mxu0 %v2301
    %2989 = vmatpush.bf16.msra.mxu0 %v2295
    %2990 = vmatpush.bf16.msra.mxu0 %v2289
    %2991 = vmatpush.bf16.msra.mxu0 %v2283
    %2992 = vmatpush.bf16.msra.mxu0 %v2277
    %2993 = vmatpush.bf16.msra.mxu0 %v2271
    %2994 = vmatpush.bf16.msra.mxu0 %v2265
    %2995 = vmatpush.bf16.msra.mxu0 %v2259
    %2996 = vmatmul.bf16.gmra.mxu0 %v370
    %v2997 = vpop.f32.mrf.mxu0
    %v2998 = vadd.f32 %v2985, %v2997
    %v2999 = vpop.f32.mrf.mxu0
    %3000 = vdwg.mxu0
    %3001 = vmatpush.bf16.msra.mxu0 %v1966
    %3002 = vmatpush.bf16.msra.mxu0 %v1960
    %3003 = vmatpush.bf16.msra.mxu0 %v1954
    %3004 = vmatpush.bf16.msra.mxu0 %v1948
    %3005 = vmatpush.bf16.msra.mxu0 %v1942
    %3006 = vmatpush.bf16.msra.mxu0 %v1936
    %3007 = vmatpush.bf16.msra.mxu0 %v1930
    %3008 = vmatpush.bf16.msra.mxu0 %v1924
    %3009 = vmatmul.bf16.gmra.mxu0 %v363
    %v3010 = vpop.f32.mrf.mxu0
    %v3011 = vadd.f32 %v760, %v3010
    %v3012 = vpop.f32.mrf.mxu0
    %3013 = vdwg.mxu0
    %3014 = vmatpush.bf16.msra.mxu0 %v2014
    %3015 = vmatpush.bf16.msra.mxu0 %v2008
    %3016 = vmatpush.bf16.msra.mxu0 %v2002
    %3017 = vmatpush.bf16.msra.mxu0 %v1996
    %3018 = vmatpush.bf16.msra.mxu0 %v1990
    %3019 = vmatpush.bf16.msra.mxu0 %v1984
    %3020 = vmatpush.bf16.msra.mxu0 %v1978
    %3021 = vmatpush.bf16.msra.mxu0 %v1972
    %3022 = vmatmul.bf16.gmra.mxu0 %v364
    %v3023 = vpop.f32.mrf.mxu0
    %v3024 = vadd.f32 %v3011, %v3023
    %v3025 = vpop.f32.mrf.mxu0
    %3026 = vdwg.mxu0
    %3027 = vmatpush.bf16.msra.mxu0 %v2062
    %3028 = vmatpush.bf16.msra.mxu0 %v2056
    %3029 = vmatpush.bf16.msra.mxu0 %v2050
    %3030 = vmatpush.bf16.msra.mxu0 %v2044
    %3031 = vmatpush.bf16.msra.mxu0 %v2038
    %3032 = vmatpush.bf16.msra.mxu0 %v2032
    %3033 = vmatpush.bf16.msra.mxu0 %v2026
    %3034 = vmatpush.bf16.msra.mxu0 %v2020
    %3035 = vmatmul.bf16.gmra.mxu0 %v365
    %v3036 = vpop.f32.mrf.mxu0
    %v3037 = vadd.f32 %v3024, %v3036
    %v3038 = vpop.f32.mrf.mxu0
    %3039 = vdwg.mxu0
    %3040 = vmatpush.bf16.msra.mxu0 %v2110
    %3041 = vmatpush.bf16.msra.mxu0 %v2104
    %3042 = vmatpush.bf16.msra.mxu0 %v2098
    %3043 = vmatpush.bf16.msra.mxu0 %v2092
    %3044 = vmatpush.bf16.msra.mxu0 %v2086
    %3045 = vmatpush.bf16.msra.mxu0 %v2080
    %3046 = vmatpush.bf16.msra.mxu0 %v2074
    %3047 = vmatpush.bf16.msra.mxu0 %v2068
    %3048 = vmatmul.bf16.gmra.mxu0 %v366
    %v3049 = vpop.f32.mrf.mxu0
    %v3050 = vadd.f32 %v3037, %v3049
    %v3051 = vpop.f32.mrf.mxu0
    %3052 = vdwg.mxu0
    %3053 = vmatpush.bf16.msra.mxu0 %v2158
    %3054 = vmatpush.bf16.msra.mxu0 %v2152
    %3055 = vmatpush.bf16.msra.mxu0 %v2146
    %3056 = vmatpush.bf16.msra.mxu0 %v2140
    %3057 = vmatpush.bf16.msra.mxu0 %v2134
    %3058 = vmatpush.bf16.msra.mxu0 %v2128
    %3059 = vmatpush.bf16.msra.mxu0 %v2122
    %3060 = vmatpush.bf16.msra.mxu0 %v2116
    %3061 = vmatmul.bf16.gmra.mxu0 %v367
    %v3062 = vpop.f32.mrf.mxu0
    %v3063 = vadd.f32 %v3050, %v3062
    %v3064 = vpop.f32.mrf.mxu0
    %3065 = vdwg.mxu0
    %3066 = vmatpush.bf16.msra.mxu0 %v2206
    %3067 = vmatpush.bf16.msra.mxu0 %v2200
    %3068 = vmatpush.bf16.msra.mxu0 %v2194
    %3069 = vmatpush.bf16.msra.mxu0 %v2188
    %3070 = vmatpush.bf16.msra.mxu0 %v2182
    %3071 = vmatpush.bf16.msra.mxu0 %v2176
    %3072 = vmatpush.bf16.msra.mxu0 %v2170
    %3073 = vmatpush.bf16.msra.mxu0 %v2164
    %3074 = vmatmul.bf16.gmra.mxu0 %v368
    %v3075 = vpop.f32.mrf.mxu0
    %v3076 = vadd.f32 %v3063, %v3075
    %v3077 = vpop.f32.mrf.mxu0
    %3078 = vdwg.mxu0
    %3079 = vmatpush.bf16.msra.mxu0 %v2254
    %3080 = vmatpush.bf16.msra.mxu0 %v2248
    %3081 = vmatpush.bf16.msra.mxu0 %v2242
    %3082 = vmatpush.bf16.msra.mxu0 %v2236
    %3083 = vmatpush.bf16.msra.mxu0 %v2230
    %3084 = vmatpush.bf16.msra.mxu0 %v2224
    %3085 = vmatpush.bf16.msra.mxu0 %v2218
    %3086 = vmatpush.bf16.msra.mxu0 %v2212
    %3087 = vmatmul.bf16.gmra.mxu0 %v369
    %v3088 = vpop.f32.mrf.mxu0
    %v3089 = vadd.f32 %v3076, %v3088
    %v3090 = vpop.f32.mrf.mxu0
    %3091 = vdwg.mxu0
    %3092 = vmatpush.bf16.msra.mxu0 %v2302
    %3093 = vmatpush.bf16.msra.mxu0 %v2296
    %3094 = vmatpush.bf16.msra.mxu0 %v2290
    %3095 = vmatpush.bf16.msra.mxu0 %v2284
    %3096 = vmatpush.bf16.msra.mxu0 %v2278
    %3097 = vmatpush.bf16.msra.mxu0 %v2272
    %3098 = vmatpush.bf16.msra.mxu0 %v2266
    %3099 = vmatpush.bf16.msra.mxu0 %v2260
    %3100 = vmatmul.bf16.gmra.mxu0 %v370
    %v3101 = vpop.f32.mrf.mxu0
    %v3102 = vadd.f32 %v3089, %v3101
    %v3103 = vpop.f32.mrf.mxu0
    %3104 = vdwg.mxu0
    %3105 = vmatpush.bf16.msra.mxu0 %v1967
    %3106 = vmatpush.bf16.msra.mxu0 %v1961
    %3107 = vmatpush.bf16.msra.mxu0 %v1955
    %3108 = vmatpush.bf16.msra.mxu0 %v1949
    %3109 = vmatpush.bf16.msra.mxu0 %v1943
    %3110 = vmatpush.bf16.msra.mxu0 %v1937
    %3111 = vmatpush.bf16.msra.mxu0 %v1931
    %3112 = vmatpush.bf16.msra.mxu0 %v1925
    %3113 = vmatmul.bf16.gmra.mxu0 %v363
    %v3114 = vpop.f32.mrf.mxu0
    %v3115 = vadd.f32 %v761, %v3114
    %v3116 = vpop.f32.mrf.mxu0
    %3117 = vdwg.mxu0
    %3118 = vmatpush.bf16.msra.mxu0 %v2015
    %3119 = vmatpush.bf16.msra.mxu0 %v2009
    %3120 = vmatpush.bf16.msra.mxu0 %v2003
    %3121 = vmatpush.bf16.msra.mxu0 %v1997
    %3122 = vmatpush.bf16.msra.mxu0 %v1991
    %3123 = vmatpush.bf16.msra.mxu0 %v1985
    %3124 = vmatpush.bf16.msra.mxu0 %v1979
    %3125 = vmatpush.bf16.msra.mxu0 %v1973
    %3126 = vmatmul.bf16.gmra.mxu0 %v364
    %v3127 = vpop.f32.mrf.mxu0
    %v3128 = vadd.f32 %v3115, %v3127
    %v3129 = vpop.f32.mrf.mxu0
    %3130 = vdwg.mxu0
    %3131 = vmatpush.bf16.msra.mxu0 %v2063
    %3132 = vmatpush.bf16.msra.mxu0 %v2057
    %3133 = vmatpush.bf16.msra.mxu0 %v2051
    %3134 = vmatpush.bf16.msra.mxu0 %v2045
    %3135 = vmatpush.bf16.msra.mxu0 %v2039
    %3136 = vmatpush.bf16.msra.mxu0 %v2033
    %3137 = vmatpush.bf16.msra.mxu0 %v2027
    %3138 = vmatpush.bf16.msra.mxu0 %v2021
    %3139 = vmatmul.bf16.gmra.mxu0 %v365
    %v3140 = vpop.f32.mrf.mxu0
    %v3141 = vadd.f32 %v3128, %v3140
    %v3142 = vpop.f32.mrf.mxu0
    %3143 = vdwg.mxu0
    %3144 = vmatpush.bf16.msra.mxu0 %v2111
    %3145 = vmatpush.bf16.msra.mxu0 %v2105
    %3146 = vmatpush.bf16.msra.mxu0 %v2099
    %3147 = vmatpush.bf16.msra.mxu0 %v2093
    %3148 = vmatpush.bf16.msra.mxu0 %v2087
    %3149 = vmatpush.bf16.msra.mxu0 %v2081
    %3150 = vmatpush.bf16.msra.mxu0 %v2075
    %3151 = vmatpush.bf16.msra.mxu0 %v2069
    %3152 = vmatmul.bf16.gmra.mxu0 %v366
    %v3153 = vpop.f32.mrf.mxu0
    %v3154 = vadd.f32 %v3141, %v3153
    %v3155 = vpop.f32.mrf.mxu0
    %3156 = vdwg.mxu0
    %3157 = vmatpush.bf16.msra.mxu0 %v2159
    %3158 = vmatpush.bf16.msra.mxu0 %v2153
    %3159 = vmatpush.bf16.msra.mxu0 %v2147
    %3160 = vmatpush.bf16.msra.mxu0 %v2141
    %3161 = vmatpush.bf16.msra.mxu0 %v2135
    %3162 = vmatpush.bf16.msra.mxu0 %v2129
    %3163 = vmatpush.bf16.msra.mxu0 %v2123
    %3164 = vmatpush.bf16.msra.mxu0 %v2117
    %3165 = vmatmul.bf16.gmra.mxu0 %v367
    %v3166 = vpop.f32.mrf.mxu0
    %v3167 = vadd.f32 %v3154, %v3166
    %v3168 = vpop.f32.mrf.mxu0
    %3169 = vdwg.mxu0
    %3170 = vmatpush.bf16.msra.mxu0 %v2207
    %3171 = vmatpush.bf16.msra.mxu0 %v2201
    %3172 = vmatpush.bf16.msra.mxu0 %v2195
    %3173 = vmatpush.bf16.msra.mxu0 %v2189
    %3174 = vmatpush.bf16.msra.mxu0 %v2183
    %3175 = vmatpush.bf16.msra.mxu0 %v2177
    %3176 = vmatpush.bf16.msra.mxu0 %v2171
    %3177 = vmatpush.bf16.msra.mxu0 %v2165
    %3178 = vmatmul.bf16.gmra.mxu0 %v368
    %v3179 = vpop.f32.mrf.mxu0
    %v3180 = vadd.f32 %v3167, %v3179
    %v3181 = vpop.f32.mrf.mxu0
    %3182 = vdwg.mxu0
    %3183 = vmatpush.bf16.msra.mxu0 %v2255
    %3184 = vmatpush.bf16.msra.mxu0 %v2249
    %3185 = vmatpush.bf16.msra.mxu0 %v2243
    %3186 = vmatpush.bf16.msra.mxu0 %v2237
    %3187 = vmatpush.bf16.msra.mxu0 %v2231
    %3188 = vmatpush.bf16.msra.mxu0 %v2225
    %3189 = vmatpush.bf16.msra.mxu0 %v2219
    %3190 = vmatpush.bf16.msra.mxu0 %v2213
    %3191 = vmatmul.bf16.gmra.mxu0 %v369
    %v3192 = vpop.f32.mrf.mxu0
    %v3193 = vadd.f32 %v3180, %v3192
    %v3194 = vpop.f32.mrf.mxu0
    %3195 = vdwg.mxu0
    %3196 = vmatpush.bf16.msra.mxu0 %v2303
    %3197 = vmatpush.bf16.msra.mxu0 %v2297
    %3198 = vmatpush.bf16.msra.mxu0 %v2291
    %3199 = vmatpush.bf16.msra.mxu0 %v2285
    %3200 = vmatpush.bf16.msra.mxu0 %v2279
    %3201 = vmatpush.bf16.msra.mxu0 %v2273
    %3202 = vmatpush.bf16.msra.mxu0 %v2267
    %3203 = vmatpush.bf16.msra.mxu0 %v2261
    %3204 = vmatmul.bf16.gmra.mxu0 %v370
    %v3205 = vpop.f32.mrf.mxu0
    %v3206 = vadd.f32 %v3193, %v3205
    %v3207 = vpop.f32.mrf.mxu0
    %3208 = vdwg.mxu0
    %3209 = vmatpush.bf16.msra.mxu0 %v1968
    %3210 = vmatpush.bf16.msra.mxu0 %v1962
    %3211 = vmatpush.bf16.msra.mxu0 %v1956
    %3212 = vmatpush.bf16.msra.mxu0 %v1950
    %3213 = vmatpush.bf16.msra.mxu0 %v1944
    %3214 = vmatpush.bf16.msra.mxu0 %v1938
    %3215 = vmatpush.bf16.msra.mxu0 %v1932
    %3216 = vmatpush.bf16.msra.mxu0 %v1926
    %3217 = vmatmul.bf16.gmra.mxu0 %v363
    %v3218 = vpop.f32.mrf.mxu0
    %v3219 = vadd.f32 %v762, %v3218
    %v3220 = vpop.f32.mrf.mxu0
    %3221 = vdwg.mxu0
    %3222 = vmatpush.bf16.msra.mxu0 %v2016
    %3223 = vmatpush.bf16.msra.mxu0 %v2010
    %3224 = vmatpush.bf16.msra.mxu0 %v2004
    %3225 = vmatpush.bf16.msra.mxu0 %v1998
    %3226 = vmatpush.bf16.msra.mxu0 %v1992
    %3227 = vmatpush.bf16.msra.mxu0 %v1986
    %3228 = vmatpush.bf16.msra.mxu0 %v1980
    %3229 = vmatpush.bf16.msra.mxu0 %v1974
    %3230 = vmatmul.bf16.gmra.mxu0 %v364
    %v3231 = vpop.f32.mrf.mxu0
    %v3232 = vadd.f32 %v3219, %v3231
    %v3233 = vpop.f32.mrf.mxu0
    %3234 = vdwg.mxu0
    %3235 = vmatpush.bf16.msra.mxu0 %v2064
    %3236 = vmatpush.bf16.msra.mxu0 %v2058
    %3237 = vmatpush.bf16.msra.mxu0 %v2052
    %3238 = vmatpush.bf16.msra.mxu0 %v2046
    %3239 = vmatpush.bf16.msra.mxu0 %v2040
    %3240 = vmatpush.bf16.msra.mxu0 %v2034
    %3241 = vmatpush.bf16.msra.mxu0 %v2028
    %3242 = vmatpush.bf16.msra.mxu0 %v2022
    %3243 = vmatmul.bf16.gmra.mxu0 %v365
    %v3244 = vpop.f32.mrf.mxu0
    %v3245 = vadd.f32 %v3232, %v3244
    %v3246 = vpop.f32.mrf.mxu0
    %3247 = vdwg.mxu0
    %3248 = vmatpush.bf16.msra.mxu0 %v2112
    %3249 = vmatpush.bf16.msra.mxu0 %v2106
    %3250 = vmatpush.bf16.msra.mxu0 %v2100
    %3251 = vmatpush.bf16.msra.mxu0 %v2094
    %3252 = vmatpush.bf16.msra.mxu0 %v2088
    %3253 = vmatpush.bf16.msra.mxu0 %v2082
    %3254 = vmatpush.bf16.msra.mxu0 %v2076
    %3255 = vmatpush.bf16.msra.mxu0 %v2070
    %3256 = vmatmul.bf16.gmra.mxu0 %v366
    %v3257 = vpop.f32.mrf.mxu0
    %v3258 = vadd.f32 %v3245, %v3257
    %v3259 = vpop.f32.mrf.mxu0
    %3260 = vdwg.mxu0
    %3261 = vmatpush.bf16.msra.mxu0 %v2160
    %3262 = vmatpush.bf16.msra.mxu0 %v2154
    %3263 = vmatpush.bf16.msra.mxu0 %v2148
    %3264 = vmatpush.bf16.msra.mxu0 %v2142
    %3265 = vmatpush.bf16.msra.mxu0 %v2136
    %3266 = vmatpush.bf16.msra.mxu0 %v2130
    %3267 = vmatpush.bf16.msra.mxu0 %v2124
    %3268 = vmatpush.bf16.msra.mxu0 %v2118
    %3269 = vmatmul.bf16.gmra.mxu0 %v367
    %v3270 = vpop.f32.mrf.mxu0
    %v3271 = vadd.f32 %v3258, %v3270
    %v3272 = vpop.f32.mrf.mxu0
    %3273 = vdwg.mxu0
    %3274 = vmatpush.bf16.msra.mxu0 %v2208
    %3275 = vmatpush.bf16.msra.mxu0 %v2202
    %3276 = vmatpush.bf16.msra.mxu0 %v2196
    %3277 = vmatpush.bf16.msra.mxu0 %v2190
    %3278 = vmatpush.bf16.msra.mxu0 %v2184
    %3279 = vmatpush.bf16.msra.mxu0 %v2178
    %3280 = vmatpush.bf16.msra.mxu0 %v2172
    %3281 = vmatpush.bf16.msra.mxu0 %v2166
    %3282 = vmatmul.bf16.gmra.mxu0 %v368
    %v3283 = vpop.f32.mrf.mxu0
    %v3284 = vadd.f32 %v3271, %v3283
    %v3285 = vpop.f32.mrf.mxu0
    %3286 = vdwg.mxu0
    %3287 = vmatpush.bf16.msra.mxu0 %v2256
    %3288 = vmatpush.bf16.msra.mxu0 %v2250
    %3289 = vmatpush.bf16.msra.mxu0 %v2244
    %3290 = vmatpush.bf16.msra.mxu0 %v2238
    %3291 = vmatpush.bf16.msra.mxu0 %v2232
    %3292 = vmatpush.bf16.msra.mxu0 %v2226
    %3293 = vmatpush.bf16.msra.mxu0 %v2220
    %3294 = vmatpush.bf16.msra.mxu0 %v2214
    %3295 = vmatmul.bf16.gmra.mxu0 %v369
    %v3296 = vpop.f32.mrf.mxu0
    %v3297 = vadd.f32 %v3284, %v3296
    %v3298 = vpop.f32.mrf.mxu0
    %3299 = vdwg.mxu0
    %3300 = vmatpush.bf16.msra.mxu0 %v2304
    %3301 = vmatpush.bf16.msra.mxu0 %v2298
    %3302 = vmatpush.bf16.msra.mxu0 %v2292
    %3303 = vmatpush.bf16.msra.mxu0 %v2286
    %3304 = vmatpush.bf16.msra.mxu0 %v2280
    %3305 = vmatpush.bf16.msra.mxu0 %v2274
    %3306 = vmatpush.bf16.msra.mxu0 %v2268
    %3307 = vmatpush.bf16.msra.mxu0 %v2262
    %3308 = vmatmul.bf16.gmra.mxu0 %v370
    %v3309 = vpop.f32.mrf.mxu0
    %v3310 = vadd.f32 %v3297, %v3309
    %v3311 = vpop.f32.mrf.mxu0
    %3312 = vdwg.mxu0
    %vm3313 = vcmp.gt.f32.partialorder %v2790, 0.0
    %vm3314 = vcmp.gt.f32.partialorder %v2894, 0.0
    %vm3315 = vcmp.gt.f32.partialorder %v2998, 0.0
    %vm3316 = vcmp.gt.f32.partialorder %v3102, 0.0
    %vm3317 = vcmp.gt.f32.partialorder %v3206, 0.0
    %vm3318 = vcmp.gt.f32.partialorder %v3310, 0.0
    %v3319 = vmul.f32 %v2790, 0.01
    %v3320 = vmul.f32 %v2894, 0.01
    %v3321 = vmul.f32 %v2998, 0.01
    %v3322 = vmul.f32 %v3102, 0.01
    %v3323 = vmul.f32 %v3206, 0.01
    %v3324 = vmul.f32 %v3310, 0.01
    %v3325 = vsel %vm3313, %v2790, %v3319
    %v3326 = vsel %vm3314, %v2894, %v3320
    %v3327 = vsel %vm3315, %v2998, %v3321
    %v3328 = vsel %vm3316, %v3102, %v3322
    %v3329 = vsel %vm3317, %v3206, %v3323
    %v3330 = vsel %vm3318, %v3310, %v3324
    %v3331 = vpack.c.bf16 %v3325, %v3325
    %v3332 = vpack.c.bf16 %v3326, %v3326
    %v3333 = vpack.c.bf16 %v3327, %v3327
    %v3334 = vpack.c.bf16 %v3328, %v3328
    %v3335 = vpack.c.bf16 %v3329, %v3329
    %v3336 = vpack.c.bf16 %v3330, %v3330
    %v3337 = vld [vmem:[#allocation11] sm:$0xff]
    %v3338 = vld [vmem:[#allocation11 + $0x8] sm:$0xf]
    %v3339 = vld [vmem:[#allocation11 + $0xc] sm:$0xff]
    %v3340 = vld [vmem:[#allocation11 + $0x14] sm:$0xf]
    %v3341 = vld [vmem:[#allocation11 + $0x18] sm:$0xff]
    %v3342 = vld [vmem:[#allocation11 + $0x20] sm:$0xf]
    %v3343 = vld [vmem:[#allocation11 + $0x24] sm:$0xff]
    %v3344 = vld [vmem:[#allocation11 + $0x2c] sm:$0xf]
    %v3345 = vld [vmem:[#allocation11 + $0x30] sm:$0xff]
    %v3346 = vld [vmem:[#allocation11 + $0x38] sm:$0xf]
    %v3347 = vld [vmem:[#allocation11 + $0x3c] sm:$0xff]
    %v3348 = vld [vmem:[#allocation11 + $0x44] sm:$0xf]
    %v3349 = vld [vmem:[#allocation11 + $0x48] sm:$0xff]
    %v3350 = vld [vmem:[#allocation11 + $0x50] sm:$0xf]
    %v3351 = vld [vmem:[#allocation11 + $0x54] sm:$0xff]
    %v3352 = vld [vmem:[#allocation11 + $0x5c] sm:$0xf]
    %v3353 = vld [vmem:[#allocation11 + $0x60] sm:$0xff]
    %v3354 = vld [vmem:[#allocation11 + $0x68] sm:$0xf]
    %v3355 = vld [vmem:[#allocation11 + $0x6c] sm:$0xff]
    %v3356 = vld [vmem:[#allocation11 + $0x74] sm:$0xf]
    %v3357 = vld [vmem:[#allocation11 + $0x78] sm:$0xff]
    %v3358 = vld [vmem:[#allocation11 + $0x80] sm:$0xf]
    %v3359 = vld [vmem:[#allocation11 + $0x84] sm:$0xff]
    %v3360 = vld [vmem:[#allocation11 + $0x8c] sm:$0xf]
    %v3361 = vld [vmem:[#allocation11 + $0x90] sm:$0xff]
    %v3362 = vld [vmem:[#allocation11 + $0x98] sm:$0xf]
    %v3363 = vld [vmem:[#allocation11 + $0x9c] sm:$0xff]
    %v3364 = vld [vmem:[#allocation11 + $0xa4] sm:$0xf]
    %v3365 = vld [vmem:[#allocation11 + $0xa8] sm:$0xff]
    %v3366 = vld [vmem:[#allocation11 + $0xb0] sm:$0xf]
    %v3367 = vld [vmem:[#allocation11 + $0xb4] sm:$0xff]
    %v3368 = vld [vmem:[#allocation11 + $0xbc] sm:$0xf]
    %v3369 = vld [vmem:[#allocation11 + $0xc0] sm:$0xff]
    %v3370 = vld [vmem:[#allocation11 + $0xc8] sm:$0xf]
    %v3371 = vld [vmem:[#allocation11 + $0xcc] sm:$0xff]
    %v3372 = vld [vmem:[#allocation11 + $0xd4] sm:$0xf]
    %v3373 = vld [vmem:[#allocation11 + $0xd8] sm:$0xff]
    %v3374 = vld [vmem:[#allocation11 + $0xe0] sm:$0xf]
    %v3375 = vld [vmem:[#allocation11 + $0xe4] sm:$0xff]
    %v3376 = vld [vmem:[#allocation11 + $0xec] sm:$0xf]
    %v3377 = vld [vmem:[#allocation11 + $0xf0] sm:$0xff]
    %v3378 = vld [vmem:[#allocation11 + $0xf8] sm:$0xf]
    %v3379 = vld [vmem:[#allocation11 + $0xfc] sm:$0xff]
    %v3380 = vld [vmem:[#allocation11 + $0x104] sm:$0xf]
    %v3381 = vld [vmem:[#allocation11 + $0x108] sm:$0xff]
    %v3382 = vld [vmem:[#allocation11 + $0x110] sm:$0xf]
    %v3383 = vld [vmem:[#allocation11 + $0x114] sm:$0xff]
    %v3384 = vld [vmem:[#allocation11 + $0x11c] sm:$0xf]
    %v3385 = vld [vmem:[#allocation11 + $0x120] sm:$0xff]
    %v3386 = vld [vmem:[#allocation11 + $0x128] sm:$0xf]
    %v3387 = vld [vmem:[#allocation11 + $0x12c] sm:$0xff]
    %v3388 = vld [vmem:[#allocation11 + $0x134] sm:$0xf]
    %v3389 = vld [vmem:[#allocation11 + $0x138] sm:$0xff]
    %v3390 = vld [vmem:[#allocation11 + $0x140] sm:$0xf]
    %v3391 = vld [vmem:[#allocation11 + $0x144] sm:$0xff]
    %v3392 = vld [vmem:[#allocation11 + $0x14c] sm:$0xf]
    %v3393 = vld [vmem:[#allocation11 + $0x150] sm:$0xff]
    %v3394 = vld [vmem:[#allocation11 + $0x158] sm:$0xf]
    %v3395 = vld [vmem:[#allocation11 + $0x15c] sm:$0xff]
    %v3396 = vld [vmem:[#allocation11 + $0x164] sm:$0xf]
    %v3397 = vld [vmem:[#allocation11 + $0x168] sm:$0xff]
    %v3398 = vld [vmem:[#allocation11 + $0x170] sm:$0xf]
    %v3399 = vld [vmem:[#allocation11 + $0x174] sm:$0xff]
    %v3400 = vld [vmem:[#allocation11 + $0x17c] sm:$0xf]
    %v3401 = vld [vmem:[#allocation11 + $0x180] sm:$0xff]
    %v3402 = vld [vmem:[#allocation11 + $0x188] sm:$0xf]
    %v3403 = vld [vmem:[#allocation11 + $0x18c] sm:$0xff]
    %v3404 = vld [vmem:[#allocation11 + $0x194] sm:$0xf]
    %v3405 = vld [vmem:[#allocation11 + $0x198] sm:$0xff]
    %v3406 = vld [vmem:[#allocation11 + $0x1a0] sm:$0xf]
    %v3407 = vld [vmem:[#allocation11 + $0x1a4] sm:$0xff]
    %v3408 = vld [vmem:[#allocation11 + $0x1ac] sm:$0xf]
    %v3409 = vld [vmem:[#allocation11 + $0x1b0] sm:$0xff]
    %v3410 = vld [vmem:[#allocation11 + $0x1b8] sm:$0xf]
    %v3411 = vld [vmem:[#allocation11 + $0x1bc] sm:$0xff]
    %v3412 = vld [vmem:[#allocation11 + $0x1c4] sm:$0xf]
    %v3413 = vld [vmem:[#allocation11 + $0x1c8] sm:$0xff]
    %v3414 = vld [vmem:[#allocation11 + $0x1d0] sm:$0xf]
    %v3415 = vld [vmem:[#allocation11 + $0x1d4] sm:$0xff]
    %v3416 = vld [vmem:[#allocation11 + $0x1dc] sm:$0xf]
    %v3417 = vld [vmem:[#allocation11 + $0x1e0] sm:$0xff]
    %v3418 = vld [vmem:[#allocation11 + $0x1e8] sm:$0xf]
    %v3419 = vld [vmem:[#allocation11 + $0x1ec] sm:$0xff]
    %v3420 = vld [vmem:[#allocation11 + $0x1f4] sm:$0xf]
    %v3421 = vld [vmem:[#allocation11 + $0x1f8] sm:$0xff]
    %v3422 = vld [vmem:[#allocation11 + $0x200] sm:$0xf]
    %v3423 = vld [vmem:[#allocation11 + $0x204] sm:$0xff]
    %v3424 = vld [vmem:[#allocation11 + $0x20c] sm:$0xf]
    %v3425 = vld [vmem:[#allocation11 + $0x210] sm:$0xff]
    %v3426 = vld [vmem:[#allocation11 + $0x218] sm:$0xf]
    %v3427 = vld [vmem:[#allocation11 + $0x21c] sm:$0xff]
    %v3428 = vld [vmem:[#allocation11 + $0x224] sm:$0xf]
    %v3429 = vld [vmem:[#allocation11 + $0x228] sm:$0xff]
    %v3430 = vld [vmem:[#allocation11 + $0x230] sm:$0xf]
    %v3431 = vld [vmem:[#allocation11 + $0x234] sm:$0xff]
    %v3432 = vld [vmem:[#allocation11 + $0x23c] sm:$0xf]
    %v3433 = vld [vmem:[#allocation11 + $0x240] sm:$0xff]
    %v3434 = vld [vmem:[#allocation11 + $0x248] sm:$0xf]
    %v3435 = vld [vmem:[#allocation11 + $0x24c] sm:$0xff]
    %v3436 = vld [vmem:[#allocation11 + $0x254] sm:$0xf]
    %v3437 = vld [vmem:[#allocation11 + $0x258] sm:$0xff]
    %v3438 = vld [vmem:[#allocation11 + $0x260] sm:$0xf]
    %v3439 = vld [vmem:[#allocation11 + $0x264] sm:$0xff]
    %v3440 = vld [vmem:[#allocation11 + $0x26c] sm:$0xf]
    %v3441 = vld [vmem:[#allocation11 + $0x270] sm:$0xff]
    %v3442 = vld [vmem:[#allocation11 + $0x278] sm:$0xf]
    %v3443 = vld [vmem:[#allocation11 + $0x27c] sm:$0xff]
    %v3444 = vld [vmem:[#allocation11 + $0x284] sm:$0xf]
    %v3445 = vld [vmem:[#allocation11 + $0x288] sm:$0xff]
    %v3446 = vld [vmem:[#allocation11 + $0x290] sm:$0xf]
    %v3447 = vld [vmem:[#allocation11 + $0x294] sm:$0xff]
    %v3448 = vld [vmem:[#allocation11 + $0x29c] sm:$0xf]
    %v3449 = vld [vmem:[#allocation11 + $0x2a0] sm:$0xff]
    %v3450 = vld [vmem:[#allocation11 + $0x2a8] sm:$0xf]
    %v3451 = vld [vmem:[#allocation11 + $0x2ac] sm:$0xff]
    %v3452 = vld [vmem:[#allocation11 + $0x2b4] sm:$0xf]
    %v3453 = vld [vmem:[#allocation11 + $0x2b8] sm:$0xff]
    %v3454 = vld [vmem:[#allocation11 + $0x2c0] sm:$0xf]
    %v3455 = vld [vmem:[#allocation11 + $0x2c4] sm:$0xff]
    %v3456 = vld [vmem:[#allocation11 + $0x2cc] sm:$0xf]
    %v3457 = vld [vmem:[#allocation11 + $0x2d0] sm:$0xff]
    %v3458 = vld [vmem:[#allocation11 + $0x2d8] sm:$0xf]
    %v3459 = vld [vmem:[#allocation11 + $0x2dc] sm:$0xff]
    %v3460 = vld [vmem:[#allocation11 + $0x2e4] sm:$0xf]
    %v3461 = vld [vmem:[#allocation11 + $0x2e8] sm:$0xff]
    %v3462 = vld [vmem:[#allocation11 + $0x2f0] sm:$0xf]
    %v3463 = vld [vmem:[#allocation11 + $0x2f4] sm:$0xff]
    %v3464 = vld [vmem:[#allocation11 + $0x2fc] sm:$0xf]
    %v3465 = vld [vmem:[#allocation11 + $0x300] sm:$0xff]
    %v3466 = vld [vmem:[#allocation11 + $0x308] sm:$0xf]
    %v3467 = vld [vmem:[#allocation11 + $0x30c] sm:$0xff]
    %v3468 = vld [vmem:[#allocation11 + $0x314] sm:$0xf]
    %v3469 = vld [vmem:[#allocation11 + $0x318] sm:$0xff]
    %v3470 = vld [vmem:[#allocation11 + $0x320] sm:$0xf]
    %v3471 = vld [vmem:[#allocation11 + $0x324] sm:$0xff]
    %v3472 = vld [vmem:[#allocation11 + $0x32c] sm:$0xf]
    %v3473 = vld [vmem:[#allocation11 + $0x330] sm:$0xff]
    %v3474 = vld [vmem:[#allocation11 + $0x338] sm:$0xf]
    %v3475 = vld [vmem:[#allocation11 + $0x33c] sm:$0xff]
    %v3476 = vld [vmem:[#allocation11 + $0x344] sm:$0xf]
    %v3477 = vld [vmem:[#allocation11 + $0x348] sm:$0xff]
    %v3478 = vld [vmem:[#allocation11 + $0x350] sm:$0xf]
    %v3479 = vld [vmem:[#allocation11 + $0x354] sm:$0xff]
    %v3480 = vld [vmem:[#allocation11 + $0x35c] sm:$0xf]
    %v3481 = vld [vmem:[#allocation11 + $0x360] sm:$0xff]
    %v3482 = vld [vmem:[#allocation11 + $0x368] sm:$0xf]
    %v3483 = vld [vmem:[#allocation11 + $0x36c] sm:$0xff]
    %v3484 = vld [vmem:[#allocation11 + $0x374] sm:$0xf]
    %v3485 = vld [vmem:[#allocation11 + $0x378] sm:$0xff]
    %v3486 = vld [vmem:[#allocation11 + $0x380] sm:$0xf]
    %v3487 = vld [vmem:[#allocation11 + $0x384] sm:$0xff]
    %v3488 = vld [vmem:[#allocation11 + $0x38c] sm:$0xf]
    %v3489 = vld [vmem:[#allocation11 + $0x390] sm:$0xff]
    %v3490 = vld [vmem:[#allocation11 + $0x398] sm:$0xf]
    %v3491 = vld [vmem:[#allocation11 + $0x39c] sm:$0xff]
    %v3492 = vld [vmem:[#allocation11 + $0x3a4] sm:$0xf]
    %v3493 = vld [vmem:[#allocation11 + $0x3a8] sm:$0xff]
    %v3494 = vld [vmem:[#allocation11 + $0x3b0] sm:$0xf]
    %v3495 = vld [vmem:[#allocation11 + $0x3b4] sm:$0xff]
    %v3496 = vld [vmem:[#allocation11 + $0x3bc] sm:$0xf]
    %v3497 = vld [vmem:[#allocation11 + $0x3c0] sm:$0xff]
    %v3498 = vld [vmem:[#allocation11 + $0x3c8] sm:$0xf]
    %v3499 = vld [vmem:[#allocation11 + $0x3cc] sm:$0xff]
    %v3500 = vld [vmem:[#allocation11 + $0x3d4] sm:$0xf]
    %v3501 = vld [vmem:[#allocation11 + $0x3d8] sm:$0xff]
    %v3502 = vld [vmem:[#allocation11 + $0x3e0] sm:$0xf]
    %v3503 = vld [vmem:[#allocation11 + $0x3e4] sm:$0xff]
    %v3504 = vld [vmem:[#allocation11 + $0x3ec] sm:$0xf]
    %v3505 = vld [vmem:[#allocation11 + $0x3f0] sm:$0xff]
    %v3506 = vld [vmem:[#allocation11 + $0x3f8] sm:$0xf]
    %v3507 = vld [vmem:[#allocation11 + $0x3fc] sm:$0xff]
    %v3508 = vld [vmem:[#allocation11 + $0x404] sm:$0xf]
    %v3509 = vld [vmem:[#allocation11 + $0x408] sm:$0xff]
    %v3510 = vld [vmem:[#allocation11 + $0x410] sm:$0xf]
    %v3511 = vld [vmem:[#allocation11 + $0x414] sm:$0xff]
    %v3512 = vld [vmem:[#allocation11 + $0x41c] sm:$0xf]
    %v3513 = vld [vmem:[#allocation11 + $0x420] sm:$0xff]
    %v3514 = vld [vmem:[#allocation11 + $0x428] sm:$0xf]
    %v3515 = vld [vmem:[#allocation11 + $0x42c] sm:$0xff]
    %v3516 = vld [vmem:[#allocation11 + $0x434] sm:$0xf]
    %v3517 = vld [vmem:[#allocation11 + $0x438] sm:$0xff]
    %v3518 = vld [vmem:[#allocation11 + $0x440] sm:$0xf]
    %v3519 = vld [vmem:[#allocation11 + $0x444] sm:$0xff]
    %v3520 = vld [vmem:[#allocation11 + $0x44c] sm:$0xf]
    %v3521 = vld [vmem:[#allocation11 + $0x450] sm:$0xff]
    %v3522 = vld [vmem:[#allocation11 + $0x458] sm:$0xf]
    %v3523 = vld [vmem:[#allocation11 + $0x45c] sm:$0xff]
    %v3524 = vld [vmem:[#allocation11 + $0x464] sm:$0xf]
    %v3525 = vld [vmem:[#allocation11 + $0x468] sm:$0xff]
    %v3526 = vld [vmem:[#allocation11 + $0x470] sm:$0xf]
    %v3527 = vld [vmem:[#allocation11 + $0x474] sm:$0xff]
    %v3528 = vld [vmem:[#allocation11 + $0x47c] sm:$0xf]
    %v3529 = vld [vmem:[#allocation13] sm:$0x7]
    %v3531 = vperm.slane %v3529, 0
    %v3532 = vperm.slane %v3529, 1
    %v3533 = vperm.slane %v3529, 2
    %v3729 = vunpack.c.l.b16 %v3337
    %v3730 = vunpack.c.h.b16 %v3337
    %v3731 = vunpack.c.l.b16 %v3338
    %v3732 = vunpack.c.l.b16 %v3339
    %v3733 = vunpack.c.h.b16 %v3339
    %v3734 = vunpack.c.l.b16 %v3340
    %v3735 = vunpack.c.l.b16 %v3341
    %v3736 = vunpack.c.h.b16 %v3341
    %v3737 = vunpack.c.l.b16 %v3342
    %v3738 = vunpack.c.l.b16 %v3343
    %v3739 = vunpack.c.h.b16 %v3343
    %v3740 = vunpack.c.l.b16 %v3344
    %v3741 = vunpack.c.l.b16 %v3345
    %v3742 = vunpack.c.h.b16 %v3345
    %v3743 = vunpack.c.l.b16 %v3346
    %v3744 = vunpack.c.l.b16 %v3347
    %v3745 = vunpack.c.h.b16 %v3347
    %v3746 = vunpack.c.l.b16 %v3348
    %v3747 = vunpack.c.l.b16 %v3349
    %v3748 = vunpack.c.h.b16 %v3349
    %v3749 = vunpack.c.l.b16 %v3350
    %v3750 = vunpack.c.l.b16 %v3351
    %v3751 = vunpack.c.h.b16 %v3351
    %v3752 = vunpack.c.l.b16 %v3352
    %v3753 = vunpack.c.l.b16 %v3353
    %v3754 = vunpack.c.h.b16 %v3353
    %v3755 = vunpack.c.l.b16 %v3354
    %v3756 = vunpack.c.l.b16 %v3355
    %v3757 = vunpack.c.h.b16 %v3355
    %v3758 = vunpack.c.l.b16 %v3356
    %v3759 = vunpack.c.l.b16 %v3357
    %v3760 = vunpack.c.h.b16 %v3357
    %v3761 = vunpack.c.l.b16 %v3358
    %v3762 = vunpack.c.l.b16 %v3359
    %v3763 = vunpack.c.h.b16 %v3359
    %v3764 = vunpack.c.l.b16 %v3360
    %v3765 = vunpack.c.l.b16 %v3361
    %v3766 = vunpack.c.h.b16 %v3361
    %v3767 = vunpack.c.l.b16 %v3362
    %v3768 = vunpack.c.l.b16 %v3363
    %v3769 = vunpack.c.h.b16 %v3363
    %v3770 = vunpack.c.l.b16 %v3364
    %v3771 = vunpack.c.l.b16 %v3365
    %v3772 = vunpack.c.h.b16 %v3365
    %v3773 = vunpack.c.l.b16 %v3366
    %v3774 = vunpack.c.l.b16 %v3367
    %v3775 = vunpack.c.h.b16 %v3367
    %v3776 = vunpack.c.l.b16 %v3368
    %v3777 = vunpack.c.l.b16 %v3369
    %v3778 = vunpack.c.h.b16 %v3369
    %v3779 = vunpack.c.l.b16 %v3370
    %v3780 = vunpack.c.l.b16 %v3371
    %v3781 = vunpack.c.h.b16 %v3371
    %v3782 = vunpack.c.l.b16 %v3372
    %v3783 = vunpack.c.l.b16 %v3373
    %v3784 = vunpack.c.h.b16 %v3373
    %v3785 = vunpack.c.l.b16 %v3374
    %v3786 = vunpack.c.l.b16 %v3375
    %v3787 = vunpack.c.h.b16 %v3375
    %v3788 = vunpack.c.l.b16 %v3376
    %v3789 = vunpack.c.l.b16 %v3377
    %v3790 = vunpack.c.h.b16 %v3377
    %v3791 = vunpack.c.l.b16 %v3378
    %v3792 = vunpack.c.l.b16 %v3379
    %v3793 = vunpack.c.h.b16 %v3379
    %v3794 = vunpack.c.l.b16 %v3380
    %v3795 = vunpack.c.l.b16 %v3381
    %v3796 = vunpack.c.h.b16 %v3381
    %v3797 = vunpack.c.l.b16 %v3382
    %v3798 = vunpack.c.l.b16 %v3383
    %v3799 = vunpack.c.h.b16 %v3383
    %v3800 = vunpack.c.l.b16 %v3384
    %v3801 = vunpack.c.l.b16 %v3385
    %v3802 = vunpack.c.h.b16 %v3385
    %v3803 = vunpack.c.l.b16 %v3386
    %v3804 = vunpack.c.l.b16 %v3387
    %v3805 = vunpack.c.h.b16 %v3387
    %v3806 = vunpack.c.l.b16 %v3388
    %v3807 = vunpack.c.l.b16 %v3389
    %v3808 = vunpack.c.h.b16 %v3389
    %v3809 = vunpack.c.l.b16 %v3390
    %v3810 = vunpack.c.l.b16 %v3391
    %v3811 = vunpack.c.h.b16 %v3391
    %v3812 = vunpack.c.l.b16 %v3392
    %v3813 = vunpack.c.l.b16 %v3393
    %v3814 = vunpack.c.h.b16 %v3393
    %v3815 = vunpack.c.l.b16 %v3394
    %v3816 = vunpack.c.l.b16 %v3395
    %v3817 = vunpack.c.h.b16 %v3395
    %v3818 = vunpack.c.l.b16 %v3396
    %v3819 = vunpack.c.l.b16 %v3397
    %v3820 = vunpack.c.h.b16 %v3397
    %v3821 = vunpack.c.l.b16 %v3398
    %v3822 = vunpack.c.l.b16 %v3399
    %v3823 = vunpack.c.h.b16 %v3399
    %v3824 = vunpack.c.l.b16 %v3400
    %v3825 = vunpack.c.l.b16 %v3401
    %v3826 = vunpack.c.h.b16 %v3401
    %v3827 = vunpack.c.l.b16 %v3402
    %v3828 = vunpack.c.l.b16 %v3403
    %v3829 = vunpack.c.h.b16 %v3403
    %v3830 = vunpack.c.l.b16 %v3404
    %v3831 = vunpack.c.l.b16 %v3405
    %v3832 = vunpack.c.h.b16 %v3405
    %v3833 = vunpack.c.l.b16 %v3406
    %v3834 = vunpack.c.l.b16 %v3407
    %v3835 = vunpack.c.h.b16 %v3407
    %v3836 = vunpack.c.l.b16 %v3408
    %v3837 = vunpack.c.l.b16 %v3409
    %v3838 = vunpack.c.h.b16 %v3409
    %v3839 = vunpack.c.l.b16 %v3410
    %v3840 = vunpack.c.l.b16 %v3411
    %v3841 = vunpack.c.h.b16 %v3411
    %v3842 = vunpack.c.l.b16 %v3412
    %v3843 = vunpack.c.l.b16 %v3413
    %v3844 = vunpack.c.h.b16 %v3413
    %v3845 = vunpack.c.l.b16 %v3414
    %v3846 = vunpack.c.l.b16 %v3415
    %v3847 = vunpack.c.h.b16 %v3415
    %v3848 = vunpack.c.l.b16 %v3416
    %v3849 = vunpack.c.l.b16 %v3417
    %v3850 = vunpack.c.h.b16 %v3417
    %v3851 = vunpack.c.l.b16 %v3418
    %v3852 = vunpack.c.l.b16 %v3419
    %v3853 = vunpack.c.h.b16 %v3419
    %v3854 = vunpack.c.l.b16 %v3420
    %v3855 = vunpack.c.l.b16 %v3421
    %v3856 = vunpack.c.h.b16 %v3421
    %v3857 = vunpack.c.l.b16 %v3422
    %v3858 = vunpack.c.l.b16 %v3423
    %v3859 = vunpack.c.h.b16 %v3423
    %v3860 = vunpack.c.l.b16 %v3424
    %v3861 = vunpack.c.l.b16 %v3425
    %v3862 = vunpack.c.h.b16 %v3425
    %v3863 = vunpack.c.l.b16 %v3426
    %v3864 = vunpack.c.l.b16 %v3427
    %v3865 = vunpack.c.h.b16 %v3427
    %v3866 = vunpack.c.l.b16 %v3428
    %v3867 = vunpack.c.l.b16 %v3429
    %v3868 = vunpack.c.h.b16 %v3429
    %v3869 = vunpack.c.l.b16 %v3430
    %v3870 = vunpack.c.l.b16 %v3431
    %v3871 = vunpack.c.h.b16 %v3431
    %v3872 = vunpack.c.l.b16 %v3432
    %v3873 = vunpack.c.l.b16 %v3433
    %v3874 = vunpack.c.h.b16 %v3433
    %v3875 = vunpack.c.l.b16 %v3434
    %v3876 = vunpack.c.l.b16 %v3435
    %v3877 = vunpack.c.h.b16 %v3435
    %v3878 = vunpack.c.l.b16 %v3436
    %v3879 = vunpack.c.l.b16 %v3437
    %v3880 = vunpack.c.h.b16 %v3437
    %v3881 = vunpack.c.l.b16 %v3438
    %v3882 = vunpack.c.l.b16 %v3439
    %v3883 = vunpack.c.h.b16 %v3439
    %v3884 = vunpack.c.l.b16 %v3440
    %v3885 = vunpack.c.l.b16 %v3441
    %v3886 = vunpack.c.h.b16 %v3441
    %v3887 = vunpack.c.l.b16 %v3442
    %v3888 = vunpack.c.l.b16 %v3443
    %v3889 = vunpack.c.h.b16 %v3443
    %v3890 = vunpack.c.l.b16 %v3444
    %v3891 = vunpack.c.l.b16 %v3445
    %v3892 = vunpack.c.h.b16 %v3445
    %v3893 = vunpack.c.l.b16 %v3446
    %v3894 = vunpack.c.l.b16 %v3447
    %v3895 = vunpack.c.h.b16 %v3447
    %v3896 = vunpack.c.l.b16 %v3448
    %v3897 = vunpack.c.l.b16 %v3449
    %v3898 = vunpack.c.h.b16 %v3449
    %v3899 = vunpack.c.l.b16 %v3450
    %v3900 = vunpack.c.l.b16 %v3451
    %v3901 = vunpack.c.h.b16 %v3451
    %v3902 = vunpack.c.l.b16 %v3452
    %v3903 = vunpack.c.l.b16 %v3453
    %v3904 = vunpack.c.h.b16 %v3453
    %v3905 = vunpack.c.l.b16 %v3454
    %v3906 = vunpack.c.l.b16 %v3455
    %v3907 = vunpack.c.h.b16 %v3455
    %v3908 = vunpack.c.l.b16 %v3456
    %v3909 = vunpack.c.l.b16 %v3457
    %v3910 = vunpack.c.h.b16 %v3457
    %v3911 = vunpack.c.l.b16 %v3458
    %v3912 = vunpack.c.l.b16 %v3459
    %v3913 = vunpack.c.h.b16 %v3459
    %v3914 = vunpack.c.l.b16 %v3460
    %v3915 = vunpack.c.l.b16 %v3461
    %v3916 = vunpack.c.h.b16 %v3461
    %v3917 = vunpack.c.l.b16 %v3462
    %v3918 = vunpack.c.l.b16 %v3463
    %v3919 = vunpack.c.h.b16 %v3463
    %v3920 = vunpack.c.l.b16 %v3464
    %v3921 = vunpack.c.l.b16 %v3465
    %v3922 = vunpack.c.h.b16 %v3465
    %v3923 = vunpack.c.l.b16 %v3466
    %v3924 = vunpack.c.l.b16 %v3467
    %v3925 = vunpack.c.h.b16 %v3467
    %v3926 = vunpack.c.l.b16 %v3468
    %v3927 = vunpack.c.l.b16 %v3469
    %v3928 = vunpack.c.h.b16 %v3469
    %v3929 = vunpack.c.l.b16 %v3470
    %v3930 = vunpack.c.l.b16 %v3471
    %v3931 = vunpack.c.h.b16 %v3471
    %v3932 = vunpack.c.l.b16 %v3472
    %v3933 = vunpack.c.l.b16 %v3473
    %v3934 = vunpack.c.h.b16 %v3473
    %v3935 = vunpack.c.l.b16 %v3474
    %v3936 = vunpack.c.l.b16 %v3475
    %v3937 = vunpack.c.h.b16 %v3475
    %v3938 = vunpack.c.l.b16 %v3476
    %v3939 = vunpack.c.l.b16 %v3477
    %v3940 = vunpack.c.h.b16 %v3477
    %v3941 = vunpack.c.l.b16 %v3478
    %v3942 = vunpack.c.l.b16 %v3479
    %v3943 = vunpack.c.h.b16 %v3479
    %v3944 = vunpack.c.l.b16 %v3480
    %v3945 = vunpack.c.l.b16 %v3481
    %v3946 = vunpack.c.h.b16 %v3481
    %v3947 = vunpack.c.l.b16 %v3482
    %v3948 = vunpack.c.l.b16 %v3483
    %v3949 = vunpack.c.h.b16 %v3483
    %v3950 = vunpack.c.l.b16 %v3484
    %v3951 = vunpack.c.l.b16 %v3485
    %v3952 = vunpack.c.h.b16 %v3485
    %v3953 = vunpack.c.l.b16 %v3486
    %v3954 = vunpack.c.l.b16 %v3487
    %v3955 = vunpack.c.h.b16 %v3487
    %v3956 = vunpack.c.l.b16 %v3488
    %v3957 = vunpack.c.l.b16 %v3489
    %v3958 = vunpack.c.h.b16 %v3489
    %v3959 = vunpack.c.l.b16 %v3490
    %v3960 = vunpack.c.l.b16 %v3491
    %v3961 = vunpack.c.h.b16 %v3491
    %v3962 = vunpack.c.l.b16 %v3492
    %v3963 = vunpack.c.l.b16 %v3493
    %v3964 = vunpack.c.h.b16 %v3493
    %v3965 = vunpack.c.l.b16 %v3494
    %v3966 = vunpack.c.l.b16 %v3495
    %v3967 = vunpack.c.h.b16 %v3495
    %v3968 = vunpack.c.l.b16 %v3496
    %v3969 = vunpack.c.l.b16 %v3497
    %v3970 = vunpack.c.h.b16 %v3497
    %v3971 = vunpack.c.l.b16 %v3498
    %v3972 = vunpack.c.l.b16 %v3499
    %v3973 = vunpack.c.h.b16 %v3499
    %v3974 = vunpack.c.l.b16 %v3500
    %v3975 = vunpack.c.l.b16 %v3501
    %v3976 = vunpack.c.h.b16 %v3501
    %v3977 = vunpack.c.l.b16 %v3502
    %v3978 = vunpack.c.l.b16 %v3503
    %v3979 = vunpack.c.h.b16 %v3503
    %v3980 = vunpack.c.l.b16 %v3504
    %v3981 = vunpack.c.l.b16 %v3505
    %v3982 = vunpack.c.h.b16 %v3505
    %v3983 = vunpack.c.l.b16 %v3506
    %v3984 = vunpack.c.l.b16 %v3507
    %v3985 = vunpack.c.h.b16 %v3507
    %v3986 = vunpack.c.l.b16 %v3508
    %v3987 = vunpack.c.l.b16 %v3509
    %v3988 = vunpack.c.h.b16 %v3509
    %v3989 = vunpack.c.l.b16 %v3510
    %v3990 = vunpack.c.l.b16 %v3511
    %v3991 = vunpack.c.h.b16 %v3511
    %v3992 = vunpack.c.l.b16 %v3512
    %v3993 = vunpack.c.l.b16 %v3513
    %v3994 = vunpack.c.h.b16 %v3513
    %v3995 = vunpack.c.l.b16 %v3514
    %v3996 = vunpack.c.l.b16 %v3515
    %v3997 = vunpack.c.h.b16 %v3515
    %v3998 = vunpack.c.l.b16 %v3516
    %v3999 = vunpack.c.l.b16 %v3517
    %v4000 = vunpack.c.h.b16 %v3517
    %v4001 = vunpack.c.l.b16 %v3518
    %v4002 = vunpack.c.l.b16 %v3519
    %v4003 = vunpack.c.h.b16 %v3519
    %v4004 = vunpack.c.l.b16 %v3520
    %v4005 = vunpack.c.l.b16 %v3521
    %v4006 = vunpack.c.h.b16 %v3521
    %v4007 = vunpack.c.l.b16 %v3522
    %v4008 = vunpack.c.l.b16 %v3523
    %v4009 = vunpack.c.h.b16 %v3523
    %v4010 = vunpack.c.l.b16 %v3524
    %v4011 = vunpack.c.l.b16 %v3525
    %v4012 = vunpack.c.h.b16 %v3525
    %v4013 = vunpack.c.l.b16 %v3526
    %v4014 = vunpack.c.l.b16 %v3527
    %v4015 = vunpack.c.h.b16 %v3527
    %v4016 = vunpack.c.l.b16 %v3528
    %v4017 = vpack.c.b16 %v3732, %v3729
    %v4018 = vpack.c.b16 %v3733, %v3730
    %v4019 = vpack.c.b16 %v3734, %v3731
    %v4020 = vpack.c.b16 %v3738, %v3735
    %v4021 = vpack.c.b16 %v3739, %v3736
    %v4022 = vpack.c.b16 %v3740, %v3737
    %v4023 = vpack.c.b16 %v3744, %v3741
    %v4024 = vpack.c.b16 %v3745, %v3742
    %v4025 = vpack.c.b16 %v3746, %v3743
    %v4026 = vpack.c.b16 %v3750, %v3747
    %v4027 = vpack.c.b16 %v3751, %v3748
    %v4028 = vpack.c.b16 %v3752, %v3749
    %v4029 = vpack.c.b16 %v3756, %v3753
    %v4030 = vpack.c.b16 %v3757, %v3754
    %v4031 = vpack.c.b16 %v3758, %v3755
    %v4032 = vpack.c.b16 %v3762, %v3759
    %v4033 = vpack.c.b16 %v3763, %v3760
    %v4034 = vpack.c.b16 %v3764, %v3761
    %v4035 = vpack.c.b16 %v3768, %v3765
    %v4036 = vpack.c.b16 %v3769, %v3766
    %v4037 = vpack.c.b16 %v3770, %v3767
    %v4038 = vpack.c.b16 %v3774, %v3771
    %v4039 = vpack.c.b16 %v3775, %v3772
    %v4040 = vpack.c.b16 %v3776, %v3773
    %v4041 = vpack.c.b16 %v3780, %v3777
    %v4042 = vpack.c.b16 %v3781, %v3778
    %v4043 = vpack.c.b16 %v3782, %v3779
    %v4044 = vpack.c.b16 %v3786, %v3783
    %v4045 = vpack.c.b16 %v3787, %v3784
    %v4046 = vpack.c.b16 %v3788, %v3785
    %v4047 = vpack.c.b16 %v3792, %v3789
    %v4048 = vpack.c.b16 %v3793, %v3790
    %v4049 = vpack.c.b16 %v3794, %v3791
    %v4050 = vpack.c.b16 %v3798, %v3795
    %v4051 = vpack.c.b16 %v3799, %v3796
    %v4052 = vpack.c.b16 %v3800, %v3797
    %v4053 = vpack.c.b16 %v3804, %v3801
    %v4054 = vpack.c.b16 %v3805, %v3802
    %v4055 = vpack.c.b16 %v3806, %v3803
    %v4056 = vpack.c.b16 %v3810, %v3807
    %v4057 = vpack.c.b16 %v3811, %v3808
    %v4058 = vpack.c.b16 %v3812, %v3809
    %v4059 = vpack.c.b16 %v3816, %v3813
    %v4060 = vpack.c.b16 %v3817, %v3814
    %v4061 = vpack.c.b16 %v3818, %v3815
    %v4062 = vpack.c.b16 %v3822, %v3819
    %v4063 = vpack.c.b16 %v3823, %v3820
    %v4064 = vpack.c.b16 %v3824, %v3821
    %v4065 = vpack.c.b16 %v3828, %v3825
    %v4066 = vpack.c.b16 %v3829, %v3826
    %v4067 = vpack.c.b16 %v3830, %v3827
    %v4068 = vpack.c.b16 %v3834, %v3831
    %v4069 = vpack.c.b16 %v3835, %v3832
    %v4070 = vpack.c.b16 %v3836, %v3833
    %v4071 = vpack.c.b16 %v3840, %v3837
    %v4072 = vpack.c.b16 %v3841, %v3838
    %v4073 = vpack.c.b16 %v3842, %v3839
    %v4074 = vpack.c.b16 %v3846, %v3843
    %v4075 = vpack.c.b16 %v3847, %v3844
    %v4076 = vpack.c.b16 %v3848, %v3845
    %v4077 = vpack.c.b16 %v3852, %v3849
    %v4078 = vpack.c.b16 %v3853, %v3850
    %v4079 = vpack.c.b16 %v3854, %v3851
    %v4080 = vpack.c.b16 %v3858, %v3855
    %v4081 = vpack.c.b16 %v3859, %v3856
    %v4082 = vpack.c.b16 %v3860, %v3857
    %v4083 = vpack.c.b16 %v3864, %v3861
    %v4084 = vpack.c.b16 %v3865, %v3862
    %v4085 = vpack.c.b16 %v3866, %v3863
    %v4086 = vpack.c.b16 %v3870, %v3867
    %v4087 = vpack.c.b16 %v3871, %v3868
    %v4088 = vpack.c.b16 %v3872, %v3869
    %v4089 = vpack.c.b16 %v3876, %v3873
    %v4090 = vpack.c.b16 %v3877, %v3874
    %v4091 = vpack.c.b16 %v3878, %v3875
    %v4092 = vpack.c.b16 %v3882, %v3879
    %v4093 = vpack.c.b16 %v3883, %v3880
    %v4094 = vpack.c.b16 %v3884, %v3881
    %v4095 = vpack.c.b16 %v3888, %v3885
    %v4096 = vpack.c.b16 %v3889, %v3886
    %v4097 = vpack.c.b16 %v3890, %v3887
    %v4098 = vpack.c.b16 %v3894, %v3891
    %v4099 = vpack.c.b16 %v3895, %v3892
    %v4100 = vpack.c.b16 %v3896, %v3893
    %v4101 = vpack.c.b16 %v3900, %v3897
    %v4102 = vpack.c.b16 %v3901, %v3898
    %v4103 = vpack.c.b16 %v3902, %v3899
    %v4104 = vpack.c.b16 %v3906, %v3903
    %v4105 = vpack.c.b16 %v3907, %v3904
    %v4106 = vpack.c.b16 %v3908, %v3905
    %v4107 = vpack.c.b16 %v3912, %v3909
    %v4108 = vpack.c.b16 %v3913, %v3910
    %v4109 = vpack.c.b16 %v3914, %v3911
    %v4110 = vpack.c.b16 %v3918, %v3915
    %v4111 = vpack.c.b16 %v3919, %v3916
    %v4112 = vpack.c.b16 %v3920, %v3917
    %v4113 = vpack.c.b16 %v3924, %v3921
    %v4114 = vpack.c.b16 %v3925, %v3922
    %v4115 = vpack.c.b16 %v3926, %v3923
    %v4116 = vpack.c.b16 %v3930, %v3927
    %v4117 = vpack.c.b16 %v3931, %v3928
    %v4118 = vpack.c.b16 %v3932, %v3929
    %v4119 = vpack.c.b16 %v3936, %v3933
    %v4120 = vpack.c.b16 %v3937, %v3934
    %v4121 = vpack.c.b16 %v3938, %v3935
    %v4122 = vpack.c.b16 %v3942, %v3939
    %v4123 = vpack.c.b16 %v3943, %v3940
    %v4124 = vpack.c.b16 %v3944, %v3941
    %v4125 = vpack.c.b16 %v3948, %v3945
    %v4126 = vpack.c.b16 %v3949, %v3946
    %v4127 = vpack.c.b16 %v3950, %v3947
    %v4128 = vpack.c.b16 %v3954, %v3951
    %v4129 = vpack.c.b16 %v3955, %v3952
    %v4130 = vpack.c.b16 %v3956, %v3953
    %v4131 = vpack.c.b16 %v3960, %v3957
    %v4132 = vpack.c.b16 %v3961, %v3958
    %v4133 = vpack.c.b16 %v3962, %v3959
    %v4134 = vpack.c.b16 %v3966, %v3963
    %v4135 = vpack.c.b16 %v3967, %v3964
    %v4136 = vpack.c.b16 %v3968, %v3965
    %v4137 = vpack.c.b16 %v3972, %v3969
    %v4138 = vpack.c.b16 %v3973, %v3970
    %v4139 = vpack.c.b16 %v3974, %v3971
    %v4140 = vpack.c.b16 %v3978, %v3975
    %v4141 = vpack.c.b16 %v3979, %v3976
    %v4142 = vpack.c.b16 %v3980, %v3977
    %v4143 = vpack.c.b16 %v3984, %v3981
    %v4144 = vpack.c.b16 %v3985, %v3982
    %v4145 = vpack.c.b16 %v3986, %v3983
    %v4146 = vpack.c.b16 %v3990, %v3987
    %v4147 = vpack.c.b16 %v3991, %v3988
    %v4148 = vpack.c.b16 %v3992, %v3989
    %v4149 = vpack.c.b16 %v3996, %v3993
    %v4150 = vpack.c.b16 %v3997, %v3994
    %v4151 = vpack.c.b16 %v3998, %v3995
    %v4152 = vpack.c.b16 %v4002, %v3999
    %v4153 = vpack.c.b16 %v4003, %v4000
    %v4154 = vpack.c.b16 %v4004, %v4001
    %v4155 = vpack.c.b16 %v4008, %v4005
    %v4156 = vpack.c.b16 %v4009, %v4006
    %v4157 = vpack.c.b16 %v4010, %v4007
    %v4158 = vpack.c.b16 %v4014, %v4011
    %v4159 = vpack.c.b16 %v4015, %v4012
    %v4160 = vpack.c.b16 %v4016, %v4013
    %4305 = vmatpush.bf16.msra.mxu0 %v4038
    %4306 = vmatpush.bf16.msra.mxu0 %v4035
    %4307 = vmatpush.bf16.msra.mxu0 %v4032
    %4308 = vmatpush.bf16.msra.mxu0 %v4029
    %4309 = vmatpush.bf16.msra.mxu0 %v4026
    %4310 = vmatpush.bf16.msra.mxu0 %v4023
    %4311 = vmatpush.bf16.msra.mxu0 %v4020
    %4312 = vmatpush.bf16.msra.mxu0 %v4017
    %4313 = vmatmul.bf16.gmra.mxu0 %v3331
    %v4314 = vpop.f32.mrf.mxu0
    %v4315 = vadd.f32 %v3531, %v4314
    %v4316 = vpop.f32.mrf.mxu0
    %4317 = vdwg.mxu0
    %4318 = vmatpush.bf16.msra.mxu0 %v4062
    %4319 = vmatpush.bf16.msra.mxu0 %v4059
    %4320 = vmatpush.bf16.msra.mxu0 %v4056
    %4321 = vmatpush.bf16.msra.mxu0 %v4053
    %4322 = vmatpush.bf16.msra.mxu0 %v4050
    %4323 = vmatpush.bf16.msra.mxu0 %v4047
    %4324 = vmatpush.bf16.msra.mxu0 %v4044
    %4325 = vmatpush.bf16.msra.mxu0 %v4041
    %4326 = vmatmul.bf16.gmra.mxu0 %v3332
    %v4327 = vpop.f32.mrf.mxu0
    %v4328 = vadd.f32 %v4315, %v4327
    %v4329 = vpop.f32.mrf.mxu0
    %4330 = vdwg.mxu0
    %4331 = vmatpush.bf16.msra.mxu0 %v4086
    %4332 = vmatpush.bf16.msra.mxu0 %v4083
    %4333 = vmatpush.bf16.msra.mxu0 %v4080
    %4334 = vmatpush.bf16.msra.mxu0 %v4077
    %4335 = vmatpush.bf16.msra.mxu0 %v4074
    %4336 = vmatpush.bf16.msra.mxu0 %v4071
    %4337 = vmatpush.bf16.msra.mxu0 %v4068
    %4338 = vmatpush.bf16.msra.mxu0 %v4065
    %4339 = vmatmul.bf16.gmra.mxu0 %v3333
    %v4340 = vpop.f32.mrf.mxu0
    %v4341 = vadd.f32 %v4328, %v4340
    %v4342 = vpop.f32.mrf.mxu0
    %4343 = vdwg.mxu0
    %4344 = vmatpush.bf16.msra.mxu0 %v4110
    %4345 = vmatpush.bf16.msra.mxu0 %v4107
    %4346 = vmatpush.bf16.msra.mxu0 %v4104
    %4347 = vmatpush.bf16.msra.mxu0 %v4101
    %4348 = vmatpush.bf16.msra.mxu0 %v4098
    %4349 = vmatpush.bf16.msra.mxu0 %v4095
    %4350 = vmatpush.bf16.msra.mxu0 %v4092
    %4351 = vmatpush.bf16.msra.mxu0 %v4089
    %4352 = vmatmul.bf16.gmra.mxu0 %v3334
    %v4353 = vpop.f32.mrf.mxu0
    %v4354 = vadd.f32 %v4341, %v4353
    %v4355 = vpop.f32.mrf.mxu0
    %4356 = vdwg.mxu0
    %4357 = vmatpush.bf16.msra.mxu0 %v4134
    %4358 = vmatpush.bf16.msra.mxu0 %v4131
    %4359 = vmatpush.bf16.msra.mxu0 %v4128
    %4360 = vmatpush.bf16.msra.mxu0 %v4125
    %4361 = vmatpush.bf16.msra.mxu0 %v4122
    %4362 = vmatpush.bf16.msra.mxu0 %v4119
    %4363 = vmatpush.bf16.msra.mxu0 %v4116
    %4364 = vmatpush.bf16.msra.mxu0 %v4113
    %4365 = vmatmul.bf16.gmra.mxu0 %v3335
    %v4366 = vpop.f32.mrf.mxu0
    %v4367 = vadd.f32 %v4354, %v4366
    %v4368 = vpop.f32.mrf.mxu0
    %4369 = vdwg.mxu0
    %4370 = vmatpush.bf16.msra.mxu0 %v4158
    %4371 = vmatpush.bf16.msra.mxu0 %v4155
    %4372 = vmatpush.bf16.msra.mxu0 %v4152
    %4373 = vmatpush.bf16.msra.mxu0 %v4149
    %4374 = vmatpush.bf16.msra.mxu0 %v4146
    %4375 = vmatpush.bf16.msra.mxu0 %v4143
    %4376 = vmatpush.bf16.msra.mxu0 %v4140
    %4377 = vmatpush.bf16.msra.mxu0 %v4137
    %4378 = vmatmul.bf16.gmra.mxu0 %v3336
    %v4379 = vpop.f32.mrf.mxu0
    %v4380 = vadd.f32 %v4367, %v4379
    %v4381 = vpop.f32.mrf.mxu0
    %4382 = vdwg.mxu0
    %4383 = vmatpush.bf16.msra.mxu0 %v4039
    %4384 = vmatpush.bf16.msra.mxu0 %v4036
    %4385 = vmatpush.bf16.msra.mxu0 %v4033
    %4386 = vmatpush.bf16.msra.mxu0 %v4030
    %4387 = vmatpush.bf16.msra.mxu0 %v4027
    %4388 = vmatpush.bf16.msra.mxu0 %v4024
    %4389 = vmatpush.bf16.msra.mxu0 %v4021
    %4390 = vmatpush.bf16.msra.mxu0 %v4018
    %4391 = vmatmul.bf16.gmra.mxu0 %v3331
    %v4392 = vpop.f32.mrf.mxu0
    %v4393 = vadd.f32 %v3532, %v4392
    %v4394 = vpop.f32.mrf.mxu0
    %4395 = vdwg.mxu0
    %4396 = vmatpush.bf16.msra.mxu0 %v4063
    %4397 = vmatpush.bf16.msra.mxu0 %v4060
    %4398 = vmatpush.bf16.msra.mxu0 %v4057
    %4399 = vmatpush.bf16.msra.mxu0 %v4054
    %4400 = vmatpush.bf16.msra.mxu0 %v4051
    %4401 = vmatpush.bf16.msra.mxu0 %v4048
    %4402 = vmatpush.bf16.msra.mxu0 %v4045
    %4403 = vmatpush.bf16.msra.mxu0 %v4042
    %4404 = vmatmul.bf16.gmra.mxu0 %v3332
    %v4405 = vpop.f32.mrf.mxu0
    %v4406 = vadd.f32 %v4393, %v4405
    %v4407 = vpop.f32.mrf.mxu0
    %4408 = vdwg.mxu0
    %4409 = vmatpush.bf16.msra.mxu0 %v4087
    %4410 = vmatpush.bf16.msra.mxu0 %v4084
    %4411 = vmatpush.bf16.msra.mxu0 %v4081
    %4412 = vmatpush.bf16.msra.mxu0 %v4078
    %4413 = vmatpush.bf16.msra.mxu0 %v4075
    %4414 = vmatpush.bf16.msra.mxu0 %v4072
    %4415 = vmatpush.bf16.msra.mxu0 %v4069
    %4416 = vmatpush.bf16.msra.mxu0 %v4066
    %4417 = vmatmul.bf16.gmra.mxu0 %v3333
    %v4418 = vpop.f32.mrf.mxu0
    %v4419 = vadd.f32 %v4406, %v4418
    %v4420 = vpop.f32.mrf.mxu0
    %4421 = vdwg.mxu0
    %4422 = vmatpush.bf16.msra.mxu0 %v4111
    %4423 = vmatpush.bf16.msra.mxu0 %v4108
    %4424 = vmatpush.bf16.msra.mxu0 %v4105
    %4425 = vmatpush.bf16.msra.mxu0 %v4102
    %4426 = vmatpush.bf16.msra.mxu0 %v4099
    %4427 = vmatpush.bf16.msra.mxu0 %v4096
    %4428 = vmatpush.bf16.msra.mxu0 %v4093
    %4429 = vmatpush.bf16.msra.mxu0 %v4090
    %4430 = vmatmul.bf16.gmra.mxu0 %v3334
    %v4431 = vpop.f32.mrf.mxu0
    %v4432 = vadd.f32 %v4419, %v4431
    %v4433 = vpop.f32.mrf.mxu0
    %4434 = vdwg.mxu0
    %4435 = vmatpush.bf16.msra.mxu0 %v4135
    %4436 = vmatpush.bf16.msra.mxu0 %v4132
    %4437 = vmatpush.bf16.msra.mxu0 %v4129
    %4438 = vmatpush.bf16.msra.mxu0 %v4126
    %4439 = vmatpush.bf16.msra.mxu0 %v4123
    %4440 = vmatpush.bf16.msra.mxu0 %v4120
    %4441 = vmatpush.bf16.msra.mxu0 %v4117
    %4442 = vmatpush.bf16.msra.mxu0 %v4114
    %4443 = vmatmul.bf16.gmra.mxu0 %v3335
    %v4444 = vpop.f32.mrf.mxu0
    %v4445 = vadd.f32 %v4432, %v4444
    %v4446 = vpop.f32.mrf.mxu0
    %4447 = vdwg.mxu0
    %4448 = vmatpush.bf16.msra.mxu0 %v4159
    %4449 = vmatpush.bf16.msra.mxu0 %v4156
    %4450 = vmatpush.bf16.msra.mxu0 %v4153
    %4451 = vmatpush.bf16.msra.mxu0 %v4150
    %4452 = vmatpush.bf16.msra.mxu0 %v4147
    %4453 = vmatpush.bf16.msra.mxu0 %v4144
    %4454 = vmatpush.bf16.msra.mxu0 %v4141
    %4455 = vmatpush.bf16.msra.mxu0 %v4138
    %4456 = vmatmul.bf16.gmra.mxu0 %v3336
    %v4457 = vpop.f32.mrf.mxu0
    %v4458 = vadd.f32 %v4445, %v4457
    %v4459 = vpop.f32.mrf.mxu0
    %4460 = vdwg.mxu0
    %4461 = vmatpush.bf16.msra.mxu0 %v4040
    %4462 = vmatpush.bf16.msra.mxu0 %v4037
    %4463 = vmatpush.bf16.msra.mxu0 %v4034
    %4464 = vmatpush.bf16.msra.mxu0 %v4031
    %4465 = vmatpush.bf16.msra.mxu0 %v4028
    %4466 = vmatpush.bf16.msra.mxu0 %v4025
    %4467 = vmatpush.bf16.msra.mxu0 %v4022
    %4468 = vmatpush.bf16.msra.mxu0 %v4019
    %4469 = vmatmul.bf16.gmra.mxu0 %v3331
    %v4470 = vpop.f32.mrf.mxu0
    %v4471 = vadd.f32 %v3533, %v4470
    %v4472 = vpop.f32.mrf.mxu0
    %4473 = vdwg.mxu0
    %4474 = vmatpush.bf16.msra.mxu0 %v4064
    %4475 = vmatpush.bf16.msra.mxu0 %v4061
    %4476 = vmatpush.bf16.msra.mxu0 %v4058
    %4477 = vmatpush.bf16.msra.mxu0 %v4055
    %4478 = vmatpush.bf16.msra.mxu0 %v4052
    %4479 = vmatpush.bf16.msra.mxu0 %v4049
    %4480 = vmatpush.bf16.msra.mxu0 %v4046
    %4481 = vmatpush.bf16.msra.mxu0 %v4043
    %4482 = vmatmul.bf16.gmra.mxu0 %v3332
    %v4483 = vpop.f32.mrf.mxu0
    %v4484 = vadd.f32 %v4471, %v4483
    %v4485 = vpop.f32.mrf.mxu0
    %4486 = vdwg.mxu0
    %4487 = vmatpush.bf16.msra.mxu0 %v4088
    %4488 = vmatpush.bf16.msra.mxu0 %v4085
    %4489 = vmatpush.bf16.msra.mxu0 %v4082
    %4490 = vmatpush.bf16.msra.mxu0 %v4079
    %4491 = vmatpush.bf16.msra.mxu0 %v4076
    %4492 = vmatpush.bf16.msra.mxu0 %v4073
    %4493 = vmatpush.bf16.msra.mxu0 %v4070
    %4494 = vmatpush.bf16.msra.mxu0 %v4067
    %4495 = vmatmul.bf16.gmra.mxu0 %v3333
    %v4496 = vpop.f32.mrf.mxu0
    %v4497 = vadd.f32 %v4484, %v4496
    %v4498 = vpop.f32.mrf.mxu0
    %4499 = vdwg.mxu0
    %4500 = vmatpush.bf16.msra.mxu0 %v4112
    %4501 = vmatpush.bf16.msra.mxu0 %v4109
    %4502 = vmatpush.bf16.msra.mxu0 %v4106
    %4503 = vmatpush.bf16.msra.mxu0 %v4103
    %4504 = vmatpush.bf16.msra.mxu0 %v4100
    %4505 = vmatpush.bf16.msra.mxu0 %v4097
    %4506 = vmatpush.bf16.msra.mxu0 %v4094
    %4507 = vmatpush.bf16.msra.mxu0 %v4091
    %4508 = vmatmul.bf16.gmra.mxu0 %v3334
    %v4509 = vpop.f32.mrf.mxu0
    %v4510 = vadd.f32 %v4497, %v4509
    %v4511 = vpop.f32.mrf.mxu0
    %4512 = vdwg.mxu0
    %4513 = vmatpush.bf16.msra.mxu0 %v4136
    %4514 = vmatpush.bf16.msra.mxu0 %v4133
    %4515 = vmatpush.bf16.msra.mxu0 %v4130
    %4516 = vmatpush.bf16.msra.mxu0 %v4127
    %4517 = vmatpush.bf16.msra.mxu0 %v4124
    %4518 = vmatpush.bf16.msra.mxu0 %v4121
    %4519 = vmatpush.bf16.msra.mxu0 %v4118
    %4520 = vmatpush.bf16.msra.mxu0 %v4115
    %4521 = vmatmul.bf16.gmra.mxu0 %v3335
    %v4522 = vpop.f32.mrf.mxu0
    %v4523 = vadd.f32 %v4510, %v4522
    %v4524 = vpop.f32.mrf.mxu0
    %4525 = vdwg.mxu0
    %4526 = vmatpush.bf16.msra.mxu0 %v4160
    %4527 = vmatpush.bf16.msra.mxu0 %v4157
    %4528 = vmatpush.bf16.msra.mxu0 %v4154
    %4529 = vmatpush.bf16.msra.mxu0 %v4151
    %4530 = vmatpush.bf16.msra.mxu0 %v4148
    %4531 = vmatpush.bf16.msra.mxu0 %v4145
    %4532 = vmatpush.bf16.msra.mxu0 %v4142
    %4533 = vmatpush.bf16.msra.mxu0 %v4139
    %4534 = vmatmul.bf16.gmra.mxu0 %v3336
    %v4535 = vpop.f32.mrf.mxu0
    %v4536 = vadd.f32 %v4523, %v4535
    %v4537 = vpop.f32.mrf.mxu0
    %4538 = vdwg.mxu0
    %vm4539 = vcmp.gt.f32.partialorder %v4380, 0.0
    %vm4540 = vcmp.gt.f32.partialorder %v4458, 0.0
    %vm4541 = vcmp.gt.f32.partialorder %v4536, 0.0
    %v4542 = vmul.f32 %v4380, 0.01
    %v4543 = vmul.f32 %v4458, 0.01
    %v4544 = vmul.f32 %v4536, 0.01
    %v4545 = vsel %vm4539, %v4380, %v4542
    %v4546 = vsel %vm4540, %v4458, %v4543
    %v4547 = vsel %vm4541, %v4536, %v4544
    %v4548 = vpack.c.bf16 %v4545, %v4545
    %v4549 = vpack.c.bf16 %v4546, %v4546
    %v4550 = vpack.c.bf16 %v4547, %v4547
    %v4551 = vld [vmem:[#allocation14] sm:$0xf]
    %v4552 = vld [vmem:[#allocation14 + $0x4] sm:$0xf]
    %v4553 = vld [vmem:[#allocation14 + $0x8] sm:$0xf]
    %v4554 = vld [vmem:[#allocation14 + $0xc] sm:$0xf]
    %v4555 = vld [vmem:[#allocation14 + $0x10] sm:$0xf]
    %v4556 = vld [vmem:[#allocation14 + $0x14] sm:$0xf]
    %v4557 = vld [vmem:[#allocation14 + $0x18] sm:$0xf]
    %v4558 = vld [vmem:[#allocation14 + $0x1c] sm:$0xf]
    %v4559 = vld [vmem:[#allocation14 + $0x20] sm:$0xf]
    %v4560 = vld [vmem:[#allocation14 + $0x24] sm:$0xf]
    %v4561 = vld [vmem:[#allocation14 + $0x28] sm:$0xf]
    %v4562 = vld [vmem:[#allocation14 + $0x2c] sm:$0xf]
    %v4563 = vld [vmem:[#allocation14 + $0x30] sm:$0xf]
    %v4564 = vld [vmem:[#allocation14 + $0x34] sm:$0xf]
    %v4565 = vld [vmem:[#allocation14 + $0x38] sm:$0xf]
    %v4566 = vld [vmem:[#allocation14 + $0x3c] sm:$0xf]
    %v4567 = vld [vmem:[#allocation14 + $0x40] sm:$0xf]
    %v4568 = vld [vmem:[#allocation14 + $0x44] sm:$0xf]
    %v4569 = vld [vmem:[#allocation14 + $0x48] sm:$0xf]
    %v4570 = vld [vmem:[#allocation14 + $0x4c] sm:$0xf]
    %v4571 = vld [vmem:[#allocation14 + $0x50] sm:$0xf]
    %v4572 = vld [vmem:[#allocation14 + $0x54] sm:$0xf]
    %v4573 = vld [vmem:[#allocation14 + $0x58] sm:$0xf]
    %v4574 = vld [vmem:[#allocation14 + $0x5c] sm:$0xf]
    %v4575 = vld [vmem:[#allocation14 + $0x60] sm:$0xf]
    %v4576 = vld [vmem:[#allocation14 + $0x64] sm:$0xf]
    %v4577 = vld [vmem:[#allocation14 + $0x68] sm:$0xf]
    %v4578 = vld [vmem:[#allocation14 + $0x6c] sm:$0xf]
    %v4579 = vld [vmem:[#allocation14 + $0x70] sm:$0xf]
    %v4580 = vld [vmem:[#allocation14 + $0x74] sm:$0xf]
    %v4581 = vld [vmem:[#allocation14 + $0x78] sm:$0xf]
    %v4582 = vld [vmem:[#allocation14 + $0x7c] sm:$0xf]
    %v4583 = vld [vmem:[#allocation14 + $0x80] sm:$0xf]
    %v4584 = vld [vmem:[#allocation14 + $0x84] sm:$0xf]
    %v4585 = vld [vmem:[#allocation14 + $0x88] sm:$0xf]
    %v4586 = vld [vmem:[#allocation14 + $0x8c] sm:$0xf]
    %v4587 = vld [vmem:[#allocation14 + $0x90] sm:$0xf]
    %v4588 = vld [vmem:[#allocation14 + $0x94] sm:$0xf]
    %v4589 = vld [vmem:[#allocation14 + $0x98] sm:$0xf]
    %v4590 = vld [vmem:[#allocation14 + $0x9c] sm:$0xf]
    %v4591 = vld [vmem:[#allocation14 + $0xa0] sm:$0xf]
    %v4592 = vld [vmem:[#allocation14 + $0xa4] sm:$0xf]
    %v4593 = vld [vmem:[#allocation14 + $0xa8] sm:$0xf]
    %v4594 = vld [vmem:[#allocation14 + $0xac] sm:$0xf]
    %v4595 = vld [vmem:[#allocation14 + $0xb0] sm:$0xf]
    %v4596 = vld [vmem:[#allocation14 + $0xb4] sm:$0xf]
    %v4597 = vld [vmem:[#allocation14 + $0xb8] sm:$0xf]
    %v4598 = vld [vmem:[#allocation14 + $0xbc] sm:$0xf]
    %v4599 = vld [vmem:[#allocation16] sm:$0x1]
    %v4601 = vperm.slane %v4599, 0
    %v4651 = vunpack.c.l.b16 %v4551
    %v4652 = vunpack.c.l.b16 %v4552
    %v4653 = vunpack.c.l.b16 %v4553
    %v4654 = vunpack.c.l.b16 %v4554
    %v4655 = vunpack.c.l.b16 %v4555
    %v4656 = vunpack.c.l.b16 %v4556
    %v4657 = vunpack.c.l.b16 %v4557
    %v4658 = vunpack.c.l.b16 %v4558
    %v4659 = vunpack.c.l.b16 %v4559
    %v4660 = vunpack.c.l.b16 %v4560
    %v4661 = vunpack.c.l.b16 %v4561
    %v4662 = vunpack.c.l.b16 %v4562
    %v4663 = vunpack.c.l.b16 %v4563
    %v4664 = vunpack.c.l.b16 %v4564
    %v4665 = vunpack.c.l.b16 %v4565
    %v4666 = vunpack.c.l.b16 %v4566
    %v4667 = vunpack.c.l.b16 %v4567
    %v4668 = vunpack.c.l.b16 %v4568
    %v4669 = vunpack.c.l.b16 %v4569
    %v4670 = vunpack.c.l.b16 %v4570
    %v4671 = vunpack.c.l.b16 %v4571
    %v4672 = vunpack.c.l.b16 %v4572
    %v4673 = vunpack.c.l.b16 %v4573
    %v4674 = vunpack.c.l.b16 %v4574
    %v4675 = vunpack.c.l.b16 %v4575
    %v4676 = vunpack.c.l.b16 %v4576
    %v4677 = vunpack.c.l.b16 %v4577
    %v4678 = vunpack.c.l.b16 %v4578
    %v4679 = vunpack.c.l.b16 %v4579
    %v4680 = vunpack.c.l.b16 %v4580
    %v4681 = vunpack.c.l.b16 %v4581
    %v4682 = vunpack.c.l.b16 %v4582
    %v4683 = vunpack.c.l.b16 %v4583
    %v4684 = vunpack.c.l.b16 %v4584
    %v4685 = vunpack.c.l.b16 %v4585
    %v4686 = vunpack.c.l.b16 %v4586
    %v4687 = vunpack.c.l.b16 %v4587
    %v4688 = vunpack.c.l.b16 %v4588
    %v4689 = vunpack.c.l.b16 %v4589
    %v4690 = vunpack.c.l.b16 %v4590
    %v4691 = vunpack.c.l.b16 %v4591
    %v4692 = vunpack.c.l.b16 %v4592
    %v4693 = vunpack.c.l.b16 %v4593
    %v4694 = vunpack.c.l.b16 %v4594
    %v4695 = vunpack.c.l.b16 %v4595
    %v4696 = vunpack.c.l.b16 %v4596
    %v4697 = vunpack.c.l.b16 %v4597
    %v4698 = vunpack.c.l.b16 %v4598
    %v4699 = vpack.c.b16 %v4652, %v4651
    %v4700 = vpack.c.b16 %v4654, %v4653
    %v4701 = vpack.c.b16 %v4656, %v4655
    %v4702 = vpack.c.b16 %v4658, %v4657
    %v4703 = vpack.c.b16 %v4660, %v4659
    %v4704 = vpack.c.b16 %v4662, %v4661
    %v4705 = vpack.c.b16 %v4664, %v4663
    %v4706 = vpack.c.b16 %v4666, %v4665
    %v4707 = vpack.c.b16 %v4668, %v4667
    %v4708 = vpack.c.b16 %v4670, %v4669
    %v4709 = vpack.c.b16 %v4672, %v4671
    %v4710 = vpack.c.b16 %v4674, %v4673
    %v4711 = vpack.c.b16 %v4676, %v4675
    %v4712 = vpack.c.b16 %v4678, %v4677
    %v4713 = vpack.c.b16 %v4680, %v4679
    %v4714 = vpack.c.b16 %v4682, %v4681
    %v4715 = vpack.c.b16 %v4684, %v4683
    %v4716 = vpack.c.b16 %v4686, %v4685
    %v4717 = vpack.c.b16 %v4688, %v4687
    %v4718 = vpack.c.b16 %v4690, %v4689
    %v4719 = vpack.c.b16 %v4692, %v4691
    %v4720 = vpack.c.b16 %v4694, %v4693
    %v4721 = vpack.c.b16 %v4696, %v4695
    %v4722 = vpack.c.b16 %v4698, %v4697
    %4747 = vmatpush.bf16.msra.mxu0 %v4706
    %4748 = vmatpush.bf16.msra.mxu0 %v4705
    %4749 = vmatpush.bf16.msra.mxu0 %v4704
    %4750 = vmatpush.bf16.msra.mxu0 %v4703
    %4751 = vmatpush.bf16.msra.mxu0 %v4702
    %4752 = vmatpush.bf16.msra.mxu0 %v4701
    %4753 = vmatpush.bf16.msra.mxu0 %v4700
    %4754 = vmatpush.bf16.msra.mxu0 %v4699
    %4755 = vmatmul.bf16.gmra.mxu0 %v4548
    %v4756 = vpop.f32.mrf.mxu0
    %v4757 = vadd.f32 %v4601, %v4756
    %v4758 = vpop.f32.mrf.mxu0
    %4759 = vdwg.mxu0
    %4760 = vmatpush.bf16.msra.mxu0 %v4714
    %4761 = vmatpush.bf16.msra.mxu0 %v4713
    %4762 = vmatpush.bf16.msra.mxu0 %v4712
    %4763 = vmatpush.bf16.msra.mxu0 %v4711
    %4764 = vmatpush.bf16.msra.mxu0 %v4710
    %4765 = vmatpush.bf16.msra.mxu0 %v4709
    %4766 = vmatpush.bf16.msra.mxu0 %v4708
    %4767 = vmatpush.bf16.msra.mxu0 %v4707
    %4768 = vmatmul.bf16.gmra.mxu0 %v4549
    %v4769 = vpop.f32.mrf.mxu0
    %v4770 = vadd.f32 %v4757, %v4769
    %v4771 = vpop.f32.mrf.mxu0
    %4772 = vdwg.mxu0
    %4773 = vmatpush.bf16.msra.mxu0 %v4722
    %4774 = vmatpush.bf16.msra.mxu0 %v4721
    %4775 = vmatpush.bf16.msra.mxu0 %v4720
    %4776 = vmatpush.bf16.msra.mxu0 %v4719
    %4777 = vmatpush.bf16.msra.mxu0 %v4718
    %4778 = vmatpush.bf16.msra.mxu0 %v4717
    %4779 = vmatpush.bf16.msra.mxu0 %v4716
    %4780 = vmatpush.bf16.msra.mxu0 %v4715
    %4781 = vmatmul.bf16.gmra.mxu0 %v4550
    %v4782 = vpop.f32.mrf.mxu0
    %v4783 = vadd.f32 %v4770, %v4782
    %v4784 = vpop.f32.mrf.mxu0
    %4785 = vdwg.mxu0
    %v4786 = vmul.f32 %v4783, 10.0
    %vm4787 = vcmp.gt.f32.partialorder %v4786, 20.0
    %v4788 = vsel %vm4787, 0.0, %v4786
    %v4789 = vmul.f32 %v4788, 1.442695
    %v4790 = vpow.pop %v4789
    %v4791 = vadd.f32 %v4790, 1.0
    %v4792 = vlog2.pop %v4791
    %v4793 = vmul.f32 %v4792, 0.6931472
    %v4794 = vmul.f32 -0.5, %v4790
    %v4795 = vadd.f32 %v4794, 1.0
    %v4796 = vmul.f32 %v4795, %v4790
    %v4797 = vand.u32 2147483647, %v4790
    %vm4798 = vcmp.lt.f32.partialorder %v4797, 0.0004427343
    %v4799 = vsel %vm4798, %v4796, %v4793
    %v4800 = vmul.f32 %v4799, 0.1
    %v4801 = vsel %vm4787, %v4783, %v4800
    %v4802 = vlaneseq
    %v4803 = vand.u32 %v4802, 127
    %vm4804 = vcmp.lt.s32.totalorder %v4803, 2
    %v4805 = vsel %vm4804, %v4801, %v4783
    %4806 = vst [vmem:[#allocation17] sm:$0xff] %v4805
    // Predicated region
    $region74: #{tpu_custom_call.1} parent=1 // pred_check
      _
    $region75: #{tpu_custom_call.1} parent=1 // pred_check_branch
      %4808 = sbr.rel (0) target = $region77
    $region76: #{tpu_custom_call.1} parent=1 // pred_region
      %4810 = vsyncadd [#allocation4], 0
      %s4812 = sshll.u32 [#allocation17], 4
      %s4813 = int_to_ptr.vmem [resolvable:$true] %s4812
      %s4814 = sshll.u32 %s9, 4
      %s4815 = int_to_ptr.hbm [resolvable:$true] %s4814
      %4817 = dma.vmem_to_hbm [thread:$0]  %s4813, 128, %s4815, [#allocation4]
    $region77: #{tpu_custom_call.1} parent=1 // pred_fallthru
      _
    // Predicated region
    $region78: #{tpu_custom_call.1} parent=1 // pred_check
      _
    $region79: #{tpu_custom_call.1} parent=1 // pred_check_branch
      %4819 = sbr.rel (0) target = $region81
    $region80: #{tpu_custom_call.1} parent=1 // pred_region
      %4821 = dma.done [#allocation4], 128
    $region81: #{tpu_custom_call.1} parent=1 // pred_fallthru
      _
    %4822 = vsyncpa [#allocation3], 1
    %4823 = vsyncpa [#allocation6], 1
    %4824 = vsyncpa [#allocation9], 1
    %4825 = vsyncpa [#allocation12], 1
    %4826 = vsyncpa [#allocation15], 1
    %4827 = vsyncpa [#allocation4], 1

</llo_original>
